<compile_context>
chip_gen: v5e
topology: v5e:2x2
jax: 0.10.0
libtpu: 0.0.40
codegen_flags: <defaults>
</compile_context>

<pallas_src>
import jax
import jax.numpy as jnp
from jax import lax
from jax.experimental import pallas as pl
from jax.experimental.pallas import tpu as pltpu

P_DROP = 0.5
SCALE = 1.0 / (1.0 - P_DROP)  # = 2.0

COLS = 1024            # lane-dense last dim (large multiple of 128)
MAX_BLOCK_ROWS = 512   # 512 * 1024 * 4B = 2 MiB per buffer


def _round_up(n: int, m: int) -> int:
    return ((n + m - 1) // m) * m


def _relu_dropout_kernel(seed_ref, x_ref, o_ref):
    # seed_ref: SMEM scalar-prefetch int32[1]; x_ref/o_ref: VMEM (block_rows, COLS)
    rows, cols = x_ref.shape
    x = x_ref[...]

    # Counter-based PRNG: lowbias32 hash of (global element index, seed).
    # Pure uint32 VPU ops -> portable to Mosaic and interpret mode.
    seed_u = seed_ref[0].astype(jnp.uint32)
    base = pl.program_id(0).astype(jnp.uint32) * jnp.uint32(rows * cols)
    row_ids = lax.broadcasted_iota(jnp.int32, (rows, cols), 0).astype(jnp.uint32)
    col_ids = lax.broadcasted_iota(jnp.int32, (rows, cols), 1).astype(jnp.uint32)
    v = base + row_ids * jnp.uint32(cols) + col_ids
    v = v ^ seed_u
    v = v ^ (v >> 16)
    v = v * jnp.uint32(0x7FEB352D)
    v = v ^ (v >> 15)
    v = v * jnp.uint32(0x846CA68B)
    v = v ^ (v >> 16)
    keep = (v & jnp.uint32(0x80000000)) == jnp.uint32(0)  # P(keep) = 0.5

    # Fused ReLU + dropout select: keep & (x > 0) ? 2*x : 0
    out = jnp.where(jnp.logical_and(keep, x > 0), x * SCALE, 0.0)
    o_ref[...] = out.astype(o_ref.dtype)


def relu_dropout(x: jax.Array, seed: int = 0) -> jax.Array:
    """ReLU followed by Dropout(p=0.5, training mode) via a Pallas TPU kernel."""
    orig_shape = x.shape
    orig_dtype = x.dtype
    total = x.size

    # Lane-dense 2D slab; pad the tail so every block is full (mask is applied
    # by slicing the padding back off afterwards).
    rows = -(-total // COLS)
    block_rows = min(MAX_BLOCK_ROWS, _round_up(rows, 8))
    rows_padded = _round_up(rows, block_rows)
    padded_total = rows_padded * COLS

    x_flat = x.reshape(-1)
    if padded_total != total:
        x_flat = jnp.pad(x_flat, (0, padded_total - total))
    x2d = x_flat.reshape(rows_padded, COLS)

    grid = (rows_padded // block_rows,)
    seed_arr = jnp.array([seed], dtype=jnp.int32)

    out2d = pl.pallas_call(
        _relu_dropout_kernel,
        out_shape=jax.ShapeDtypeStruct((rows_padded, COLS), orig_dtype),
        grid_spec=pltpu.PrefetchScalarGridSpec(
            num_scalar_prefetch=1,
            grid=grid,
            in_specs=[pl.BlockSpec((block_rows, COLS), lambda i, seed_ref: (i, 0))],
            out_specs=pl.BlockSpec((block_rows, COLS), lambda i, seed_ref: (i, 0)),
        ),
        compiler_params=pltpu.CompilerParams(
            dimension_semantics=("parallel",),   # blocks are fully independent
            vmem_limit_bytes=32 * 1024 * 1024,   # headroom for 2 MiB double-buffered tiles
        ),
    )(seed_arr, x2d)

    out_flat = out2d.reshape(-1)
    if padded_total != total:
        out_flat = out_flat[:total]
    return out_flat.reshape(orig_shape)


if __name__ == "__main__":
    # Shape from the module spec: x196 = randn([1, 256, 28, 28]).
    key = jax.random.PRNGKey(0)
    x = jax.random.normal(key, (1, 256, 28, 28), dtype=jnp.float32)

    out = jax.block_until_ready(relu_dropout(x, seed=0))

    # Sanity checks: non-negative, nonzero elements equal 2*relu(x),
    # and roughly half of the positive elements survive.
    relu_x = jnp.maximum(x, 0.0)
    nonzero = out != 0.0
    assert out.shape == x.shape
    assert bool(jnp.all(out >= 0.0))
    assert bool(jnp.all(jnp.where(nonzero, jnp.isclose(out, SCALE * relu_x), True)))
    pos = relu_x > 0
    kept_frac = jnp.sum(jnp.logical_and(nonzero, pos)) / jnp.maximum(jnp.sum(pos), 1)
    assert 0.35 < float(kept_frac) < 0.65, f"kept fraction {float(kept_frac)}"

    print("KERNEL_OK")
</pallas_src>

<mosaic_0001>
module attributes {stable_mosaic.version = 11 : i64} {
  func.func @_relu_dropout_kernel(%arg0: i32, %arg1: memref<1xi32, #tpu.memory_space<smem>>, %arg2: memref<200x1024xf32, #tpu.memory_space<vmem>>, %arg3: memref<200x1024xf32, #tpu.memory_space<vmem>>) attributes {dimension_semantics = [#tpu.dimension_semantics<parallel>], iteration_bounds = array<i64: 1>, scalar_prefetch = 1 : i64, scratch_operands = 0 : i64, tpu.core_type = #tpu.core_type<tc>, window_params = [{transform_indices = @transform_0, window_bounds = array<i64: 200, 1024>}, {transform_indices = @transform_1, window_bounds = array<i64: 200, 1024>}]} {
    %c0 = arith.constant 0 : index
    %c0_0 = arith.constant 0 : index
    %0 = vector.load %arg2[%c0, %c0_0] : memref<200x1024xf32, #tpu.memory_space<vmem>>, vector<200x1024xf32>
    %c0_1 = arith.constant 0 : index
    %1 = memref.load %arg1[%c0_1] : memref<1xi32, #tpu.memory_space<smem>>
    %c204800_i32 = arith.constant 204800 : i32
    %2 = arith.muli %arg0, %c204800_i32 : i32
    %3 = tpu.iota {dimensions = array<i32: 0>} : vector<200x1024xi32>
    %4 = tpu.iota {dimensions = array<i32: 1>} : vector<200x1024xi32>
    %c1024_i32 = arith.constant 1024 : i32
    %5 = vector.broadcast %c1024_i32 : i32 to vector<200x1024xi32>
    %6 = arith.muli %3, %5 : vector<200x1024xi32>
    %7 = vector.broadcast %2 : i32 to vector<200x1024xi32>
    %8 = arith.addi %7, %6 : vector<200x1024xi32>
    %9 = arith.addi %8, %4 : vector<200x1024xi32>
    %10 = vector.broadcast %1 : i32 to vector<200x1024xi32>
    %11 = arith.xori %9, %10 : vector<200x1024xi32>
    %c16_i32 = arith.constant 16 : i32
    %12 = vector.broadcast %c16_i32 : i32 to vector<200x1024xi32>
    %13 = arith.shrui %11, %12 : vector<200x1024xi32>
    %14 = arith.xori %11, %13 : vector<200x1024xi32>
    %c2146121005_i32 = arith.constant 2146121005 : i32
    %15 = vector.broadcast %c2146121005_i32 : i32 to vector<200x1024xi32>
    %16 = arith.muli %14, %15 : vector<200x1024xi32>
    %c15_i32 = arith.constant 15 : i32
    %17 = vector.broadcast %c15_i32 : i32 to vector<200x1024xi32>
    %18 = arith.shrui %16, %17 : vector<200x1024xi32>
    %19 = arith.xori %16, %18 : vector<200x1024xi32>
    %c-2073254261_i32 = arith.constant -2073254261 : i32
    %20 = vector.broadcast %c-2073254261_i32 : i32 to vector<200x1024xi32>
    %21 = arith.muli %19, %20 : vector<200x1024xi32>
    %c16_i32_2 = arith.constant 16 : i32
    %22 = vector.broadcast %c16_i32_2 : i32 to vector<200x1024xi32>
    %23 = arith.shrui %21, %22 : vector<200x1024xi32>
    %24 = arith.xori %21, %23 : vector<200x1024xi32>
    %c-2147483648_i32 = arith.constant -2147483648 : i32
    %25 = vector.broadcast %c-2147483648_i32 : i32 to vector<200x1024xi32>
    %26 = arith.andi %24, %25 : vector<200x1024xi32>
    %c0_i32 = arith.constant 0 : i32
    %27 = vector.broadcast %c0_i32 : i32 to vector<200x1024xi32>
    %28 = arith.cmpi eq, %26, %27 : vector<200x1024xi32>
    %cst = arith.constant 0.000000e+00 : f32
    %29 = vector.broadcast %cst : f32 to vector<200x1024xf32>
    %30 = arith.cmpf ogt, %0, %29 : vector<200x1024xf32>
    %31 = arith.andi %28, %30 : vector<200x1024xi1>
    %cst_3 = arith.constant 2.000000e+00 : f32
    %32 = vector.broadcast %cst_3 : f32 to vector<200x1024xf32>
    %33 = arith.mulf %0, %32 : vector<200x1024xf32>
    %cst_4 = arith.constant 0.000000e+00 : f32
    %34 = vector.broadcast %cst_4 : f32 to vector<200x1024xf32>
    %35 = arith.select %31, %33, %34 : vector<200x1024xi1>, vector<200x1024xf32>
    %c0_5 = arith.constant 0 : index
    %c0_6 = arith.constant 0 : index
    %36 = vector.load %arg3[%c0_5, %c0_6] : memref<200x1024xf32, #tpu.memory_space<vmem>>, vector<200x1024xf32>
    tpu.vector_store %arg3[%c0_5, %c0_6], %35 {strides = array<i32>} : memref<200x1024xf32, #tpu.memory_space<vmem>>, vector<200x1024xf32>,
    return
  }
  func.func @transform_0(%arg0: i32, %arg1: memref<1xi32, #tpu.memory_space<smem>>) -> (i32, i32) {
    %c0_i32 = arith.constant 0 : i32
    %c0_i32_0 = arith.constant 0 : i32
    return %arg0, %c0_i32 : i32, i32
  }
  func.func @transform_1(%arg0: i32, %arg1: memref<1xi32, #tpu.memory_space<smem>>) -> (i32, i32) {
    %c0_i32 = arith.constant 0 : i32
    %c0_i32_0 = arith.constant 0 : i32
    return %arg0, %c0_i32 : i32, i32
  }
}

</mosaic_0001>

<llo_original>
// kernel: tpu_custom_call.1
$region0: #{tpu_custom_call.1}
  #allocation0 [shape = 'u32[]', space=smem, size = 0x4, offset = 0x4, fixed_abs, tag = 'smem constant byte address 0x4 - core index']
  #allocation1 [shape = 'u32[72,128]{1,0:T(1,128)}', space=vmem, size = 0x9000, scoped, tag = 'internal scratch']
  #allocation2 [shape = 's32[1]{0}', space=sflag, size = 0x4, scoped, tag = 'scoped memory for tpu_custom_call.1']
  #allocation3 [shape = 's32[1]{0:T(128)S(6)}', space=smem, size = 0x200, scoped, tag = 'prefetched SMEM operand 0']
  %s0 = inlined_call_operand.<no memory space> [shape: s32[1], index: 0, kind: input, shape index: {}]
  %s1 = inlined_call_operand.hbm [shape: f32[200,1024], index: 1, kind: input, shape index: {}]
  %s2 = inlined_call_operand.hbm [shape: f32[200,1024], index: 2, kind: output, shape index: {}]
  %s3 = sld [smem:[#allocation0]]
  $region18: #{tpu_custom_call.1} parent=0
    _
  %s5 = ssub.s32 1, %s3
  %s6 = scalar_select 0, %s5, %s3
  %7 = sst [smem:[#allocation3]] %s0
  $region1: #{tpu_custom_call.1} parent=0
    #allocation4 [shape = 'u8[819200]{0}', space=vmem, size = 0xc8000, scoped, tag = 'input window, operand 1, single buffered']
    #allocation5 [shape = 's32[1]{0}', space=sflag, size = 0x4, scoped, tag = 'scoped memory for tpu_custom_call.1']
    #allocation6 [shape = 's32[1]{0}', space=sflag, size = 0x4, scoped, tag = 'scoped memory for tpu_custom_call.1']
    #allocation7 [shape = 'u8[819200]{0}', space=vmem, size = 0xc8000, scoped, tag = 'output window, operand 0, single buffered']
    %8 = vsyncpa [#allocation5], 0
    %9 = vsyncpa [#allocation6], 0
    // Predicated region
    $region2: #{tpu_custom_call.1} parent=1 // pred_check
      _
    $region3: #{tpu_custom_call.1} parent=1 // pred_check_branch
      %11 = sbr.rel (0) target = $region5
    $region4: #{tpu_custom_call.1} parent=1 // pred_region
      %13 = vsyncadd [#allocation5], 0
      %s14 = sshll.u32 %s1, 4
      %s15 = int_to_ptr.hbm [resolvable:$true] %s14
      %s16 = sshll.u32 [#allocation4], 4
      %s17 = int_to_ptr.vmem [resolvable:$true] %s16
      %22 = dma.hbm_to_vmem [thread:$0]  %s15, 25600, %s17, [#allocation5], 1024, 1024, 64
    $region5: #{tpu_custom_call.1} parent=1 // pred_fallthru
      _
    // Predicated region
    $region6: #{tpu_custom_call.1} parent=1 // pred_check
      _
    $region7: #{tpu_custom_call.1} parent=1 // pred_check_branch
      %24 = sbr.rel (0) target = $region9
    $region8: #{tpu_custom_call.1} parent=1 // pred_region
      %26 = dma.done [#allocation5], 25600
    $region9: #{tpu_custom_call.1} parent=1 // pred_fallthru
      _
    %v27 = vld [vmem:[#allocation4] sm:$0xff]
    %v28 = vld [vmem:[#allocation4 + $0x8] sm:$0xff]
    %v29 = vld [vmem:[#allocation4 + $0x10] sm:$0xff]
    %v30 = vld [vmem:[#allocation4 + $0x18] sm:$0xff]
    %v31 = vld [vmem:[#allocation4 + $0x20] sm:$0xff]
    %v32 = vld [vmem:[#allocation4 + $0x28] sm:$0xff]
    %v33 = vld [vmem:[#allocation4 + $0x30] sm:$0xff]
    %v34 = vld [vmem:[#allocation4 + $0x38] sm:$0xff]
    %v35 = vld [vmem:[#allocation4 + $0x40] sm:$0xff]
    %v36 = vld [vmem:[#allocation4 + $0x48] sm:$0xff]
    %v37 = vld [vmem:[#allocation4 + $0x50] sm:$0xff]
    %v38 = vld [vmem:[#allocation4 + $0x58] sm:$0xff]
    %v39 = vld [vmem:[#allocation4 + $0x60] sm:$0xff]
    %v40 = vld [vmem:[#allocation4 + $0x68] sm:$0xff]
    %v41 = vld [vmem:[#allocation4 + $0x70] sm:$0xff]
    %v42 = vld [vmem:[#allocation4 + $0x78] sm:$0xff]
    %v43 = vld [vmem:[#allocation4 + $0x80] sm:$0xff]
    %v44 = vld [vmem:[#allocation4 + $0x88] sm:$0xff]
    %v45 = vld [vmem:[#allocation4 + $0x90] sm:$0xff]
    %v46 = vld [vmem:[#allocation4 + $0x98] sm:$0xff]
    %v47 = vld [vmem:[#allocation4 + $0xa0] sm:$0xff]
    %v48 = vld [vmem:[#allocation4 + $0xa8] sm:$0xff]
    %v49 = vld [vmem:[#allocation4 + $0xb0] sm:$0xff]
    %v50 = vld [vmem:[#allocation4 + $0xb8] sm:$0xff]
    %v51 = vld [vmem:[#allocation4 + $0xc0] sm:$0xff]
    %v52 = vld [vmem:[#allocation4 + $0xc8] sm:$0xff]
    %v53 = vld [vmem:[#allocation4 + $0xd0] sm:$0xff]
    %v54 = vld [vmem:[#allocation4 + $0xd8] sm:$0xff]
    %v55 = vld [vmem:[#allocation4 + $0xe0] sm:$0xff]
    %v56 = vld [vmem:[#allocation4 + $0xe8] sm:$0xff]
    %v57 = vld [vmem:[#allocation4 + $0xf0] sm:$0xff]
    %v58 = vld [vmem:[#allocation4 + $0xf8] sm:$0xff]
    %v59 = vld [vmem:[#allocation4 + $0x100] sm:$0xff]
    %v60 = vld [vmem:[#allocation4 + $0x108] sm:$0xff]
    %v61 = vld [vmem:[#allocation4 + $0x110] sm:$0xff]
    %v62 = vld [vmem:[#allocation4 + $0x118] sm:$0xff]
    %v63 = vld [vmem:[#allocation4 + $0x120] sm:$0xff]
    %v64 = vld [vmem:[#allocation4 + $0x128] sm:$0xff]
    %v65 = vld [vmem:[#allocation4 + $0x130] sm:$0xff]
    %v66 = vld [vmem:[#allocation4 + $0x138] sm:$0xff]
    %v67 = vld [vmem:[#allocation4 + $0x140] sm:$0xff]
    %v68 = vld [vmem:[#allocation4 + $0x148] sm:$0xff]
    %v69 = vld [vmem:[#allocation4 + $0x150] sm:$0xff]
    %v70 = vld [vmem:[#allocation4 + $0x158] sm:$0xff]
    %v71 = vld [vmem:[#allocation4 + $0x160] sm:$0xff]
    %v72 = vld [vmem:[#allocation4 + $0x168] sm:$0xff]
    %v73 = vld [vmem:[#allocation4 + $0x170] sm:$0xff]
    %v74 = vld [vmem:[#allocation4 + $0x178] sm:$0xff]
    %v75 = vld [vmem:[#allocation4 + $0x180] sm:$0xff]
    %v76 = vld [vmem:[#allocation4 + $0x188] sm:$0xff]
    %v77 = vld [vmem:[#allocation4 + $0x190] sm:$0xff]
    %v78 = vld [vmem:[#allocation4 + $0x198] sm:$0xff]
    %v79 = vld [vmem:[#allocation4 + $0x1a0] sm:$0xff]
    %v80 = vld [vmem:[#allocation4 + $0x1a8] sm:$0xff]
    %v81 = vld [vmem:[#allocation4 + $0x1b0] sm:$0xff]
    %v82 = vld [vmem:[#allocation4 + $0x1b8] sm:$0xff]
    %v83 = vld [vmem:[#allocation4 + $0x1c0] sm:$0xff]
    %v84 = vld [vmem:[#allocation4 + $0x1c8] sm:$0xff]
    %v85 = vld [vmem:[#allocation4 + $0x1d0] sm:$0xff]
    %v86 = vld [vmem:[#allocation4 + $0x1d8] sm:$0xff]
    %v87 = vld [vmem:[#allocation4 + $0x1e0] sm:$0xff]
    %v88 = vld [vmem:[#allocation4 + $0x1e8] sm:$0xff]
    %v89 = vld [vmem:[#allocation4 + $0x1f0] sm:$0xff]
    %v90 = vld [vmem:[#allocation4 + $0x1f8] sm:$0xff]
    %v91 = vld [vmem:[#allocation4 + $0x200] sm:$0xff]
    %v92 = vld [vmem:[#allocation4 + $0x208] sm:$0xff]
    %v93 = vld [vmem:[#allocation4 + $0x210] sm:$0xff]
    %v94 = vld [vmem:[#allocation4 + $0x218] sm:$0xff]
    %v95 = vld [vmem:[#allocation4 + $0x220] sm:$0xff]
    %v96 = vld [vmem:[#allocation4 + $0x228] sm:$0xff]
    %v97 = vld [vmem:[#allocation4 + $0x230] sm:$0xff]
    %v98 = vld [vmem:[#allocation4 + $0x238] sm:$0xff]
    %v99 = vld [vmem:[#allocation4 + $0x240] sm:$0xff]
    %v100 = vld [vmem:[#allocation4 + $0x248] sm:$0xff]
    %v101 = vld [vmem:[#allocation4 + $0x250] sm:$0xff]
    %v102 = vld [vmem:[#allocation4 + $0x258] sm:$0xff]
    %v103 = vld [vmem:[#allocation4 + $0x260] sm:$0xff]
    %v104 = vld [vmem:[#allocation4 + $0x268] sm:$0xff]
    %v105 = vld [vmem:[#allocation4 + $0x270] sm:$0xff]
    %v106 = vld [vmem:[#allocation4 + $0x278] sm:$0xff]
    %v107 = vld [vmem:[#allocation4 + $0x280] sm:$0xff]
    %v108 = vld [vmem:[#allocation4 + $0x288] sm:$0xff]
    %v109 = vld [vmem:[#allocation4 + $0x290] sm:$0xff]
    %v110 = vld [vmem:[#allocation4 + $0x298] sm:$0xff]
    %v111 = vld [vmem:[#allocation4 + $0x2a0] sm:$0xff]
    %v112 = vld [vmem:[#allocation4 + $0x2a8] sm:$0xff]
    %v113 = vld [vmem:[#allocation4 + $0x2b0] sm:$0xff]
    %v114 = vld [vmem:[#allocation4 + $0x2b8] sm:$0xff]
    %v115 = vld [vmem:[#allocation4 + $0x2c0] sm:$0xff]
    %v116 = vld [vmem:[#allocation4 + $0x2c8] sm:$0xff]
    %v117 = vld [vmem:[#allocation4 + $0x2d0] sm:$0xff]
    %v118 = vld [vmem:[#allocation4 + $0x2d8] sm:$0xff]
    %v119 = vld [vmem:[#allocation4 + $0x2e0] sm:$0xff]
    %v120 = vld [vmem:[#allocation4 + $0x2e8] sm:$0xff]
    %v121 = vld [vmem:[#allocation4 + $0x2f0] sm:$0xff]
    %v122 = vld [vmem:[#allocation4 + $0x2f8] sm:$0xff]
    %v123 = vld [vmem:[#allocation4 + $0x300] sm:$0xff]
    %v124 = vld [vmem:[#allocation4 + $0x308] sm:$0xff]
    %v125 = vld [vmem:[#allocation4 + $0x310] sm:$0xff]
    %v126 = vld [vmem:[#allocation4 + $0x318] sm:$0xff]
    %v127 = vld [vmem:[#allocation4 + $0x320] sm:$0xff]
    %v128 = vld [vmem:[#allocation4 + $0x328] sm:$0xff]
    %v129 = vld [vmem:[#allocation4 + $0x330] sm:$0xff]
    %v130 = vld [vmem:[#allocation4 + $0x338] sm:$0xff]
    %v131 = vld [vmem:[#allocation4 + $0x340] sm:$0xff]
    %v132 = vld [vmem:[#allocation4 + $0x348] sm:$0xff]
    %v133 = vld [vmem:[#allocation4 + $0x350] sm:$0xff]
    %v134 = vld [vmem:[#allocation4 + $0x358] sm:$0xff]
    %v135 = vld [vmem:[#allocation4 + $0x360] sm:$0xff]
    %v136 = vld [vmem:[#allocation4 + $0x368] sm:$0xff]
    %v137 = vld [vmem:[#allocation4 + $0x370] sm:$0xff]
    %v138 = vld [vmem:[#allocation4 + $0x378] sm:$0xff]
    %v139 = vld [vmem:[#allocation4 + $0x380] sm:$0xff]
    %v140 = vld [vmem:[#allocation4 + $0x388] sm:$0xff]
    %v141 = vld [vmem:[#allocation4 + $0x390] sm:$0xff]
    %v142 = vld [vmem:[#allocation4 + $0x398] sm:$0xff]
    %v143 = vld [vmem:[#allocation4 + $0x3a0] sm:$0xff]
    %v144 = vld [vmem:[#allocation4 + $0x3a8] sm:$0xff]
    %v145 = vld [vmem:[#allocation4 + $0x3b0] sm:$0xff]
    %v146 = vld [vmem:[#allocation4 + $0x3b8] sm:$0xff]
    %v147 = vld [vmem:[#allocation4 + $0x3c0] sm:$0xff]
    %v148 = vld [vmem:[#allocation4 + $0x3c8] sm:$0xff]
    %v149 = vld [vmem:[#allocation4 + $0x3d0] sm:$0xff]
    %v150 = vld [vmem:[#allocation4 + $0x3d8] sm:$0xff]
    %v151 = vld [vmem:[#allocation4 + $0x3e0] sm:$0xff]
    %v152 = vld [vmem:[#allocation4 + $0x3e8] sm:$0xff]
    %v153 = vld [vmem:[#allocation4 + $0x3f0] sm:$0xff]
    %v154 = vld [vmem:[#allocation4 + $0x3f8] sm:$0xff]
    %v155 = vld [vmem:[#allocation4 + $0x400] sm:$0xff]
    %v156 = vld [vmem:[#allocation4 + $0x408] sm:$0xff]
    %v157 = vld [vmem:[#allocation4 + $0x410] sm:$0xff]
    %v158 = vld [vmem:[#allocation4 + $0x418] sm:$0xff]
    %v159 = vld [vmem:[#allocation4 + $0x420] sm:$0xff]
    %v160 = vld [vmem:[#allocation4 + $0x428] sm:$0xff]
    %v161 = vld [vmem:[#allocation4 + $0x430] sm:$0xff]
    %v162 = vld [vmem:[#allocation4 + $0x438] sm:$0xff]
    %v163 = vld [vmem:[#allocation4 + $0x440] sm:$0xff]
    %v164 = vld [vmem:[#allocation4 + $0x448] sm:$0xff]
    %v165 = vld [vmem:[#allocation4 + $0x450] sm:$0xff]
    %v166 = vld [vmem:[#allocation4 + $0x458] sm:$0xff]
    %v167 = vld [vmem:[#allocation4 + $0x460] sm:$0xff]
    %v168 = vld [vmem:[#allocation4 + $0x468] sm:$0xff]
    %v169 = vld [vmem:[#allocation4 + $0x470] sm:$0xff]
    %v170 = vld [vmem:[#allocation4 + $0x478] sm:$0xff]
    %v171 = vld [vmem:[#allocation4 + $0x480] sm:$0xff]
    %v172 = vld [vmem:[#allocation4 + $0x488] sm:$0xff]
    %v173 = vld [vmem:[#allocation4 + $0x490] sm:$0xff]
    %v174 = vld [vmem:[#allocation4 + $0x498] sm:$0xff]
    %v175 = vld [vmem:[#allocation4 + $0x4a0] sm:$0xff]
    %v176 = vld [vmem:[#allocation4 + $0x4a8] sm:$0xff]
    %v177 = vld [vmem:[#allocation4 + $0x4b0] sm:$0xff]
    %v178 = vld [vmem:[#allocation4 + $0x4b8] sm:$0xff]
    %v179 = vld [vmem:[#allocation4 + $0x4c0] sm:$0xff]
    %v180 = vld [vmem:[#allocation4 + $0x4c8] sm:$0xff]
    %v181 = vld [vmem:[#allocation4 + $0x4d0] sm:$0xff]
    %v182 = vld [vmem:[#allocation4 + $0x4d8] sm:$0xff]
    %v183 = vld [vmem:[#allocation4 + $0x4e0] sm:$0xff]
    %v184 = vld [vmem:[#allocation4 + $0x4e8] sm:$0xff]
    %v185 = vld [vmem:[#allocation4 + $0x4f0] sm:$0xff]
    %v186 = vld [vmem:[#allocation4 + $0x4f8] sm:$0xff]
    %v187 = vld [vmem:[#allocation4 + $0x500] sm:$0xff]
    %v188 = vld [vmem:[#allocation4 + $0x508] sm:$0xff]
    %v189 = vld [vmem:[#allocation4 + $0x510] sm:$0xff]
    %v190 = vld [vmem:[#allocation4 + $0x518] sm:$0xff]
    %v191 = vld [vmem:[#allocation4 + $0x520] sm:$0xff]
    %v192 = vld [vmem:[#allocation4 + $0x528] sm:$0xff]
    %v193 = vld [vmem:[#allocation4 + $0x530] sm:$0xff]
    %v194 = vld [vmem:[#allocation4 + $0x538] sm:$0xff]
    %v195 = vld [vmem:[#allocation4 + $0x540] sm:$0xff]
    %v196 = vld [vmem:[#allocation4 + $0x548] sm:$0xff]
    %v197 = vld [vmem:[#allocation4 + $0x550] sm:$0xff]
    %v198 = vld [vmem:[#allocation4 + $0x558] sm:$0xff]
    %v199 = vld [vmem:[#allocation4 + $0x560] sm:$0xff]
    %v200 = vld [vmem:[#allocation4 + $0x568] sm:$0xff]
    %v201 = vld [vmem:[#allocation4 + $0x570] sm:$0xff]
    %v202 = vld [vmem:[#allocation4 + $0x578] sm:$0xff]
    %v203 = vld [vmem:[#allocation4 + $0x580] sm:$0xff]
    %v204 = vld [vmem:[#allocation4 + $0x588] sm:$0xff]
    %v205 = vld [vmem:[#allocation4 + $0x590] sm:$0xff]
    %v206 = vld [vmem:[#allocation4 + $0x598] sm:$0xff]
    %v207 = vld [vmem:[#allocation4 + $0x5a0] sm:$0xff]
    %v208 = vld [vmem:[#allocation4 + $0x5a8] sm:$0xff]
    %v209 = vld [vmem:[#allocation4 + $0x5b0] sm:$0xff]
    %v210 = vld [vmem:[#allocation4 + $0x5b8] sm:$0xff]
    %v211 = vld [vmem:[#allocation4 + $0x5c0] sm:$0xff]
    %v212 = vld [vmem:[#allocation4 + $0x5c8] sm:$0xff]
    %v213 = vld [vmem:[#allocation4 + $0x5d0] sm:$0xff]
    %v214 = vld [vmem:[#allocation4 + $0x5d8] sm:$0xff]
    %v215 = vld [vmem:[#allocation4 + $0x5e0] sm:$0xff]
    %v216 = vld [vmem:[#allocation4 + $0x5e8] sm:$0xff]
    %v217 = vld [vmem:[#allocation4 + $0x5f0] sm:$0xff]
    %v218 = vld [vmem:[#allocation4 + $0x5f8] sm:$0xff]
    %v219 = vld [vmem:[#allocation4 + $0x600] sm:$0xff]
    %v220 = vld [vmem:[#allocation4 + $0x608] sm:$0xff]
    %v221 = vld [vmem:[#allocation4 + $0x610] sm:$0xff]
    %v222 = vld [vmem:[#allocation4 + $0x618] sm:$0xff]
    %v223 = vld [vmem:[#allocation4 + $0x620] sm:$0xff]
    %v224 = vld [vmem:[#allocation4 + $0x628] sm:$0xff]
    %v225 = vld [vmem:[#allocation4 + $0x630] sm:$0xff]
    %v226 = vld [vmem:[#allocation4 + $0x638] sm:$0xff]
    %s227 = sld [smem:[#allocation3]]
    %s228 = smul.u32 0, 204800
    %v229 = vlaneseq
    %v230 = vshrl.u32 %v229, 7
    %v231 = vadd.s32 %v230, 8
    %v232 = vadd.s32 %v230, 16
    %v233 = vadd.s32 %v230, 24
    %v234 = vadd.s32 %v230, 32
    %v235 = vadd.s32 %v230, 40
    %v236 = vadd.s32 %v230, 48
    %v237 = vadd.s32 %v230, 56
    %v238 = vadd.s32 %v230, 64
    %v239 = vadd.s32 %v230, 72
    %v240 = vadd.s32 %v230, 80
    %v241 = vadd.s32 %v230, 88
    %v242 = vadd.s32 %v230, 96
    %v243 = vadd.s32 %v230, 104
    %v244 = vadd.s32 %v230, 112
    %v245 = vadd.s32 %v230, 120
    %v246 = vadd.s32 %v230, 128
    %v247 = vadd.s32 %v230, 136
    %v248 = vadd.s32 %v230, 144
    %v249 = vadd.s32 %v230, 152
    %v250 = vadd.s32 %v230, 160
    %v251 = vadd.s32 %v230, 168
    %v252 = vadd.s32 %v230, 176
    %v253 = vadd.s32 %v230, 184
    %v254 = vadd.s32 %v230, 192
    %v255 = vlaneseq
    %v256 = vand.u32 %v255, 127
    %v257 = vadd.s32 %v256, 128
    %v258 = vadd.s32 %v256, 256
    %v259 = vadd.s32 %v256, 384
    %v260 = vadd.s32 %v256, 512
    %v261 = vadd.s32 %v256, 640
    %v262 = vadd.s32 %v256, 768
    %v263 = vadd.s32 %v256, 896
    %v264 = vmul.u32 %v230, 1024
    %v265 = vmul.u32 %v231, 1024
    %v266 = vmul.u32 %v232, 1024
    %v267 = vmul.u32 %v233, 1024
    %v268 = vmul.u32 %v234, 1024
    %v269 = vmul.u32 %v235, 1024
    %v270 = vmul.u32 %v236, 1024
    %v271 = vmul.u32 %v237, 1024
    %v272 = vmul.u32 %v238, 1024
    %v273 = vmul.u32 %v239, 1024
    %v274 = vmul.u32 %v240, 1024
    %v275 = vmul.u32 %v241, 1024
    %v276 = vmul.u32 %v242, 1024
    %v277 = vmul.u32 %v243, 1024
    %v278 = vmul.u32 %v244, 1024
    %v279 = vmul.u32 %v245, 1024
    %v280 = vmul.u32 %v246, 1024
    %v281 = vmul.u32 %v247, 1024
    %v282 = vmul.u32 %v248, 1024
    %v283 = vmul.u32 %v249, 1024
    %v284 = vmul.u32 %v250, 1024
    %v285 = vmul.u32 %v251, 1024
    %v286 = vmul.u32 %v252, 1024
    %v287 = vmul.u32 %v253, 1024
    %v288 = vmul.u32 %v254, 1024
    %v289 = vstv %s228
    %v290 = vadd.s32 %v289, %v264
    %v291 = vadd.s32 %v289, %v265
    %v292 = vadd.s32 %v289, %v266
    %v293 = vadd.s32 %v289, %v267
    %v294 = vadd.s32 %v289, %v268
    %v295 = vadd.s32 %v289, %v269
    %v296 = vadd.s32 %v289, %v270
    %v297 = vadd.s32 %v289, %v271
    %v298 = vadd.s32 %v289, %v272
    %v299 = vadd.s32 %v289, %v273
    %v300 = vadd.s32 %v289, %v274
    %v301 = vadd.s32 %v289, %v275
    %v302 = vadd.s32 %v289, %v276
    %v303 = vadd.s32 %v289, %v277
    %v304 = vadd.s32 %v289, %v278
    %v305 = vadd.s32 %v289, %v279
    %v306 = vadd.s32 %v289, %v280
    %v307 = vadd.s32 %v289, %v281
    %v308 = vadd.s32 %v289, %v282
    %v309 = vadd.s32 %v289, %v283
    %v310 = vadd.s32 %v289, %v284
    %v311 = vadd.s32 %v289, %v285
    %v312 = vadd.s32 %v289, %v286
    %v313 = vadd.s32 %v289, %v287
    %v314 = vadd.s32 %v289, %v288
    %v315 = vadd.s32 %v290, %v256
    %v316 = vadd.s32 %v290, %v257
    %v317 = vadd.s32 %v290, %v258
    %v318 = vadd.s32 %v290, %v259
    %v319 = vadd.s32 %v290, %v260
    %v320 = vadd.s32 %v290, %v261
    %v321 = vadd.s32 %v290, %v262
    %v322 = vadd.s32 %v290, %v263
    %v323 = vadd.s32 %v291, %v256
    %v324 = vadd.s32 %v291, %v257
    %v325 = vadd.s32 %v291, %v258
    %v326 = vadd.s32 %v291, %v259
    %v327 = vadd.s32 %v291, %v260
    %v328 = vadd.s32 %v291, %v261
    %v329 = vadd.s32 %v291, %v262
    %v330 = vadd.s32 %v291, %v263
    %v331 = vadd.s32 %v292, %v256
    %v332 = vadd.s32 %v292, %v257
    %v333 = vadd.s32 %v292, %v258
    %v334 = vadd.s32 %v292, %v259
    %v335 = vadd.s32 %v292, %v260
    %v336 = vadd.s32 %v292, %v261
    %v337 = vadd.s32 %v292, %v262
    %v338 = vadd.s32 %v292, %v263
    %v339 = vadd.s32 %v293, %v256
    %v340 = vadd.s32 %v293, %v257
    %v341 = vadd.s32 %v293, %v258
    %v342 = vadd.s32 %v293, %v259
    %v343 = vadd.s32 %v293, %v260
    %v344 = vadd.s32 %v293, %v261
    %v345 = vadd.s32 %v293, %v262
    %v346 = vadd.s32 %v293, %v263
    %v347 = vadd.s32 %v294, %v256
    %v348 = vadd.s32 %v294, %v257
    %v349 = vadd.s32 %v294, %v258
    %v350 = vadd.s32 %v294, %v259
    %v351 = vadd.s32 %v294, %v260
    %v352 = vadd.s32 %v294, %v261
    %v353 = vadd.s32 %v294, %v262
    %v354 = vadd.s32 %v294, %v263
    %v355 = vadd.s32 %v295, %v256
    %v356 = vadd.s32 %v295, %v257
    %v357 = vadd.s32 %v295, %v258
    %v358 = vadd.s32 %v295, %v259
    %v359 = vadd.s32 %v295, %v260
    %v360 = vadd.s32 %v295, %v261
    %v361 = vadd.s32 %v295, %v262
    %v362 = vadd.s32 %v295, %v263
    %v363 = vadd.s32 %v296, %v256
    %v364 = vadd.s32 %v296, %v257
    %v365 = vadd.s32 %v296, %v258
    %v366 = vadd.s32 %v296, %v259
    %v367 = vadd.s32 %v296, %v260
    %v368 = vadd.s32 %v296, %v261
    %v369 = vadd.s32 %v296, %v262
    %v370 = vadd.s32 %v296, %v263
    %v371 = vadd.s32 %v297, %v256
    %v372 = vadd.s32 %v297, %v257
    %v373 = vadd.s32 %v297, %v258
    %v374 = vadd.s32 %v297, %v259
    %v375 = vadd.s32 %v297, %v260
    %v376 = vadd.s32 %v297, %v261
    %v377 = vadd.s32 %v297, %v262
    %v378 = vadd.s32 %v297, %v263
    %v379 = vadd.s32 %v298, %v256
    %v380 = vadd.s32 %v298, %v257
    %v381 = vadd.s32 %v298, %v258
    %v382 = vadd.s32 %v298, %v259
    %v383 = vadd.s32 %v298, %v260
    %v384 = vadd.s32 %v298, %v261
    %v385 = vadd.s32 %v298, %v262
    %v386 = vadd.s32 %v298, %v263
    %v387 = vadd.s32 %v299, %v256
    %v388 = vadd.s32 %v299, %v257
    %v389 = vadd.s32 %v299, %v258
    %v390 = vadd.s32 %v299, %v259
    %v391 = vadd.s32 %v299, %v260
    %v392 = vadd.s32 %v299, %v261
    %v393 = vadd.s32 %v299, %v262
    %v394 = vadd.s32 %v299, %v263
    %v395 = vadd.s32 %v300, %v256
    %v396 = vadd.s32 %v300, %v257
    %v397 = vadd.s32 %v300, %v258
    %v398 = vadd.s32 %v300, %v259
    %v399 = vadd.s32 %v300, %v260
    %v400 = vadd.s32 %v300, %v261
    %v401 = vadd.s32 %v300, %v262
    %v402 = vadd.s32 %v300, %v263
    %v403 = vadd.s32 %v301, %v256
    %v404 = vadd.s32 %v301, %v257
    %v405 = vadd.s32 %v301, %v258
    %v406 = vadd.s32 %v301, %v259
    %v407 = vadd.s32 %v301, %v260
    %v408 = vadd.s32 %v301, %v261
    %v409 = vadd.s32 %v301, %v262
    %v410 = vadd.s32 %v301, %v263
    %v411 = vadd.s32 %v302, %v256
    %v412 = vadd.s32 %v302, %v257
    %v413 = vadd.s32 %v302, %v258
    %v414 = vadd.s32 %v302, %v259
    %v415 = vadd.s32 %v302, %v260
    %v416 = vadd.s32 %v302, %v261
    %v417 = vadd.s32 %v302, %v262
    %v418 = vadd.s32 %v302, %v263
    %v419 = vadd.s32 %v303, %v256
    %v420 = vadd.s32 %v303, %v257
    %v421 = vadd.s32 %v303, %v258
    %v422 = vadd.s32 %v303, %v259
    %v423 = vadd.s32 %v303, %v260
    %v424 = vadd.s32 %v303, %v261
    %v425 = vadd.s32 %v303, %v262
    %v426 = vadd.s32 %v303, %v263
    %v427 = vadd.s32 %v304, %v256
    %v428 = vadd.s32 %v304, %v257
    %v429 = vadd.s32 %v304, %v258
    %v430 = vadd.s32 %v304, %v259
    %v431 = vadd.s32 %v304, %v260
    %v432 = vadd.s32 %v304, %v261
    %v433 = vadd.s32 %v304, %v262
    %v434 = vadd.s32 %v304, %v263
    %v435 = vadd.s32 %v305, %v256
    %v436 = vadd.s32 %v305, %v257
    %v437 = vadd.s32 %v305, %v258
    %v438 = vadd.s32 %v305, %v259
    %v439 = vadd.s32 %v305, %v260
    %v440 = vadd.s32 %v305, %v261
    %v441 = vadd.s32 %v305, %v262
    %v442 = vadd.s32 %v305, %v263
    %v443 = vadd.s32 %v306, %v256
    %v444 = vadd.s32 %v306, %v257
    %v445 = vadd.s32 %v306, %v258
    %v446 = vadd.s32 %v306, %v259
    %v447 = vadd.s32 %v306, %v260
    %v448 = vadd.s32 %v306, %v261
    %v449 = vadd.s32 %v306, %v262
    %v450 = vadd.s32 %v306, %v263
    %v451 = vadd.s32 %v307, %v256
    %v452 = vadd.s32 %v307, %v257
    %v453 = vadd.s32 %v307, %v258
    %v454 = vadd.s32 %v307, %v259
    %v455 = vadd.s32 %v307, %v260
    %v456 = vadd.s32 %v307, %v261
    %v457 = vadd.s32 %v307, %v262
    %v458 = vadd.s32 %v307, %v263
    %v459 = vadd.s32 %v308, %v256
    %v460 = vadd.s32 %v308, %v257
    %v461 = vadd.s32 %v308, %v258
    %v462 = vadd.s32 %v308, %v259
    %v463 = vadd.s32 %v308, %v260
    %v464 = vadd.s32 %v308, %v261
    %v465 = vadd.s32 %v308, %v262
    %v466 = vadd.s32 %v308, %v263
    %v467 = vadd.s32 %v309, %v256
    %v468 = vadd.s32 %v309, %v257
    %v469 = vadd.s32 %v309, %v258
    %v470 = vadd.s32 %v309, %v259
    %v471 = vadd.s32 %v309, %v260
    %v472 = vadd.s32 %v309, %v261
    %v473 = vadd.s32 %v309, %v262
    %v474 = vadd.s32 %v309, %v263
    %v475 = vadd.s32 %v310, %v256
    %v476 = vadd.s32 %v310, %v257
    %v477 = vadd.s32 %v310, %v258
    %v478 = vadd.s32 %v310, %v259
    %v479 = vadd.s32 %v310, %v260
    %v480 = vadd.s32 %v310, %v261
    %v481 = vadd.s32 %v310, %v262
    %v482 = vadd.s32 %v310, %v263
    %v483 = vadd.s32 %v311, %v256
    %v484 = vadd.s32 %v311, %v257
    %v485 = vadd.s32 %v311, %v258
    %v486 = vadd.s32 %v311, %v259
    %v487 = vadd.s32 %v311, %v260
    %v488 = vadd.s32 %v311, %v261
    %v489 = vadd.s32 %v311, %v262
    %v490 = vadd.s32 %v311, %v263
    %v491 = vadd.s32 %v312, %v256
    %v492 = vadd.s32 %v312, %v257
    %v493 = vadd.s32 %v312, %v258
    %v494 = vadd.s32 %v312, %v259
    %v495 = vadd.s32 %v312, %v260
    %v496 = vadd.s32 %v312, %v261
    %v497 = vadd.s32 %v312, %v262
    %v498 = vadd.s32 %v312, %v263
    %v499 = vadd.s32 %v313, %v256
    %v500 = vadd.s32 %v313, %v257
    %v501 = vadd.s32 %v313, %v258
    %v502 = vadd.s32 %v313, %v259
    %v503 = vadd.s32 %v313, %v260
    %v504 = vadd.s32 %v313, %v261
    %v505 = vadd.s32 %v313, %v262
    %v506 = vadd.s32 %v313, %v263
    %v507 = vadd.s32 %v314, %v256
    %v508 = vadd.s32 %v314, %v257
    %v509 = vadd.s32 %v314, %v258
    %v510 = vadd.s32 %v314, %v259
    %v511 = vadd.s32 %v314, %v260
    %v512 = vadd.s32 %v314, %v261
    %v513 = vadd.s32 %v314, %v262
    %v514 = vadd.s32 %v314, %v263
    %v515 = vstv %s227
    %v516 = vxor.u32 %v315, %v515
    %v517 = vxor.u32 %v316, %v515
    %v518 = vxor.u32 %v317, %v515
    %v519 = vxor.u32 %v318, %v515
    %v520 = vxor.u32 %v319, %v515
    %v521 = vxor.u32 %v320, %v515
    %v522 = vxor.u32 %v321, %v515
    %v523 = vxor.u32 %v322, %v515
    %v524 = vxor.u32 %v323, %v515
    %v525 = vxor.u32 %v324, %v515
    %v526 = vxor.u32 %v325, %v515
    %v527 = vxor.u32 %v326, %v515
    %v528 = vxor.u32 %v327, %v515
    %v529 = vxor.u32 %v328, %v515
    %v530 = vxor.u32 %v329, %v515
    %v531 = vxor.u32 %v330, %v515
    %v532 = vxor.u32 %v331, %v515
    %v533 = vxor.u32 %v332, %v515
    %v534 = vxor.u32 %v333, %v515
    %v535 = vxor.u32 %v334, %v515
    %v536 = vxor.u32 %v335, %v515
    %v537 = vxor.u32 %v336, %v515
    %v538 = vxor.u32 %v337, %v515
    %v539 = vxor.u32 %v338, %v515
    %v540 = vxor.u32 %v339, %v515
    %v541 = vxor.u32 %v340, %v515
    %v542 = vxor.u32 %v341, %v515
    %v543 = vxor.u32 %v342, %v515
    %v544 = vxor.u32 %v343, %v515
    %v545 = vxor.u32 %v344, %v515
    %v546 = vxor.u32 %v345, %v515
    %v547 = vxor.u32 %v346, %v515
    %v548 = vxor.u32 %v347, %v515
    %v549 = vxor.u32 %v348, %v515
    %v550 = vxor.u32 %v349, %v515
    %v551 = vxor.u32 %v350, %v515
    %v552 = vxor.u32 %v351, %v515
    %v553 = vxor.u32 %v352, %v515
    %v554 = vxor.u32 %v353, %v515
    %v555 = vxor.u32 %v354, %v515
    %v556 = vxor.u32 %v355, %v515
    %v557 = vxor.u32 %v356, %v515
    %v558 = vxor.u32 %v357, %v515
    %v559 = vxor.u32 %v358, %v515
    %v560 = vxor.u32 %v359, %v515
    %v561 = vxor.u32 %v360, %v515
    %v562 = vxor.u32 %v361, %v515
    %v563 = vxor.u32 %v362, %v515
    %v564 = vxor.u32 %v363, %v515
    %v565 = vxor.u32 %v364, %v515
    %v566 = vxor.u32 %v365, %v515
    %v567 = vxor.u32 %v366, %v515
    %v568 = vxor.u32 %v367, %v515
    %v569 = vxor.u32 %v368, %v515
    %v570 = vxor.u32 %v369, %v515
    %v571 = vxor.u32 %v370, %v515
    %v572 = vxor.u32 %v371, %v515
    %v573 = vxor.u32 %v372, %v515
    %v574 = vxor.u32 %v373, %v515
    %v575 = vxor.u32 %v374, %v515
    %v576 = vxor.u32 %v375, %v515
    %v577 = vxor.u32 %v376, %v515
    %v578 = vxor.u32 %v377, %v515
    %v579 = vxor.u32 %v378, %v515
    %v580 = vxor.u32 %v379, %v515
    %v581 = vxor.u32 %v380, %v515
    %v582 = vxor.u32 %v381, %v515
    %v583 = vxor.u32 %v382, %v515
    %v584 = vxor.u32 %v383, %v515
    %v585 = vxor.u32 %v384, %v515
    %v586 = vxor.u32 %v385, %v515
    %v587 = vxor.u32 %v386, %v515
    %v588 = vxor.u32 %v387, %v515
    %v589 = vxor.u32 %v388, %v515
    %v590 = vxor.u32 %v389, %v515
    %v591 = vxor.u32 %v390, %v515
    %v592 = vxor.u32 %v391, %v515
    %v593 = vxor.u32 %v392, %v515
    %v594 = vxor.u32 %v393, %v515
    %v595 = vxor.u32 %v394, %v515
    %v596 = vxor.u32 %v395, %v515
    %v597 = vxor.u32 %v396, %v515
    %v598 = vxor.u32 %v397, %v515
    %v599 = vxor.u32 %v398, %v515
    %v600 = vxor.u32 %v399, %v515
    %v601 = vxor.u32 %v400, %v515
    %v602 = vxor.u32 %v401, %v515
    %v603 = vxor.u32 %v402, %v515
    %v604 = vxor.u32 %v403, %v515
    %v605 = vxor.u32 %v404, %v515
    %v606 = vxor.u32 %v405, %v515
    %v607 = vxor.u32 %v406, %v515
    %v608 = vxor.u32 %v407, %v515
    %v609 = vxor.u32 %v408, %v515
    %v610 = vxor.u32 %v409, %v515
    %v611 = vxor.u32 %v410, %v515
    %v612 = vxor.u32 %v411, %v515
    %v613 = vxor.u32 %v412, %v515
    %v614 = vxor.u32 %v413, %v515
    %v615 = vxor.u32 %v414, %v515
    %v616 = vxor.u32 %v415, %v515
    %v617 = vxor.u32 %v416, %v515
    %v618 = vxor.u32 %v417, %v515
    %v619 = vxor.u32 %v418, %v515
    %v620 = vxor.u32 %v419, %v515
    %v621 = vxor.u32 %v420, %v515
    %v622 = vxor.u32 %v421, %v515
    %v623 = vxor.u32 %v422, %v515
    %v624 = vxor.u32 %v423, %v515
    %v625 = vxor.u32 %v424, %v515
    %v626 = vxor.u32 %v425, %v515
    %v627 = vxor.u32 %v426, %v515
    %v628 = vxor.u32 %v427, %v515
    %v629 = vxor.u32 %v428, %v515
    %v630 = vxor.u32 %v429, %v515
    %v631 = vxor.u32 %v430, %v515
    %v632 = vxor.u32 %v431, %v515
    %v633 = vxor.u32 %v432, %v515
    %v634 = vxor.u32 %v433, %v515
    %v635 = vxor.u32 %v434, %v515
    %v636 = vxor.u32 %v435, %v515
    %v637 = vxor.u32 %v436, %v515
    %v638 = vxor.u32 %v437, %v515
    %v639 = vxor.u32 %v438, %v515
    %v640 = vxor.u32 %v439, %v515
    %v641 = vxor.u32 %v440, %v515
    %v642 = vxor.u32 %v441, %v515
    %v643 = vxor.u32 %v442, %v515
    %v644 = vxor.u32 %v443, %v515
    %v645 = vxor.u32 %v444, %v515
    %v646 = vxor.u32 %v445, %v515
    %v647 = vxor.u32 %v446, %v515
    %v648 = vxor.u32 %v447, %v515
    %v649 = vxor.u32 %v448, %v515
    %v650 = vxor.u32 %v449, %v515
    %v651 = vxor.u32 %v450, %v515
    %v652 = vxor.u32 %v451, %v515
    %v653 = vxor.u32 %v452, %v515
    %v654 = vxor.u32 %v453, %v515
    %v655 = vxor.u32 %v454, %v515
    %v656 = vxor.u32 %v455, %v515
    %v657 = vxor.u32 %v456, %v515
    %v658 = vxor.u32 %v457, %v515
    %v659 = vxor.u32 %v458, %v515
    %v660 = vxor.u32 %v459, %v515
    %v661 = vxor.u32 %v460, %v515
    %v662 = vxor.u32 %v461, %v515
    %v663 = vxor.u32 %v462, %v515
    %v664 = vxor.u32 %v463, %v515
    %v665 = vxor.u32 %v464, %v515
    %v666 = vxor.u32 %v465, %v515
    %v667 = vxor.u32 %v466, %v515
    %v668 = vxor.u32 %v467, %v515
    %v669 = vxor.u32 %v468, %v515
    %v670 = vxor.u32 %v469, %v515
    %v671 = vxor.u32 %v470, %v515
    %v672 = vxor.u32 %v471, %v515
    %v673 = vxor.u32 %v472, %v515
    %v674 = vxor.u32 %v473, %v515
    %v675 = vxor.u32 %v474, %v515
    %v676 = vxor.u32 %v475, %v515
    %v677 = vxor.u32 %v476, %v515
    %v678 = vxor.u32 %v477, %v515
    %v679 = vxor.u32 %v478, %v515
    %v680 = vxor.u32 %v479, %v515
    %v681 = vxor.u32 %v480, %v515
    %v682 = vxor.u32 %v481, %v515
    %v683 = vxor.u32 %v482, %v515
    %v684 = vxor.u32 %v483, %v515
    %v685 = vxor.u32 %v484, %v515
    %v686 = vxor.u32 %v485, %v515
    %v687 = vxor.u32 %v486, %v515
    %v688 = vxor.u32 %v487, %v515
    %v689 = vxor.u32 %v488, %v515
    %v690 = vxor.u32 %v489, %v515
    %v691 = vxor.u32 %v490, %v515
    %v692 = vxor.u32 %v491, %v515
    %v693 = vxor.u32 %v492, %v515
    %v694 = vxor.u32 %v493, %v515
    %v695 = vxor.u32 %v494, %v515
    %v696 = vxor.u32 %v495, %v515
    %v697 = vxor.u32 %v496, %v515
    %v698 = vxor.u32 %v497, %v515
    %v699 = vxor.u32 %v498, %v515
    %v700 = vxor.u32 %v499, %v515
    %v701 = vxor.u32 %v500, %v515
    %v702 = vxor.u32 %v501, %v515
    %v703 = vxor.u32 %v502, %v515
    %v704 = vxor.u32 %v503, %v515
    %v705 = vxor.u32 %v504, %v515
    %v706 = vxor.u32 %v505, %v515
    %v707 = vxor.u32 %v506, %v515
    %v708 = vxor.u32 %v507, %v515
    %v709 = vxor.u32 %v508, %v515
    %v710 = vxor.u32 %v509, %v515
    %v711 = vxor.u32 %v510, %v515
    %v712 = vxor.u32 %v511, %v515
    %v713 = vxor.u32 %v512, %v515
    %v714 = vxor.u32 %v513, %v515
    %v715 = vxor.u32 %v514, %v515
    %v716 = vshrl.u32 %v516, 16
    %v717 = vshrl.u32 %v517, 16
    %v718 = vshrl.u32 %v518, 16
    %v719 = vshrl.u32 %v519, 16
    %v720 = vshrl.u32 %v520, 16
    %v721 = vshrl.u32 %v521, 16
    %v722 = vshrl.u32 %v522, 16
    %v723 = vshrl.u32 %v523, 16
    %v724 = vshrl.u32 %v524, 16
    %v725 = vshrl.u32 %v525, 16
    %v726 = vshrl.u32 %v526, 16
    %v727 = vshrl.u32 %v527, 16
    %v728 = vshrl.u32 %v528, 16
    %v729 = vshrl.u32 %v529, 16
    %v730 = vshrl.u32 %v530, 16
    %v731 = vshrl.u32 %v531, 16
    %v732 = vshrl.u32 %v532, 16
    %v733 = vshrl.u32 %v533, 16
    %v734 = vshrl.u32 %v534, 16
    %v735 = vshrl.u32 %v535, 16
    %v736 = vshrl.u32 %v536, 16
    %v737 = vshrl.u32 %v537, 16
    %v738 = vshrl.u32 %v538, 16
    %v739 = vshrl.u32 %v539, 16
    %v740 = vshrl.u32 %v540, 16
    %v741 = vshrl.u32 %v541, 16
    %v742 = vshrl.u32 %v542, 16
    %v743 = vshrl.u32 %v543, 16
    %v744 = vshrl.u32 %v544, 16
    %v745 = vshrl.u32 %v545, 16
    %v746 = vshrl.u32 %v546, 16
    %v747 = vshrl.u32 %v547, 16
    %v748 = vshrl.u32 %v548, 16
    %v749 = vshrl.u32 %v549, 16
    %v750 = vshrl.u32 %v550, 16
    %v751 = vshrl.u32 %v551, 16
    %v752 = vshrl.u32 %v552, 16
    %v753 = vshrl.u32 %v553, 16
    %v754 = vshrl.u32 %v554, 16
    %v755 = vshrl.u32 %v555, 16
    %v756 = vshrl.u32 %v556, 16
    %v757 = vshrl.u32 %v557, 16
    %v758 = vshrl.u32 %v558, 16
    %v759 = vshrl.u32 %v559, 16
    %v760 = vshrl.u32 %v560, 16
    %v761 = vshrl.u32 %v561, 16
    %v762 = vshrl.u32 %v562, 16
    %v763 = vshrl.u32 %v563, 16
    %v764 = vshrl.u32 %v564, 16
    %v765 = vshrl.u32 %v565, 16
    %v766 = vshrl.u32 %v566, 16
    %v767 = vshrl.u32 %v567, 16
    %v768 = vshrl.u32 %v568, 16
    %v769 = vshrl.u32 %v569, 16
    %v770 = vshrl.u32 %v570, 16
    %v771 = vshrl.u32 %v571, 16
    %v772 = vshrl.u32 %v572, 16
    %v773 = vshrl.u32 %v573, 16
    %v774 = vshrl.u32 %v574, 16
    %v775 = vshrl.u32 %v575, 16
    %v776 = vshrl.u32 %v576, 16
    %v777 = vshrl.u32 %v577, 16
    %v778 = vshrl.u32 %v578, 16
    %v779 = vshrl.u32 %v579, 16
    %v780 = vshrl.u32 %v580, 16
    %v781 = vshrl.u32 %v581, 16
    %v782 = vshrl.u32 %v582, 16
    %v783 = vshrl.u32 %v583, 16
    %v784 = vshrl.u32 %v584, 16
    %v785 = vshrl.u32 %v585, 16
    %v786 = vshrl.u32 %v586, 16
    %v787 = vshrl.u32 %v587, 16
    %v788 = vshrl.u32 %v588, 16
    %v789 = vshrl.u32 %v589, 16
    %v790 = vshrl.u32 %v590, 16
    %v791 = vshrl.u32 %v591, 16
    %v792 = vshrl.u32 %v592, 16
    %v793 = vshrl.u32 %v593, 16
    %v794 = vshrl.u32 %v594, 16
    %v795 = vshrl.u32 %v595, 16
    %v796 = vshrl.u32 %v596, 16
    %v797 = vshrl.u32 %v597, 16
    %v798 = vshrl.u32 %v598, 16
    %v799 = vshrl.u32 %v599, 16
    %v800 = vshrl.u32 %v600, 16
    %v801 = vshrl.u32 %v601, 16
    %v802 = vshrl.u32 %v602, 16
    %v803 = vshrl.u32 %v603, 16
    %v804 = vshrl.u32 %v604, 16
    %v805 = vshrl.u32 %v605, 16
    %v806 = vshrl.u32 %v606, 16
    %v807 = vshrl.u32 %v607, 16
    %v808 = vshrl.u32 %v608, 16
    %v809 = vshrl.u32 %v609, 16
    %v810 = vshrl.u32 %v610, 16
    %v811 = vshrl.u32 %v611, 16
    %v812 = vshrl.u32 %v612, 16
    %v813 = vshrl.u32 %v613, 16
    %v814 = vshrl.u32 %v614, 16
    %v815 = vshrl.u32 %v615, 16
    %v816 = vshrl.u32 %v616, 16
    %v817 = vshrl.u32 %v617, 16
    %v818 = vshrl.u32 %v618, 16
    %v819 = vshrl.u32 %v619, 16
    %v820 = vshrl.u32 %v620, 16
    %v821 = vshrl.u32 %v621, 16
    %v822 = vshrl.u32 %v622, 16
    %v823 = vshrl.u32 %v623, 16
    %v824 = vshrl.u32 %v624, 16
    %v825 = vshrl.u32 %v625, 16
    %v826 = vshrl.u32 %v626, 16
    %v827 = vshrl.u32 %v627, 16
    %v828 = vshrl.u32 %v628, 16
    %v829 = vshrl.u32 %v629, 16
    %v830 = vshrl.u32 %v630, 16
    %v831 = vshrl.u32 %v631, 16
    %v832 = vshrl.u32 %v632, 16
    %v833 = vshrl.u32 %v633, 16
    %v834 = vshrl.u32 %v634, 16
    %v835 = vshrl.u32 %v635, 16
    %v836 = vshrl.u32 %v636, 16
    %v837 = vshrl.u32 %v637, 16
    %v838 = vshrl.u32 %v638, 16
    %v839 = vshrl.u32 %v639, 16
    %v840 = vshrl.u32 %v640, 16
    %v841 = vshrl.u32 %v641, 16
    %v842 = vshrl.u32 %v642, 16
    %v843 = vshrl.u32 %v643, 16
    %v844 = vshrl.u32 %v644, 16
    %v845 = vshrl.u32 %v645, 16
    %v846 = vshrl.u32 %v646, 16
    %v847 = vshrl.u32 %v647, 16
    %v848 = vshrl.u32 %v648, 16
    %v849 = vshrl.u32 %v649, 16
    %v850 = vshrl.u32 %v650, 16
    %v851 = vshrl.u32 %v651, 16
    %v852 = vshrl.u32 %v652, 16
    %v853 = vshrl.u32 %v653, 16
    %v854 = vshrl.u32 %v654, 16
    %v855 = vshrl.u32 %v655, 16
    %v856 = vshrl.u32 %v656, 16
    %v857 = vshrl.u32 %v657, 16
    %v858 = vshrl.u32 %v658, 16
    %v859 = vshrl.u32 %v659, 16
    %v860 = vshrl.u32 %v660, 16
    %v861 = vshrl.u32 %v661, 16
    %v862 = vshrl.u32 %v662, 16
    %v863 = vshrl.u32 %v663, 16
    %v864 = vshrl.u32 %v664, 16
    %v865 = vshrl.u32 %v665, 16
    %v866 = vshrl.u32 %v666, 16
    %v867 = vshrl.u32 %v667, 16
    %v868 = vshrl.u32 %v668, 16
    %v869 = vshrl.u32 %v669, 16
    %v870 = vshrl.u32 %v670, 16
    %v871 = vshrl.u32 %v671, 16
    %v872 = vshrl.u32 %v672, 16
    %v873 = vshrl.u32 %v673, 16
    %v874 = vshrl.u32 %v674, 16
    %v875 = vshrl.u32 %v675, 16
    %v876 = vshrl.u32 %v676, 16
    %v877 = vshrl.u32 %v677, 16
    %v878 = vshrl.u32 %v678, 16
    %v879 = vshrl.u32 %v679, 16
    %v880 = vshrl.u32 %v680, 16
    %v881 = vshrl.u32 %v681, 16
    %v882 = vshrl.u32 %v682, 16
    %v883 = vshrl.u32 %v683, 16
    %v884 = vshrl.u32 %v684, 16
    %v885 = vshrl.u32 %v685, 16
    %v886 = vshrl.u32 %v686, 16
    %v887 = vshrl.u32 %v687, 16
    %v888 = vshrl.u32 %v688, 16
    %v889 = vshrl.u32 %v689, 16
    %v890 = vshrl.u32 %v690, 16
    %v891 = vshrl.u32 %v691, 16
    %v892 = vshrl.u32 %v692, 16
    %v893 = vshrl.u32 %v693, 16
    %v894 = vshrl.u32 %v694, 16
    %v895 = vshrl.u32 %v695, 16
    %v896 = vshrl.u32 %v696, 16
    %v897 = vshrl.u32 %v697, 16
    %v898 = vshrl.u32 %v698, 16
    %v899 = vshrl.u32 %v699, 16
    %v900 = vshrl.u32 %v700, 16
    %v901 = vshrl.u32 %v701, 16
    %v902 = vshrl.u32 %v702, 16
    %v903 = vshrl.u32 %v703, 16
    %v904 = vshrl.u32 %v704, 16
    %v905 = vshrl.u32 %v705, 16
    %v906 = vshrl.u32 %v706, 16
    %v907 = vshrl.u32 %v707, 16
    %v908 = vshrl.u32 %v708, 16
    %v909 = vshrl.u32 %v709, 16
    %v910 = vshrl.u32 %v710, 16
    %v911 = vshrl.u32 %v711, 16
    %v912 = vshrl.u32 %v712, 16
    %v913 = vshrl.u32 %v713, 16
    %v914 = vshrl.u32 %v714, 16
    %v915 = vshrl.u32 %v715, 16
    %v916 = vxor.u32 %v516, %v716
    %v917 = vxor.u32 %v517, %v717
    %v918 = vxor.u32 %v518, %v718
    %v919 = vxor.u32 %v519, %v719
    %v920 = vxor.u32 %v520, %v720
    %v921 = vxor.u32 %v521, %v721
    %v922 = vxor.u32 %v522, %v722
    %v923 = vxor.u32 %v523, %v723
    %v924 = vxor.u32 %v524, %v724
    %v925 = vxor.u32 %v525, %v725
    %v926 = vxor.u32 %v526, %v726
    %v927 = vxor.u32 %v527, %v727
    %v928 = vxor.u32 %v528, %v728
    %v929 = vxor.u32 %v529, %v729
    %v930 = vxor.u32 %v530, %v730
    %v931 = vxor.u32 %v531, %v731
    %v932 = vxor.u32 %v532, %v732
    %v933 = vxor.u32 %v533, %v733
    %v934 = vxor.u32 %v534, %v734
    %v935 = vxor.u32 %v535, %v735
    %v936 = vxor.u32 %v536, %v736
    %v937 = vxor.u32 %v537, %v737
    %v938 = vxor.u32 %v538, %v738
    %v939 = vxor.u32 %v539, %v739
    %v940 = vxor.u32 %v540, %v740
    %v941 = vxor.u32 %v541, %v741
    %v942 = vxor.u32 %v542, %v742
    %v943 = vxor.u32 %v543, %v743
    %v944 = vxor.u32 %v544, %v744
    %v945 = vxor.u32 %v545, %v745
    %v946 = vxor.u32 %v546, %v746
    %v947 = vxor.u32 %v547, %v747
    %v948 = vxor.u32 %v548, %v748
    %v949 = vxor.u32 %v549, %v749
    %v950 = vxor.u32 %v550, %v750
    %v951 = vxor.u32 %v551, %v751
    %v952 = vxor.u32 %v552, %v752
    %v953 = vxor.u32 %v553, %v753
    %v954 = vxor.u32 %v554, %v754
    %v955 = vxor.u32 %v555, %v755
    %v956 = vxor.u32 %v556, %v756
    %v957 = vxor.u32 %v557, %v757
    %v958 = vxor.u32 %v558, %v758
    %v959 = vxor.u32 %v559, %v759
    %v960 = vxor.u32 %v560, %v760
    %v961 = vxor.u32 %v561, %v761
    %v962 = vxor.u32 %v562, %v762
    %v963 = vxor.u32 %v563, %v763
    %v964 = vxor.u32 %v564, %v764
    %v965 = vxor.u32 %v565, %v765
    %v966 = vxor.u32 %v566, %v766
    %v967 = vxor.u32 %v567, %v767
    %v968 = vxor.u32 %v568, %v768
    %v969 = vxor.u32 %v569, %v769
    %v970 = vxor.u32 %v570, %v770
    %v971 = vxor.u32 %v571, %v771
    %v972 = vxor.u32 %v572, %v772
    %v973 = vxor.u32 %v573, %v773
    %v974 = vxor.u32 %v574, %v774
    %v975 = vxor.u32 %v575, %v775
    %v976 = vxor.u32 %v576, %v776
    %v977 = vxor.u32 %v577, %v777
    %v978 = vxor.u32 %v578, %v778
    %v979 = vxor.u32 %v579, %v779
    %v980 = vxor.u32 %v580, %v780
    %v981 = vxor.u32 %v581, %v781
    %v982 = vxor.u32 %v582, %v782
    %v983 = vxor.u32 %v583, %v783
    %v984 = vxor.u32 %v584, %v784
    %v985 = vxor.u32 %v585, %v785
    %v986 = vxor.u32 %v586, %v786
    %v987 = vxor.u32 %v587, %v787
    %v988 = vxor.u32 %v588, %v788
    %v989 = vxor.u32 %v589, %v789
    %v990 = vxor.u32 %v590, %v790
    %v991 = vxor.u32 %v591, %v791
    %v992 = vxor.u32 %v592, %v792
    %v993 = vxor.u32 %v593, %v793
    %v994 = vxor.u32 %v594, %v794
    %v995 = vxor.u32 %v595, %v795
    %v996 = vxor.u32 %v596, %v796
    %v997 = vxor.u32 %v597, %v797
    %v998 = vxor.u32 %v598, %v798
    %v999 = vxor.u32 %v599, %v799
    %v1000 = vxor.u32 %v600, %v800
    %v1001 = vxor.u32 %v601, %v801
    %v1002 = vxor.u32 %v602, %v802
    %v1003 = vxor.u32 %v603, %v803
    %v1004 = vxor.u32 %v604, %v804
    %v1005 = vxor.u32 %v605, %v805
    %v1006 = vxor.u32 %v606, %v806
    %v1007 = vxor.u32 %v607, %v807
    %v1008 = vxor.u32 %v608, %v808
    %v1009 = vxor.u32 %v609, %v809
    %v1010 = vxor.u32 %v610, %v810
    %v1011 = vxor.u32 %v611, %v811
    %v1012 = vxor.u32 %v612, %v812
    %v1013 = vxor.u32 %v613, %v813
    %v1014 = vxor.u32 %v614, %v814
    %v1015 = vxor.u32 %v615, %v815
    %v1016 = vxor.u32 %v616, %v816
    %v1017 = vxor.u32 %v617, %v817
    %v1018 = vxor.u32 %v618, %v818
    %v1019 = vxor.u32 %v619, %v819
    %v1020 = vxor.u32 %v620, %v820
    %v1021 = vxor.u32 %v621, %v821
    %v1022 = vxor.u32 %v622, %v822
    %v1023 = vxor.u32 %v623, %v823
    %v1024 = vxor.u32 %v624, %v824
    %v1025 = vxor.u32 %v625, %v825
    %v1026 = vxor.u32 %v626, %v826
    %v1027 = vxor.u32 %v627, %v827
    %v1028 = vxor.u32 %v628, %v828
    %v1029 = vxor.u32 %v629, %v829
    %v1030 = vxor.u32 %v630, %v830
    %v1031 = vxor.u32 %v631, %v831
    %v1032 = vxor.u32 %v632, %v832
    %v1033 = vxor.u32 %v633, %v833
    %v1034 = vxor.u32 %v634, %v834
    %v1035 = vxor.u32 %v635, %v835
    %v1036 = vxor.u32 %v636, %v836
    %v1037 = vxor.u32 %v637, %v837
    %v1038 = vxor.u32 %v638, %v838
    %v1039 = vxor.u32 %v639, %v839
    %v1040 = vxor.u32 %v640, %v840
    %v1041 = vxor.u32 %v641, %v841
    %v1042 = vxor.u32 %v642, %v842
    %v1043 = vxor.u32 %v643, %v843
    %v1044 = vxor.u32 %v644, %v844
    %v1045 = vxor.u32 %v645, %v845
    %v1046 = vxor.u32 %v646, %v846
    %v1047 = vxor.u32 %v647, %v847
    %v1048 = vxor.u32 %v648, %v848
    %v1049 = vxor.u32 %v649, %v849
    %v1050 = vxor.u32 %v650, %v850
    %v1051 = vxor.u32 %v651, %v851
    %v1052 = vxor.u32 %v652, %v852
    %v1053 = vxor.u32 %v653, %v853
    %v1054 = vxor.u32 %v654, %v854
    %v1055 = vxor.u32 %v655, %v855
    %v1056 = vxor.u32 %v656, %v856
    %v1057 = vxor.u32 %v657, %v857
    %v1058 = vxor.u32 %v658, %v858
    %v1059 = vxor.u32 %v659, %v859
    %v1060 = vxor.u32 %v660, %v860
    %v1061 = vxor.u32 %v661, %v861
    %v1062 = vxor.u32 %v662, %v862
    %v1063 = vxor.u32 %v663, %v863
    %v1064 = vxor.u32 %v664, %v864
    %v1065 = vxor.u32 %v665, %v865
    %v1066 = vxor.u32 %v666, %v866
    %v1067 = vxor.u32 %v667, %v867
    %v1068 = vxor.u32 %v668, %v868
    %v1069 = vxor.u32 %v669, %v869
    %v1070 = vxor.u32 %v670, %v870
    %v1071 = vxor.u32 %v671, %v871
    %v1072 = vxor.u32 %v672, %v872
    %v1073 = vxor.u32 %v673, %v873
    %v1074 = vxor.u32 %v674, %v874
    %v1075 = vxor.u32 %v675, %v875
    %v1076 = vxor.u32 %v676, %v876
    %v1077 = vxor.u32 %v677, %v877
    %v1078 = vxor.u32 %v678, %v878
    %v1079 = vxor.u32 %v679, %v879
    %v1080 = vxor.u32 %v680, %v880
    %v1081 = vxor.u32 %v681, %v881
    %v1082 = vxor.u32 %v682, %v882
    %v1083 = vxor.u32 %v683, %v883
    %v1084 = vxor.u32 %v684, %v884
    %v1085 = vxor.u32 %v685, %v885
    %v1086 = vxor.u32 %v686, %v886
    %v1087 = vxor.u32 %v687, %v887
    %v1088 = vxor.u32 %v688, %v888
    %v1089 = vxor.u32 %v689, %v889
    %v1090 = vxor.u32 %v690, %v890
    %v1091 = vxor.u32 %v691, %v891
    %v1092 = vxor.u32 %v692, %v892
    %v1093 = vxor.u32 %v693, %v893
    %v1094 = vxor.u32 %v694, %v894
    %v1095 = vxor.u32 %v695, %v895
    %v1096 = vxor.u32 %v696, %v896
    %v1097 = vxor.u32 %v697, %v897
    %v1098 = vxor.u32 %v698, %v898
    %v1099 = vxor.u32 %v699, %v899
    %v1100 = vxor.u32 %v700, %v900
    %v1101 = vxor.u32 %v701, %v901
    %v1102 = vxor.u32 %v702, %v902
    %v1103 = vxor.u32 %v703, %v903
    %v1104 = vxor.u32 %v704, %v904
    %v1105 = vxor.u32 %v705, %v905
    %v1106 = vxor.u32 %v706, %v906
    %v1107 = vxor.u32 %v707, %v907
    %v1108 = vxor.u32 %v708, %v908
    %v1109 = vxor.u32 %v709, %v909
    %v1110 = vxor.u32 %v710, %v910
    %v1111 = vxor.u32 %v711, %v911
    %v1112 = vxor.u32 %v712, %v912
    %v1113 = vxor.u32 %v713, %v913
    %v1114 = vxor.u32 %v714, %v914
    %v1115 = vxor.u32 %v715, %v915
    %v1116 = vmul.u32 %v916, 2146121005
    %v1117 = vmul.u32 %v917, 2146121005
    %v1118 = vmul.u32 %v918, 2146121005
    %v1119 = vmul.u32 %v919, 2146121005
    %v1120 = vmul.u32 %v920, 2146121005
    %v1121 = vmul.u32 %v921, 2146121005
    %v1122 = vmul.u32 %v922, 2146121005
    %v1123 = vmul.u32 %v923, 2146121005
    %v1124 = vmul.u32 %v924, 2146121005
    %v1125 = vmul.u32 %v925, 2146121005
    %v1126 = vmul.u32 %v926, 2146121005
    %v1127 = vmul.u32 %v927, 2146121005
    %v1128 = vmul.u32 %v928, 2146121005
    %v1129 = vmul.u32 %v929, 2146121005
    %v1130 = vmul.u32 %v930, 2146121005
    %v1131 = vmul.u32 %v931, 2146121005
    %v1132 = vmul.u32 %v932, 2146121005
    %v1133 = vmul.u32 %v933, 2146121005
    %v1134 = vmul.u32 %v934, 2146121005
    %v1135 = vmul.u32 %v935, 2146121005
    %v1136 = vmul.u32 %v936, 2146121005
    %v1137 = vmul.u32 %v937, 2146121005
    %v1138 = vmul.u32 %v938, 2146121005
    %v1139 = vmul.u32 %v939, 2146121005
    %v1140 = vmul.u32 %v940, 2146121005
    %v1141 = vmul.u32 %v941, 2146121005
    %v1142 = vmul.u32 %v942, 2146121005
    %v1143 = vmul.u32 %v943, 2146121005
    %v1144 = vmul.u32 %v944, 2146121005
    %v1145 = vmul.u32 %v945, 2146121005
    %v1146 = vmul.u32 %v946, 2146121005
    %v1147 = vmul.u32 %v947, 2146121005
    %v1148 = vmul.u32 %v948, 2146121005
    %v1149 = vmul.u32 %v949, 2146121005
    %v1150 = vmul.u32 %v950, 2146121005
    %v1151 = vmul.u32 %v951, 2146121005
    %v1152 = vmul.u32 %v952, 2146121005
    %v1153 = vmul.u32 %v953, 2146121005
    %v1154 = vmul.u32 %v954, 2146121005
    %v1155 = vmul.u32 %v955, 2146121005
    %v1156 = vmul.u32 %v956, 2146121005
    %v1157 = vmul.u32 %v957, 2146121005
    %v1158 = vmul.u32 %v958, 2146121005
    %v1159 = vmul.u32 %v959, 2146121005
    %v1160 = vmul.u32 %v960, 2146121005
    %v1161 = vmul.u32 %v961, 2146121005
    %v1162 = vmul.u32 %v962, 2146121005
    %v1163 = vmul.u32 %v963, 2146121005
    %v1164 = vmul.u32 %v964, 2146121005
    %v1165 = vmul.u32 %v965, 2146121005
    %v1166 = vmul.u32 %v966, 2146121005
    %v1167 = vmul.u32 %v967, 2146121005
    %v1168 = vmul.u32 %v968, 2146121005
    %v1169 = vmul.u32 %v969, 2146121005
    %v1170 = vmul.u32 %v970, 2146121005
    %v1171 = vmul.u32 %v971, 2146121005
    %v1172 = vmul.u32 %v972, 2146121005
    %v1173 = vmul.u32 %v973, 2146121005
    %v1174 = vmul.u32 %v974, 2146121005
    %v1175 = vmul.u32 %v975, 2146121005
    %v1176 = vmul.u32 %v976, 2146121005
    %v1177 = vmul.u32 %v977, 2146121005
    %v1178 = vmul.u32 %v978, 2146121005
    %v1179 = vmul.u32 %v979, 2146121005
    %v1180 = vmul.u32 %v980, 2146121005
    %v1181 = vmul.u32 %v981, 2146121005
    %v1182 = vmul.u32 %v982, 2146121005
    %v1183 = vmul.u32 %v983, 2146121005
    %v1184 = vmul.u32 %v984, 2146121005
    %v1185 = vmul.u32 %v985, 2146121005
    %v1186 = vmul.u32 %v986, 2146121005
    %v1187 = vmul.u32 %v987, 2146121005
    %v1188 = vmul.u32 %v988, 2146121005
    %v1189 = vmul.u32 %v989, 2146121005
    %v1190 = vmul.u32 %v990, 2146121005
    %v1191 = vmul.u32 %v991, 2146121005
    %v1192 = vmul.u32 %v992, 2146121005
    %v1193 = vmul.u32 %v993, 2146121005
    %v1194 = vmul.u32 %v994, 2146121005
    %v1195 = vmul.u32 %v995, 2146121005
    %v1196 = vmul.u32 %v996, 2146121005
    %v1197 = vmul.u32 %v997, 2146121005
    %v1198 = vmul.u32 %v998, 2146121005
    %v1199 = vmul.u32 %v999, 2146121005
    %v1200 = vmul.u32 %v1000, 2146121005
    %v1201 = vmul.u32 %v1001, 2146121005
    %v1202 = vmul.u32 %v1002, 2146121005
    %v1203 = vmul.u32 %v1003, 2146121005
    %v1204 = vmul.u32 %v1004, 2146121005
    %v1205 = vmul.u32 %v1005, 2146121005
    %v1206 = vmul.u32 %v1006, 2146121005
    %v1207 = vmul.u32 %v1007, 2146121005
    %v1208 = vmul.u32 %v1008, 2146121005
    %v1209 = vmul.u32 %v1009, 2146121005
    %v1210 = vmul.u32 %v1010, 2146121005
    %v1211 = vmul.u32 %v1011, 2146121005
    %v1212 = vmul.u32 %v1012, 2146121005
    %v1213 = vmul.u32 %v1013, 2146121005
    %v1214 = vmul.u32 %v1014, 2146121005
    %v1215 = vmul.u32 %v1015, 2146121005
    %v1216 = vmul.u32 %v1016, 2146121005
    %v1217 = vmul.u32 %v1017, 2146121005
    %v1218 = vmul.u32 %v1018, 2146121005
    %v1219 = vmul.u32 %v1019, 2146121005
    %v1220 = vmul.u32 %v1020, 2146121005
    %v1221 = vmul.u32 %v1021, 2146121005
    %v1222 = vmul.u32 %v1022, 2146121005
    %v1223 = vmul.u32 %v1023, 2146121005
    %v1224 = vmul.u32 %v1024, 2146121005
    %v1225 = vmul.u32 %v1025, 2146121005
    %v1226 = vmul.u32 %v1026, 2146121005
    %v1227 = vmul.u32 %v1027, 2146121005
    %v1228 = vmul.u32 %v1028, 2146121005
    %v1229 = vmul.u32 %v1029, 2146121005
    %v1230 = vmul.u32 %v1030, 2146121005
    %v1231 = vmul.u32 %v1031, 2146121005
    %v1232 = vmul.u32 %v1032, 2146121005
    %v1233 = vmul.u32 %v1033, 2146121005
    %v1234 = vmul.u32 %v1034, 2146121005
    %v1235 = vmul.u32 %v1035, 2146121005
    %v1236 = vmul.u32 %v1036, 2146121005
    %v1237 = vmul.u32 %v1037, 2146121005
    %v1238 = vmul.u32 %v1038, 2146121005
    %v1239 = vmul.u32 %v1039, 2146121005
    %v1240 = vmul.u32 %v1040, 2146121005
    %v1241 = vmul.u32 %v1041, 2146121005
    %v1242 = vmul.u32 %v1042, 2146121005
    %v1243 = vmul.u32 %v1043, 2146121005
    %v1244 = vmul.u32 %v1044, 2146121005
    %v1245 = vmul.u32 %v1045, 2146121005
    %v1246 = vmul.u32 %v1046, 2146121005
    %v1247 = vmul.u32 %v1047, 2146121005
    %v1248 = vmul.u32 %v1048, 2146121005
    %v1249 = vmul.u32 %v1049, 2146121005
    %v1250 = vmul.u32 %v1050, 2146121005
    %v1251 = vmul.u32 %v1051, 2146121005
    %v1252 = vmul.u32 %v1052, 2146121005
    %v1253 = vmul.u32 %v1053, 2146121005
    %v1254 = vmul.u32 %v1054, 2146121005
    %v1255 = vmul.u32 %v1055, 2146121005
    %v1256 = vmul.u32 %v1056, 2146121005
    %v1257 = vmul.u32 %v1057, 2146121005
    %v1258 = vmul.u32 %v1058, 2146121005
    %v1259 = vmul.u32 %v1059, 2146121005
    %v1260 = vmul.u32 %v1060, 2146121005
    %v1261 = vmul.u32 %v1061, 2146121005
    %v1262 = vmul.u32 %v1062, 2146121005
    %v1263 = vmul.u32 %v1063, 2146121005
    %v1264 = vmul.u32 %v1064, 2146121005
    %v1265 = vmul.u32 %v1065, 2146121005
    %v1266 = vmul.u32 %v1066, 2146121005
    %v1267 = vmul.u32 %v1067, 2146121005
    %v1268 = vmul.u32 %v1068, 2146121005
    %v1269 = vmul.u32 %v1069, 2146121005
    %v1270 = vmul.u32 %v1070, 2146121005
    %v1271 = vmul.u32 %v1071, 2146121005
    %v1272 = vmul.u32 %v1072, 2146121005
    %v1273 = vmul.u32 %v1073, 2146121005
    %v1274 = vmul.u32 %v1074, 2146121005
    %v1275 = vmul.u32 %v1075, 2146121005
    %v1276 = vmul.u32 %v1076, 2146121005
    %v1277 = vmul.u32 %v1077, 2146121005
    %v1278 = vmul.u32 %v1078, 2146121005
    %v1279 = vmul.u32 %v1079, 2146121005
    %v1280 = vmul.u32 %v1080, 2146121005
    %v1281 = vmul.u32 %v1081, 2146121005
    %v1282 = vmul.u32 %v1082, 2146121005
    %v1283 = vmul.u32 %v1083, 2146121005
    %v1284 = vmul.u32 %v1084, 2146121005
    %v1285 = vmul.u32 %v1085, 2146121005
    %v1286 = vmul.u32 %v1086, 2146121005
    %v1287 = vmul.u32 %v1087, 2146121005
    %v1288 = vmul.u32 %v1088, 2146121005
    %v1289 = vmul.u32 %v1089, 2146121005
    %v1290 = vmul.u32 %v1090, 2146121005
    %v1291 = vmul.u32 %v1091, 2146121005
    %v1292 = vmul.u32 %v1092, 2146121005
    %v1293 = vmul.u32 %v1093, 2146121005
    %v1294 = vmul.u32 %v1094, 2146121005
    %v1295 = vmul.u32 %v1095, 2146121005
    %v1296 = vmul.u32 %v1096, 2146121005
    %v1297 = vmul.u32 %v1097, 2146121005
    %v1298 = vmul.u32 %v1098, 2146121005
    %v1299 = vmul.u32 %v1099, 2146121005
    %v1300 = vmul.u32 %v1100, 2146121005
    %v1301 = vmul.u32 %v1101, 2146121005
    %v1302 = vmul.u32 %v1102, 2146121005
    %v1303 = vmul.u32 %v1103, 2146121005
    %v1304 = vmul.u32 %v1104, 2146121005
    %v1305 = vmul.u32 %v1105, 2146121005
    %v1306 = vmul.u32 %v1106, 2146121005
    %v1307 = vmul.u32 %v1107, 2146121005
    %v1308 = vmul.u32 %v1108, 2146121005
    %v1309 = vmul.u32 %v1109, 2146121005
    %v1310 = vmul.u32 %v1110, 2146121005
    %v1311 = vmul.u32 %v1111, 2146121005
    %v1312 = vmul.u32 %v1112, 2146121005
    %v1313 = vmul.u32 %v1113, 2146121005
    %v1314 = vmul.u32 %v1114, 2146121005
    %v1315 = vmul.u32 %v1115, 2146121005
    %v1316 = vshrl.u32 %v1116, 15
    %v1317 = vshrl.u32 %v1117, 15
    %v1318 = vshrl.u32 %v1118, 15
    %v1319 = vshrl.u32 %v1119, 15
    %v1320 = vshrl.u32 %v1120, 15
    %v1321 = vshrl.u32 %v1121, 15
    %v1322 = vshrl.u32 %v1122, 15
    %v1323 = vshrl.u32 %v1123, 15
    %v1324 = vshrl.u32 %v1124, 15
    %v1325 = vshrl.u32 %v1125, 15
    %v1326 = vshrl.u32 %v1126, 15
    %v1327 = vshrl.u32 %v1127, 15
    %v1328 = vshrl.u32 %v1128, 15
    %v1329 = vshrl.u32 %v1129, 15
    %v1330 = vshrl.u32 %v1130, 15
    %v1331 = vshrl.u32 %v1131, 15
    %v1332 = vshrl.u32 %v1132, 15
    %v1333 = vshrl.u32 %v1133, 15
    %v1334 = vshrl.u32 %v1134, 15
    %v1335 = vshrl.u32 %v1135, 15
    %v1336 = vshrl.u32 %v1136, 15
    %v1337 = vshrl.u32 %v1137, 15
    %v1338 = vshrl.u32 %v1138, 15
    %v1339 = vshrl.u32 %v1139, 15
    %v1340 = vshrl.u32 %v1140, 15
    %v1341 = vshrl.u32 %v1141, 15
    %v1342 = vshrl.u32 %v1142, 15
    %v1343 = vshrl.u32 %v1143, 15
    %v1344 = vshrl.u32 %v1144, 15
    %v1345 = vshrl.u32 %v1145, 15
    %v1346 = vshrl.u32 %v1146, 15
    %v1347 = vshrl.u32 %v1147, 15
    %v1348 = vshrl.u32 %v1148, 15
    %v1349 = vshrl.u32 %v1149, 15
    %v1350 = vshrl.u32 %v1150, 15
    %v1351 = vshrl.u32 %v1151, 15
    %v1352 = vshrl.u32 %v1152, 15
    %v1353 = vshrl.u32 %v1153, 15
    %v1354 = vshrl.u32 %v1154, 15
    %v1355 = vshrl.u32 %v1155, 15
    %v1356 = vshrl.u32 %v1156, 15
    %v1357 = vshrl.u32 %v1157, 15
    %v1358 = vshrl.u32 %v1158, 15
    %v1359 = vshrl.u32 %v1159, 15
    %v1360 = vshrl.u32 %v1160, 15
    %v1361 = vshrl.u32 %v1161, 15
    %v1362 = vshrl.u32 %v1162, 15
    %v1363 = vshrl.u32 %v1163, 15
    %v1364 = vshrl.u32 %v1164, 15
    %v1365 = vshrl.u32 %v1165, 15
    %v1366 = vshrl.u32 %v1166, 15
    %v1367 = vshrl.u32 %v1167, 15
    %v1368 = vshrl.u32 %v1168, 15
    %v1369 = vshrl.u32 %v1169, 15
    %v1370 = vshrl.u32 %v1170, 15
    %v1371 = vshrl.u32 %v1171, 15
    %v1372 = vshrl.u32 %v1172, 15
    %v1373 = vshrl.u32 %v1173, 15
    %v1374 = vshrl.u32 %v1174, 15
    %v1375 = vshrl.u32 %v1175, 15
    %v1376 = vshrl.u32 %v1176, 15
    %v1377 = vshrl.u32 %v1177, 15
    %v1378 = vshrl.u32 %v1178, 15
    %v1379 = vshrl.u32 %v1179, 15
    %v1380 = vshrl.u32 %v1180, 15
    %v1381 = vshrl.u32 %v1181, 15
    %v1382 = vshrl.u32 %v1182, 15
    %v1383 = vshrl.u32 %v1183, 15
    %v1384 = vshrl.u32 %v1184, 15
    %v1385 = vshrl.u32 %v1185, 15
    %v1386 = vshrl.u32 %v1186, 15
    %v1387 = vshrl.u32 %v1187, 15
    %v1388 = vshrl.u32 %v1188, 15
    %v1389 = vshrl.u32 %v1189, 15
    %v1390 = vshrl.u32 %v1190, 15
    %v1391 = vshrl.u32 %v1191, 15
    %v1392 = vshrl.u32 %v1192, 15
    %v1393 = vshrl.u32 %v1193, 15
    %v1394 = vshrl.u32 %v1194, 15
    %v1395 = vshrl.u32 %v1195, 15
    %v1396 = vshrl.u32 %v1196, 15
    %v1397 = vshrl.u32 %v1197, 15
    %v1398 = vshrl.u32 %v1198, 15
    %v1399 = vshrl.u32 %v1199, 15
    %v1400 = vshrl.u32 %v1200, 15
    %v1401 = vshrl.u32 %v1201, 15
    %v1402 = vshrl.u32 %v1202, 15
    %v1403 = vshrl.u32 %v1203, 15
    %v1404 = vshrl.u32 %v1204, 15
    %v1405 = vshrl.u32 %v1205, 15
    %v1406 = vshrl.u32 %v1206, 15
    %v1407 = vshrl.u32 %v1207, 15
    %v1408 = vshrl.u32 %v1208, 15
    %v1409 = vshrl.u32 %v1209, 15
    %v1410 = vshrl.u32 %v1210, 15
    %v1411 = vshrl.u32 %v1211, 15
    %v1412 = vshrl.u32 %v1212, 15
    %v1413 = vshrl.u32 %v1213, 15
    %v1414 = vshrl.u32 %v1214, 15
    %v1415 = vshrl.u32 %v1215, 15
    %v1416 = vshrl.u32 %v1216, 15
    %v1417 = vshrl.u32 %v1217, 15
    %v1418 = vshrl.u32 %v1218, 15
    %v1419 = vshrl.u32 %v1219, 15
    %v1420 = vshrl.u32 %v1220, 15
    %v1421 = vshrl.u32 %v1221, 15
    %v1422 = vshrl.u32 %v1222, 15
    %v1423 = vshrl.u32 %v1223, 15
    %v1424 = vshrl.u32 %v1224, 15
    %v1425 = vshrl.u32 %v1225, 15
    %v1426 = vshrl.u32 %v1226, 15
    %v1427 = vshrl.u32 %v1227, 15
    %v1428 = vshrl.u32 %v1228, 15
    %v1429 = vshrl.u32 %v1229, 15
    %v1430 = vshrl.u32 %v1230, 15
    %v1431 = vshrl.u32 %v1231, 15
    %v1432 = vshrl.u32 %v1232, 15
    %v1433 = vshrl.u32 %v1233, 15
    %v1434 = vshrl.u32 %v1234, 15
    %v1435 = vshrl.u32 %v1235, 15
    %v1436 = vshrl.u32 %v1236, 15
    %v1437 = vshrl.u32 %v1237, 15
    %v1438 = vshrl.u32 %v1238, 15
    %v1439 = vshrl.u32 %v1239, 15
    %v1440 = vshrl.u32 %v1240, 15
    %v1441 = vshrl.u32 %v1241, 15
    %v1442 = vshrl.u32 %v1242, 15
    %v1443 = vshrl.u32 %v1243, 15
    %v1444 = vshrl.u32 %v1244, 15
    %v1445 = vshrl.u32 %v1245, 15
    %v1446 = vshrl.u32 %v1246, 15
    %v1447 = vshrl.u32 %v1247, 15
    %v1448 = vshrl.u32 %v1248, 15
    %v1449 = vshrl.u32 %v1249, 15
    %v1450 = vshrl.u32 %v1250, 15
    %v1451 = vshrl.u32 %v1251, 15
    %v1452 = vshrl.u32 %v1252, 15
    %v1453 = vshrl.u32 %v1253, 15
    %v1454 = vshrl.u32 %v1254, 15
    %v1455 = vshrl.u32 %v1255, 15
    %v1456 = vshrl.u32 %v1256, 15
    %v1457 = vshrl.u32 %v1257, 15
    %v1458 = vshrl.u32 %v1258, 15
    %v1459 = vshrl.u32 %v1259, 15
    %v1460 = vshrl.u32 %v1260, 15
    %v1461 = vshrl.u32 %v1261, 15
    %v1462 = vshrl.u32 %v1262, 15
    %v1463 = vshrl.u32 %v1263, 15
    %v1464 = vshrl.u32 %v1264, 15
    %v1465 = vshrl.u32 %v1265, 15
    %v1466 = vshrl.u32 %v1266, 15
    %v1467 = vshrl.u32 %v1267, 15
    %v1468 = vshrl.u32 %v1268, 15
    %v1469 = vshrl.u32 %v1269, 15
    %v1470 = vshrl.u32 %v1270, 15
    %v1471 = vshrl.u32 %v1271, 15
    %v1472 = vshrl.u32 %v1272, 15
    %v1473 = vshrl.u32 %v1273, 15
    %v1474 = vshrl.u32 %v1274, 15
    %v1475 = vshrl.u32 %v1275, 15
    %v1476 = vshrl.u32 %v1276, 15
    %v1477 = vshrl.u32 %v1277, 15
    %v1478 = vshrl.u32 %v1278, 15
    %v1479 = vshrl.u32 %v1279, 15
    %v1480 = vshrl.u32 %v1280, 15
    %v1481 = vshrl.u32 %v1281, 15
    %v1482 = vshrl.u32 %v1282, 15
    %v1483 = vshrl.u32 %v1283, 15
    %v1484 = vshrl.u32 %v1284, 15
    %v1485 = vshrl.u32 %v1285, 15
    %v1486 = vshrl.u32 %v1286, 15
    %v1487 = vshrl.u32 %v1287, 15
    %v1488 = vshrl.u32 %v1288, 15
    %v1489 = vshrl.u32 %v1289, 15
    %v1490 = vshrl.u32 %v1290, 15
    %v1491 = vshrl.u32 %v1291, 15
    %v1492 = vshrl.u32 %v1292, 15
    %v1493 = vshrl.u32 %v1293, 15
    %v1494 = vshrl.u32 %v1294, 15
    %v1495 = vshrl.u32 %v1295, 15
    %v1496 = vshrl.u32 %v1296, 15
    %v1497 = vshrl.u32 %v1297, 15
    %v1498 = vshrl.u32 %v1298, 15
    %v1499 = vshrl.u32 %v1299, 15
    %v1500 = vshrl.u32 %v1300, 15
    %v1501 = vshrl.u32 %v1301, 15
    %v1502 = vshrl.u32 %v1302, 15
    %v1503 = vshrl.u32 %v1303, 15
    %v1504 = vshrl.u32 %v1304, 15
    %v1505 = vshrl.u32 %v1305, 15
    %v1506 = vshrl.u32 %v1306, 15
    %v1507 = vshrl.u32 %v1307, 15
    %v1508 = vshrl.u32 %v1308, 15
    %v1509 = vshrl.u32 %v1309, 15
    %v1510 = vshrl.u32 %v1310, 15
    %v1511 = vshrl.u32 %v1311, 15
    %v1512 = vshrl.u32 %v1312, 15
    %v1513 = vshrl.u32 %v1313, 15
    %v1514 = vshrl.u32 %v1314, 15
    %v1515 = vshrl.u32 %v1315, 15
    %v1516 = vxor.u32 %v1116, %v1316
    %v1517 = vxor.u32 %v1117, %v1317
    %v1518 = vxor.u32 %v1118, %v1318
    %v1519 = vxor.u32 %v1119, %v1319
    %v1520 = vxor.u32 %v1120, %v1320
    %v1521 = vxor.u32 %v1121, %v1321
    %v1522 = vxor.u32 %v1122, %v1322
    %v1523 = vxor.u32 %v1123, %v1323
    %v1524 = vxor.u32 %v1124, %v1324
    %v1525 = vxor.u32 %v1125, %v1325
    %v1526 = vxor.u32 %v1126, %v1326
    %v1527 = vxor.u32 %v1127, %v1327
    %v1528 = vxor.u32 %v1128, %v1328
    %v1529 = vxor.u32 %v1129, %v1329
    %v1530 = vxor.u32 %v1130, %v1330
    %v1531 = vxor.u32 %v1131, %v1331
    %v1532 = vxor.u32 %v1132, %v1332
    %v1533 = vxor.u32 %v1133, %v1333
    %v1534 = vxor.u32 %v1134, %v1334
    %v1535 = vxor.u32 %v1135, %v1335
    %v1536 = vxor.u32 %v1136, %v1336
    %v1537 = vxor.u32 %v1137, %v1337
    %v1538 = vxor.u32 %v1138, %v1338
    %v1539 = vxor.u32 %v1139, %v1339
    %v1540 = vxor.u32 %v1140, %v1340
    %v1541 = vxor.u32 %v1141, %v1341
    %v1542 = vxor.u32 %v1142, %v1342
    %v1543 = vxor.u32 %v1143, %v1343
    %v1544 = vxor.u32 %v1144, %v1344
    %v1545 = vxor.u32 %v1145, %v1345
    %v1546 = vxor.u32 %v1146, %v1346
    %v1547 = vxor.u32 %v1147, %v1347
    %v1548 = vxor.u32 %v1148, %v1348
    %v1549 = vxor.u32 %v1149, %v1349
    %v1550 = vxor.u32 %v1150, %v1350
    %v1551 = vxor.u32 %v1151, %v1351
    %v1552 = vxor.u32 %v1152, %v1352
    %v1553 = vxor.u32 %v1153, %v1353
    %v1554 = vxor.u32 %v1154, %v1354
    %v1555 = vxor.u32 %v1155, %v1355
    %v1556 = vxor.u32 %v1156, %v1356
    %v1557 = vxor.u32 %v1157, %v1357
    %v1558 = vxor.u32 %v1158, %v1358
    %v1559 = vxor.u32 %v1159, %v1359
    %v1560 = vxor.u32 %v1160, %v1360
    %v1561 = vxor.u32 %v1161, %v1361
    %v1562 = vxor.u32 %v1162, %v1362
    %v1563 = vxor.u32 %v1163, %v1363
    %v1564 = vxor.u32 %v1164, %v1364
    %v1565 = vxor.u32 %v1165, %v1365
    %v1566 = vxor.u32 %v1166, %v1366
    %v1567 = vxor.u32 %v1167, %v1367
    %v1568 = vxor.u32 %v1168, %v1368
    %v1569 = vxor.u32 %v1169, %v1369
    %v1570 = vxor.u32 %v1170, %v1370
    %v1571 = vxor.u32 %v1171, %v1371
    %v1572 = vxor.u32 %v1172, %v1372
    %v1573 = vxor.u32 %v1173, %v1373
    %v1574 = vxor.u32 %v1174, %v1374
    %v1575 = vxor.u32 %v1175, %v1375
    %v1576 = vxor.u32 %v1176, %v1376
    %v1577 = vxor.u32 %v1177, %v1377
    %v1578 = vxor.u32 %v1178, %v1378
    %v1579 = vxor.u32 %v1179, %v1379
    %v1580 = vxor.u32 %v1180, %v1380
    %v1581 = vxor.u32 %v1181, %v1381
    %v1582 = vxor.u32 %v1182, %v1382
    %v1583 = vxor.u32 %v1183, %v1383
    %v1584 = vxor.u32 %v1184, %v1384
    %v1585 = vxor.u32 %v1185, %v1385
    %v1586 = vxor.u32 %v1186, %v1386
    %v1587 = vxor.u32 %v1187, %v1387
    %v1588 = vxor.u32 %v1188, %v1388
    %v1589 = vxor.u32 %v1189, %v1389
    %v1590 = vxor.u32 %v1190, %v1390
    %v1591 = vxor.u32 %v1191, %v1391
    %v1592 = vxor.u32 %v1192, %v1392
    %v1593 = vxor.u32 %v1193, %v1393
    %v1594 = vxor.u32 %v1194, %v1394
    %v1595 = vxor.u32 %v1195, %v1395
    %v1596 = vxor.u32 %v1196, %v1396
    %v1597 = vxor.u32 %v1197, %v1397
    %v1598 = vxor.u32 %v1198, %v1398
    %v1599 = vxor.u32 %v1199, %v1399
    %v1600 = vxor.u32 %v1200, %v1400
    %v1601 = vxor.u32 %v1201, %v1401
    %v1602 = vxor.u32 %v1202, %v1402
    %v1603 = vxor.u32 %v1203, %v1403
    %v1604 = vxor.u32 %v1204, %v1404
    %v1605 = vxor.u32 %v1205, %v1405
    %v1606 = vxor.u32 %v1206, %v1406
    %v1607 = vxor.u32 %v1207, %v1407
    %v1608 = vxor.u32 %v1208, %v1408
    %v1609 = vxor.u32 %v1209, %v1409
    %v1610 = vxor.u32 %v1210, %v1410
    %v1611 = vxor.u32 %v1211, %v1411
    %v1612 = vxor.u32 %v1212, %v1412
    %v1613 = vxor.u32 %v1213, %v1413
    %v1614 = vxor.u32 %v1214, %v1414
    %v1615 = vxor.u32 %v1215, %v1415
    %v1616 = vxor.u32 %v1216, %v1416
    %v1617 = vxor.u32 %v1217, %v1417
    %v1618 = vxor.u32 %v1218, %v1418
    %v1619 = vxor.u32 %v1219, %v1419
    %v1620 = vxor.u32 %v1220, %v1420
    %v1621 = vxor.u32 %v1221, %v1421
    %v1622 = vxor.u32 %v1222, %v1422
    %v1623 = vxor.u32 %v1223, %v1423
    %v1624 = vxor.u32 %v1224, %v1424
    %v1625 = vxor.u32 %v1225, %v1425
    %v1626 = vxor.u32 %v1226, %v1426
    %v1627 = vxor.u32 %v1227, %v1427
    %v1628 = vxor.u32 %v1228, %v1428
    %v1629 = vxor.u32 %v1229, %v1429
    %v1630 = vxor.u32 %v1230, %v1430
    %v1631 = vxor.u32 %v1231, %v1431
    %v1632 = vxor.u32 %v1232, %v1432
    %v1633 = vxor.u32 %v1233, %v1433
    %v1634 = vxor.u32 %v1234, %v1434
    %v1635 = vxor.u32 %v1235, %v1435
    %v1636 = vxor.u32 %v1236, %v1436
    %v1637 = vxor.u32 %v1237, %v1437
    %v1638 = vxor.u32 %v1238, %v1438
    %v1639 = vxor.u32 %v1239, %v1439
    %v1640 = vxor.u32 %v1240, %v1440
    %v1641 = vxor.u32 %v1241, %v1441
    %v1642 = vxor.u32 %v1242, %v1442
    %v1643 = vxor.u32 %v1243, %v1443
    %v1644 = vxor.u32 %v1244, %v1444
    %v1645 = vxor.u32 %v1245, %v1445
    %v1646 = vxor.u32 %v1246, %v1446
    %v1647 = vxor.u32 %v1247, %v1447
    %v1648 = vxor.u32 %v1248, %v1448
    %v1649 = vxor.u32 %v1249, %v1449
    %v1650 = vxor.u32 %v1250, %v1450
    %v1651 = vxor.u32 %v1251, %v1451
    %v1652 = vxor.u32 %v1252, %v1452
    %v1653 = vxor.u32 %v1253, %v1453
    %v1654 = vxor.u32 %v1254, %v1454
    %v1655 = vxor.u32 %v1255, %v1455
    %v1656 = vxor.u32 %v1256, %v1456
    %v1657 = vxor.u32 %v1257, %v1457
    %v1658 = vxor.u32 %v1258, %v1458
    %v1659 = vxor.u32 %v1259, %v1459
    %v1660 = vxor.u32 %v1260, %v1460
    %v1661 = vxor.u32 %v1261, %v1461
    %v1662 = vxor.u32 %v1262, %v1462
    %v1663 = vxor.u32 %v1263, %v1463
    %v1664 = vxor.u32 %v1264, %v1464
    %v1665 = vxor.u32 %v1265, %v1465
    %v1666 = vxor.u32 %v1266, %v1466
    %v1667 = vxor.u32 %v1267, %v1467
    %v1668 = vxor.u32 %v1268, %v1468
    %v1669 = vxor.u32 %v1269, %v1469
    %v1670 = vxor.u32 %v1270, %v1470
    %v1671 = vxor.u32 %v1271, %v1471
    %v1672 = vxor.u32 %v1272, %v1472
    %v1673 = vxor.u32 %v1273, %v1473
    %v1674 = vxor.u32 %v1274, %v1474
    %v1675 = vxor.u32 %v1275, %v1475
    %v1676 = vxor.u32 %v1276, %v1476
    %v1677 = vxor.u32 %v1277, %v1477
    %v1678 = vxor.u32 %v1278, %v1478
    %v1679 = vxor.u32 %v1279, %v1479
    %v1680 = vxor.u32 %v1280, %v1480
    %v1681 = vxor.u32 %v1281, %v1481
    %v1682 = vxor.u32 %v1282, %v1482
    %v1683 = vxor.u32 %v1283, %v1483
    %v1684 = vxor.u32 %v1284, %v1484
    %v1685 = vxor.u32 %v1285, %v1485
    %v1686 = vxor.u32 %v1286, %v1486
    %v1687 = vxor.u32 %v1287, %v1487
    %v1688 = vxor.u32 %v1288, %v1488
    %v1689 = vxor.u32 %v1289, %v1489
    %v1690 = vxor.u32 %v1290, %v1490
    %v1691 = vxor.u32 %v1291, %v1491
    %v1692 = vxor.u32 %v1292, %v1492
    %v1693 = vxor.u32 %v1293, %v1493
    %v1694 = vxor.u32 %v1294, %v1494
    %v1695 = vxor.u32 %v1295, %v1495
    %v1696 = vxor.u32 %v1296, %v1496
    %v1697 = vxor.u32 %v1297, %v1497
    %v1698 = vxor.u32 %v1298, %v1498
    %v1699 = vxor.u32 %v1299, %v1499
    %v1700 = vxor.u32 %v1300, %v1500
    %v1701 = vxor.u32 %v1301, %v1501
    %v1702 = vxor.u32 %v1302, %v1502
    %v1703 = vxor.u32 %v1303, %v1503
    %v1704 = vxor.u32 %v1304, %v1504
    %v1705 = vxor.u32 %v1305, %v1505
    %v1706 = vxor.u32 %v1306, %v1506
    %v1707 = vxor.u32 %v1307, %v1507
    %v1708 = vxor.u32 %v1308, %v1508
    %v1709 = vxor.u32 %v1309, %v1509
    %v1710 = vxor.u32 %v1310, %v1510
    %v1711 = vxor.u32 %v1311, %v1511
    %v1712 = vxor.u32 %v1312, %v1512
    %v1713 = vxor.u32 %v1313, %v1513
    %v1714 = vxor.u32 %v1314, %v1514
    %v1715 = vxor.u32 %v1315, %v1515
    %v1716 = vmul.u32 %v1516, 2221713035
    %v1717 = vmul.u32 %v1517, 2221713035
    %v1718 = vmul.u32 %v1518, 2221713035
    %v1719 = vmul.u32 %v1519, 2221713035
    %v1720 = vmul.u32 %v1520, 2221713035
    %v1721 = vmul.u32 %v1521, 2221713035
    %v1722 = vmul.u32 %v1522, 2221713035
    %v1723 = vmul.u32 %v1523, 2221713035
    %v1724 = vmul.u32 %v1524, 2221713035
    %v1725 = vmul.u32 %v1525, 2221713035
    %v1726 = vmul.u32 %v1526, 2221713035
    %v1727 = vmul.u32 %v1527, 2221713035
    %v1728 = vmul.u32 %v1528, 2221713035
    %v1729 = vmul.u32 %v1529, 2221713035
    %v1730 = vmul.u32 %v1530, 2221713035
    %v1731 = vmul.u32 %v1531, 2221713035
    %v1732 = vmul.u32 %v1532, 2221713035
    %v1733 = vmul.u32 %v1533, 2221713035
    %v1734 = vmul.u32 %v1534, 2221713035
    %v1735 = vmul.u32 %v1535, 2221713035
    %v1736 = vmul.u32 %v1536, 2221713035
    %v1737 = vmul.u32 %v1537, 2221713035
    %v1738 = vmul.u32 %v1538, 2221713035
    %v1739 = vmul.u32 %v1539, 2221713035
    %v1740 = vmul.u32 %v1540, 2221713035
    %v1741 = vmul.u32 %v1541, 2221713035
    %v1742 = vmul.u32 %v1542, 2221713035
    %v1743 = vmul.u32 %v1543, 2221713035
    %v1744 = vmul.u32 %v1544, 2221713035
    %v1745 = vmul.u32 %v1545, 2221713035
    %v1746 = vmul.u32 %v1546, 2221713035
    %v1747 = vmul.u32 %v1547, 2221713035
    %v1748 = vmul.u32 %v1548, 2221713035
    %v1749 = vmul.u32 %v1549, 2221713035
    %v1750 = vmul.u32 %v1550, 2221713035
    %v1751 = vmul.u32 %v1551, 2221713035
    %v1752 = vmul.u32 %v1552, 2221713035
    %v1753 = vmul.u32 %v1553, 2221713035
    %v1754 = vmul.u32 %v1554, 2221713035
    %v1755 = vmul.u32 %v1555, 2221713035
    %v1756 = vmul.u32 %v1556, 2221713035
    %v1757 = vmul.u32 %v1557, 2221713035
    %v1758 = vmul.u32 %v1558, 2221713035
    %v1759 = vmul.u32 %v1559, 2221713035
    %v1760 = vmul.u32 %v1560, 2221713035
    %v1761 = vmul.u32 %v1561, 2221713035
    %v1762 = vmul.u32 %v1562, 2221713035
    %v1763 = vmul.u32 %v1563, 2221713035
    %v1764 = vmul.u32 %v1564, 2221713035
    %v1765 = vmul.u32 %v1565, 2221713035
    %v1766 = vmul.u32 %v1566, 2221713035
    %v1767 = vmul.u32 %v1567, 2221713035
    %v1768 = vmul.u32 %v1568, 2221713035
    %v1769 = vmul.u32 %v1569, 2221713035
    %v1770 = vmul.u32 %v1570, 2221713035
    %v1771 = vmul.u32 %v1571, 2221713035
    %v1772 = vmul.u32 %v1572, 2221713035
    %v1773 = vmul.u32 %v1573, 2221713035
    %v1774 = vmul.u32 %v1574, 2221713035
    %v1775 = vmul.u32 %v1575, 2221713035
    %v1776 = vmul.u32 %v1576, 2221713035
    %v1777 = vmul.u32 %v1577, 2221713035
    %v1778 = vmul.u32 %v1578, 2221713035
    %v1779 = vmul.u32 %v1579, 2221713035
    %v1780 = vmul.u32 %v1580, 2221713035
    %v1781 = vmul.u32 %v1581, 2221713035
    %v1782 = vmul.u32 %v1582, 2221713035
    %v1783 = vmul.u32 %v1583, 2221713035
    %v1784 = vmul.u32 %v1584, 2221713035
    %v1785 = vmul.u32 %v1585, 2221713035
    %v1786 = vmul.u32 %v1586, 2221713035
    %v1787 = vmul.u32 %v1587, 2221713035
    %v1788 = vmul.u32 %v1588, 2221713035
    %v1789 = vmul.u32 %v1589, 2221713035
    %v1790 = vmul.u32 %v1590, 2221713035
    %v1791 = vmul.u32 %v1591, 2221713035
    %v1792 = vmul.u32 %v1592, 2221713035
    %v1793 = vmul.u32 %v1593, 2221713035
    %v1794 = vmul.u32 %v1594, 2221713035
    %v1795 = vmul.u32 %v1595, 2221713035
    %v1796 = vmul.u32 %v1596, 2221713035
    %v1797 = vmul.u32 %v1597, 2221713035
    %v1798 = vmul.u32 %v1598, 2221713035
    %v1799 = vmul.u32 %v1599, 2221713035
    %v1800 = vmul.u32 %v1600, 2221713035
    %v1801 = vmul.u32 %v1601, 2221713035
    %v1802 = vmul.u32 %v1602, 2221713035
    %v1803 = vmul.u32 %v1603, 2221713035
    %v1804 = vmul.u32 %v1604, 2221713035
    %v1805 = vmul.u32 %v1605, 2221713035
    %v1806 = vmul.u32 %v1606, 2221713035
    %v1807 = vmul.u32 %v1607, 2221713035
    %v1808 = vmul.u32 %v1608, 2221713035
    %v1809 = vmul.u32 %v1609, 2221713035
    %v1810 = vmul.u32 %v1610, 2221713035
    %v1811 = vmul.u32 %v1611, 2221713035
    %v1812 = vmul.u32 %v1612, 2221713035
    %v1813 = vmul.u32 %v1613, 2221713035
    %v1814 = vmul.u32 %v1614, 2221713035
    %v1815 = vmul.u32 %v1615, 2221713035
    %v1816 = vmul.u32 %v1616, 2221713035
    %v1817 = vmul.u32 %v1617, 2221713035
    %v1818 = vmul.u32 %v1618, 2221713035
    %v1819 = vmul.u32 %v1619, 2221713035
    %v1820 = vmul.u32 %v1620, 2221713035
    %v1821 = vmul.u32 %v1621, 2221713035
    %v1822 = vmul.u32 %v1622, 2221713035
    %v1823 = vmul.u32 %v1623, 2221713035
    %v1824 = vmul.u32 %v1624, 2221713035
    %v1825 = vmul.u32 %v1625, 2221713035
    %v1826 = vmul.u32 %v1626, 2221713035
    %v1827 = vmul.u32 %v1627, 2221713035
    %v1828 = vmul.u32 %v1628, 2221713035
    %v1829 = vmul.u32 %v1629, 2221713035
    %v1830 = vmul.u32 %v1630, 2221713035
    %v1831 = vmul.u32 %v1631, 2221713035
    %v1832 = vmul.u32 %v1632, 2221713035
    %v1833 = vmul.u32 %v1633, 2221713035
    %v1834 = vmul.u32 %v1634, 2221713035
    %v1835 = vmul.u32 %v1635, 2221713035
    %v1836 = vmul.u32 %v1636, 2221713035
    %v1837 = vmul.u32 %v1637, 2221713035
    %v1838 = vmul.u32 %v1638, 2221713035
    %v1839 = vmul.u32 %v1639, 2221713035
    %v1840 = vmul.u32 %v1640, 2221713035
    %v1841 = vmul.u32 %v1641, 2221713035
    %v1842 = vmul.u32 %v1642, 2221713035
    %v1843 = vmul.u32 %v1643, 2221713035
    %v1844 = vmul.u32 %v1644, 2221713035
    %v1845 = vmul.u32 %v1645, 2221713035
    %v1846 = vmul.u32 %v1646, 2221713035
    %v1847 = vmul.u32 %v1647, 2221713035
    %v1848 = vmul.u32 %v1648, 2221713035
    %v1849 = vmul.u32 %v1649, 2221713035
    %v1850 = vmul.u32 %v1650, 2221713035
    %v1851 = vmul.u32 %v1651, 2221713035
    %v1852 = vmul.u32 %v1652, 2221713035
    %v1853 = vmul.u32 %v1653, 2221713035
    %v1854 = vmul.u32 %v1654, 2221713035
    %v1855 = vmul.u32 %v1655, 2221713035
    %v1856 = vmul.u32 %v1656, 2221713035
    %v1857 = vmul.u32 %v1657, 2221713035
    %v1858 = vmul.u32 %v1658, 2221713035
    %v1859 = vmul.u32 %v1659, 2221713035
    %v1860 = vmul.u32 %v1660, 2221713035
    %v1861 = vmul.u32 %v1661, 2221713035
    %v1862 = vmul.u32 %v1662, 2221713035
    %v1863 = vmul.u32 %v1663, 2221713035
    %v1864 = vmul.u32 %v1664, 2221713035
    %v1865 = vmul.u32 %v1665, 2221713035
    %v1866 = vmul.u32 %v1666, 2221713035
    %v1867 = vmul.u32 %v1667, 2221713035
    %v1868 = vmul.u32 %v1668, 2221713035
    %v1869 = vmul.u32 %v1669, 2221713035
    %v1870 = vmul.u32 %v1670, 2221713035
    %v1871 = vmul.u32 %v1671, 2221713035
    %v1872 = vmul.u32 %v1672, 2221713035
    %v1873 = vmul.u32 %v1673, 2221713035
    %v1874 = vmul.u32 %v1674, 2221713035
    %v1875 = vmul.u32 %v1675, 2221713035
    %v1876 = vmul.u32 %v1676, 2221713035
    %v1877 = vmul.u32 %v1677, 2221713035
    %v1878 = vmul.u32 %v1678, 2221713035
    %v1879 = vmul.u32 %v1679, 2221713035
    %v1880 = vmul.u32 %v1680, 2221713035
    %v1881 = vmul.u32 %v1681, 2221713035
    %v1882 = vmul.u32 %v1682, 2221713035
    %v1883 = vmul.u32 %v1683, 2221713035
    %v1884 = vmul.u32 %v1684, 2221713035
    %v1885 = vmul.u32 %v1685, 2221713035
    %v1886 = vmul.u32 %v1686, 2221713035
    %v1887 = vmul.u32 %v1687, 2221713035
    %v1888 = vmul.u32 %v1688, 2221713035
    %v1889 = vmul.u32 %v1689, 2221713035
    %v1890 = vmul.u32 %v1690, 2221713035
    %v1891 = vmul.u32 %v1691, 2221713035
    %v1892 = vmul.u32 %v1692, 2221713035
    %v1893 = vmul.u32 %v1693, 2221713035
    %v1894 = vmul.u32 %v1694, 2221713035
    %v1895 = vmul.u32 %v1695, 2221713035
    %v1896 = vmul.u32 %v1696, 2221713035
    %v1897 = vmul.u32 %v1697, 2221713035
    %v1898 = vmul.u32 %v1698, 2221713035
    %v1899 = vmul.u32 %v1699, 2221713035
    %v1900 = vmul.u32 %v1700, 2221713035
    %v1901 = vmul.u32 %v1701, 2221713035
    %v1902 = vmul.u32 %v1702, 2221713035
    %v1903 = vmul.u32 %v1703, 2221713035
    %v1904 = vmul.u32 %v1704, 2221713035
    %v1905 = vmul.u32 %v1705, 2221713035
    %v1906 = vmul.u32 %v1706, 2221713035
    %v1907 = vmul.u32 %v1707, 2221713035
    %v1908 = vmul.u32 %v1708, 2221713035
    %v1909 = vmul.u32 %v1709, 2221713035
    %v1910 = vmul.u32 %v1710, 2221713035
    %v1911 = vmul.u32 %v1711, 2221713035
    %v1912 = vmul.u32 %v1712, 2221713035
    %v1913 = vmul.u32 %v1713, 2221713035
    %v1914 = vmul.u32 %v1714, 2221713035
    %v1915 = vmul.u32 %v1715, 2221713035
    %v1916 = vshrl.u32 %v1716, 16
    %v1917 = vshrl.u32 %v1717, 16
    %v1918 = vshrl.u32 %v1718, 16
    %v1919 = vshrl.u32 %v1719, 16
    %v1920 = vshrl.u32 %v1720, 16
    %v1921 = vshrl.u32 %v1721, 16
    %v1922 = vshrl.u32 %v1722, 16
    %v1923 = vshrl.u32 %v1723, 16
    %v1924 = vshrl.u32 %v1724, 16
    %v1925 = vshrl.u32 %v1725, 16
    %v1926 = vshrl.u32 %v1726, 16
    %v1927 = vshrl.u32 %v1727, 16
    %v1928 = vshrl.u32 %v1728, 16
    %v1929 = vshrl.u32 %v1729, 16
    %v1930 = vshrl.u32 %v1730, 16
    %v1931 = vshrl.u32 %v1731, 16
    %v1932 = vshrl.u32 %v1732, 16
    %v1933 = vshrl.u32 %v1733, 16
    %v1934 = vshrl.u32 %v1734, 16
    %v1935 = vshrl.u32 %v1735, 16
    %v1936 = vshrl.u32 %v1736, 16
    %v1937 = vshrl.u32 %v1737, 16
    %v1938 = vshrl.u32 %v1738, 16
    %v1939 = vshrl.u32 %v1739, 16
    %v1940 = vshrl.u32 %v1740, 16
    %v1941 = vshrl.u32 %v1741, 16
    %v1942 = vshrl.u32 %v1742, 16
    %v1943 = vshrl.u32 %v1743, 16
    %v1944 = vshrl.u32 %v1744, 16
    %v1945 = vshrl.u32 %v1745, 16
    %v1946 = vshrl.u32 %v1746, 16
    %v1947 = vshrl.u32 %v1747, 16
    %v1948 = vshrl.u32 %v1748, 16
    %v1949 = vshrl.u32 %v1749, 16
    %v1950 = vshrl.u32 %v1750, 16
    %v1951 = vshrl.u32 %v1751, 16
    %v1952 = vshrl.u32 %v1752, 16
    %v1953 = vshrl.u32 %v1753, 16
    %v1954 = vshrl.u32 %v1754, 16
    %v1955 = vshrl.u32 %v1755, 16
    %v1956 = vshrl.u32 %v1756, 16
    %v1957 = vshrl.u32 %v1757, 16
    %v1958 = vshrl.u32 %v1758, 16
    %v1959 = vshrl.u32 %v1759, 16
    %v1960 = vshrl.u32 %v1760, 16
    %v1961 = vshrl.u32 %v1761, 16
    %v1962 = vshrl.u32 %v1762, 16
    %v1963 = vshrl.u32 %v1763, 16
    %v1964 = vshrl.u32 %v1764, 16
    %v1965 = vshrl.u32 %v1765, 16
    %v1966 = vshrl.u32 %v1766, 16
    %v1967 = vshrl.u32 %v1767, 16
    %v1968 = vshrl.u32 %v1768, 16
    %v1969 = vshrl.u32 %v1769, 16
    %v1970 = vshrl.u32 %v1770, 16
    %v1971 = vshrl.u32 %v1771, 16
    %v1972 = vshrl.u32 %v1772, 16
    %v1973 = vshrl.u32 %v1773, 16
    %v1974 = vshrl.u32 %v1774, 16
    %v1975 = vshrl.u32 %v1775, 16
    %v1976 = vshrl.u32 %v1776, 16
    %v1977 = vshrl.u32 %v1777, 16
    %v1978 = vshrl.u32 %v1778, 16
    %v1979 = vshrl.u32 %v1779, 16
    %v1980 = vshrl.u32 %v1780, 16
    %v1981 = vshrl.u32 %v1781, 16
    %v1982 = vshrl.u32 %v1782, 16
    %v1983 = vshrl.u32 %v1783, 16
    %v1984 = vshrl.u32 %v1784, 16
    %v1985 = vshrl.u32 %v1785, 16
    %v1986 = vshrl.u32 %v1786, 16
    %v1987 = vshrl.u32 %v1787, 16
    %v1988 = vshrl.u32 %v1788, 16
    %v1989 = vshrl.u32 %v1789, 16
    %v1990 = vshrl.u32 %v1790, 16
    %v1991 = vshrl.u32 %v1791, 16
    %v1992 = vshrl.u32 %v1792, 16
    %v1993 = vshrl.u32 %v1793, 16
    %v1994 = vshrl.u32 %v1794, 16
    %v1995 = vshrl.u32 %v1795, 16
    %v1996 = vshrl.u32 %v1796, 16
    %v1997 = vshrl.u32 %v1797, 16
    %v1998 = vshrl.u32 %v1798, 16
    %v1999 = vshrl.u32 %v1799, 16
    %v2000 = vshrl.u32 %v1800, 16
    %v2001 = vshrl.u32 %v1801, 16
    %v2002 = vshrl.u32 %v1802, 16
    %v2003 = vshrl.u32 %v1803, 16
    %v2004 = vshrl.u32 %v1804, 16
    %v2005 = vshrl.u32 %v1805, 16
    %v2006 = vshrl.u32 %v1806, 16
    %v2007 = vshrl.u32 %v1807, 16
    %v2008 = vshrl.u32 %v1808, 16
    %v2009 = vshrl.u32 %v1809, 16
    %v2010 = vshrl.u32 %v1810, 16
    %v2011 = vshrl.u32 %v1811, 16
    %v2012 = vshrl.u32 %v1812, 16
    %v2013 = vshrl.u32 %v1813, 16
    %v2014 = vshrl.u32 %v1814, 16
    %v2015 = vshrl.u32 %v1815, 16
    %v2016 = vshrl.u32 %v1816, 16
    %v2017 = vshrl.u32 %v1817, 16
    %v2018 = vshrl.u32 %v1818, 16
    %v2019 = vshrl.u32 %v1819, 16
    %v2020 = vshrl.u32 %v1820, 16
    %v2021 = vshrl.u32 %v1821, 16
    %v2022 = vshrl.u32 %v1822, 16
    %v2023 = vshrl.u32 %v1823, 16
    %v2024 = vshrl.u32 %v1824, 16
    %v2025 = vshrl.u32 %v1825, 16
    %v2026 = vshrl.u32 %v1826, 16
    %v2027 = vshrl.u32 %v1827, 16
    %v2028 = vshrl.u32 %v1828, 16
    %v2029 = vshrl.u32 %v1829, 16
    %v2030 = vshrl.u32 %v1830, 16
    %v2031 = vshrl.u32 %v1831, 16
    %v2032 = vshrl.u32 %v1832, 16
    %v2033 = vshrl.u32 %v1833, 16
    %v2034 = vshrl.u32 %v1834, 16
    %v2035 = vshrl.u32 %v1835, 16
    %v2036 = vshrl.u32 %v1836, 16
    %v2037 = vshrl.u32 %v1837, 16
    %v2038 = vshrl.u32 %v1838, 16
    %v2039 = vshrl.u32 %v1839, 16
    %v2040 = vshrl.u32 %v1840, 16
    %v2041 = vshrl.u32 %v1841, 16
    %v2042 = vshrl.u32 %v1842, 16
    %v2043 = vshrl.u32 %v1843, 16
    %v2044 = vshrl.u32 %v1844, 16
    %v2045 = vshrl.u32 %v1845, 16
    %v2046 = vshrl.u32 %v1846, 16
    %v2047 = vshrl.u32 %v1847, 16
    %v2048 = vshrl.u32 %v1848, 16
    %v2049 = vshrl.u32 %v1849, 16
    %v2050 = vshrl.u32 %v1850, 16
    %v2051 = vshrl.u32 %v1851, 16
    %v2052 = vshrl.u32 %v1852, 16
    %v2053 = vshrl.u32 %v1853, 16
    %v2054 = vshrl.u32 %v1854, 16
    %v2055 = vshrl.u32 %v1855, 16
    %v2056 = vshrl.u32 %v1856, 16
    %v2057 = vshrl.u32 %v1857, 16
    %v2058 = vshrl.u32 %v1858, 16
    %v2059 = vshrl.u32 %v1859, 16
    %v2060 = vshrl.u32 %v1860, 16
    %v2061 = vshrl.u32 %v1861, 16
    %v2062 = vshrl.u32 %v1862, 16
    %v2063 = vshrl.u32 %v1863, 16
    %v2064 = vshrl.u32 %v1864, 16
    %v2065 = vshrl.u32 %v1865, 16
    %v2066 = vshrl.u32 %v1866, 16
    %v2067 = vshrl.u32 %v1867, 16
    %v2068 = vshrl.u32 %v1868, 16
    %v2069 = vshrl.u32 %v1869, 16
    %v2070 = vshrl.u32 %v1870, 16
    %v2071 = vshrl.u32 %v1871, 16
    %v2072 = vshrl.u32 %v1872, 16
    %v2073 = vshrl.u32 %v1873, 16
    %v2074 = vshrl.u32 %v1874, 16
    %v2075 = vshrl.u32 %v1875, 16
    %v2076 = vshrl.u32 %v1876, 16
    %v2077 = vshrl.u32 %v1877, 16
    %v2078 = vshrl.u32 %v1878, 16
    %v2079 = vshrl.u32 %v1879, 16
    %v2080 = vshrl.u32 %v1880, 16
    %v2081 = vshrl.u32 %v1881, 16
    %v2082 = vshrl.u32 %v1882, 16
    %v2083 = vshrl.u32 %v1883, 16
    %v2084 = vshrl.u32 %v1884, 16
    %v2085 = vshrl.u32 %v1885, 16
    %v2086 = vshrl.u32 %v1886, 16
    %v2087 = vshrl.u32 %v1887, 16
    %v2088 = vshrl.u32 %v1888, 16
    %v2089 = vshrl.u32 %v1889, 16
    %v2090 = vshrl.u32 %v1890, 16
    %v2091 = vshrl.u32 %v1891, 16
    %v2092 = vshrl.u32 %v1892, 16
    %v2093 = vshrl.u32 %v1893, 16
    %v2094 = vshrl.u32 %v1894, 16
    %v2095 = vshrl.u32 %v1895, 16
    %v2096 = vshrl.u32 %v1896, 16
    %v2097 = vshrl.u32 %v1897, 16
    %v2098 = vshrl.u32 %v1898, 16
    %v2099 = vshrl.u32 %v1899, 16
    %v2100 = vshrl.u32 %v1900, 16
    %v2101 = vshrl.u32 %v1901, 16
    %v2102 = vshrl.u32 %v1902, 16
    %v2103 = vshrl.u32 %v1903, 16
    %v2104 = vshrl.u32 %v1904, 16
    %v2105 = vshrl.u32 %v1905, 16
    %v2106 = vshrl.u32 %v1906, 16
    %v2107 = vshrl.u32 %v1907, 16
    %v2108 = vshrl.u32 %v1908, 16
    %v2109 = vshrl.u32 %v1909, 16
    %v2110 = vshrl.u32 %v1910, 16
    %v2111 = vshrl.u32 %v1911, 16
    %v2112 = vshrl.u32 %v1912, 16
    %v2113 = vshrl.u32 %v1913, 16
    %v2114 = vshrl.u32 %v1914, 16
    %v2115 = vshrl.u32 %v1915, 16
    %v2116 = vxor.u32 %v1716, %v1916
    %v2117 = vxor.u32 %v1717, %v1917
    %v2118 = vxor.u32 %v1718, %v1918
    %v2119 = vxor.u32 %v1719, %v1919
    %v2120 = vxor.u32 %v1720, %v1920
    %v2121 = vxor.u32 %v1721, %v1921
    %v2122 = vxor.u32 %v1722, %v1922
    %v2123 = vxor.u32 %v1723, %v1923
    %v2124 = vxor.u32 %v1724, %v1924
    %v2125 = vxor.u32 %v1725, %v1925
    %v2126 = vxor.u32 %v1726, %v1926
    %v2127 = vxor.u32 %v1727, %v1927
    %v2128 = vxor.u32 %v1728, %v1928
    %v2129 = vxor.u32 %v1729, %v1929
    %v2130 = vxor.u32 %v1730, %v1930
    %v2131 = vxor.u32 %v1731, %v1931
    %v2132 = vxor.u32 %v1732, %v1932
    %v2133 = vxor.u32 %v1733, %v1933
    %v2134 = vxor.u32 %v1734, %v1934
    %v2135 = vxor.u32 %v1735, %v1935
    %v2136 = vxor.u32 %v1736, %v1936
    %v2137 = vxor.u32 %v1737, %v1937
    %v2138 = vxor.u32 %v1738, %v1938
    %v2139 = vxor.u32 %v1739, %v1939
    %v2140 = vxor.u32 %v1740, %v1940
    %v2141 = vxor.u32 %v1741, %v1941
    %v2142 = vxor.u32 %v1742, %v1942
    %v2143 = vxor.u32 %v1743, %v1943
    %v2144 = vxor.u32 %v1744, %v1944
    %v2145 = vxor.u32 %v1745, %v1945
    %v2146 = vxor.u32 %v1746, %v1946
    %v2147 = vxor.u32 %v1747, %v1947
    %v2148 = vxor.u32 %v1748, %v1948
    %v2149 = vxor.u32 %v1749, %v1949
    %v2150 = vxor.u32 %v1750, %v1950
    %v2151 = vxor.u32 %v1751, %v1951
    %v2152 = vxor.u32 %v1752, %v1952
    %v2153 = vxor.u32 %v1753, %v1953
    %v2154 = vxor.u32 %v1754, %v1954
    %v2155 = vxor.u32 %v1755, %v1955
    %v2156 = vxor.u32 %v1756, %v1956
    %v2157 = vxor.u32 %v1757, %v1957
    %v2158 = vxor.u32 %v1758, %v1958
    %v2159 = vxor.u32 %v1759, %v1959
    %v2160 = vxor.u32 %v1760, %v1960
    %v2161 = vxor.u32 %v1761, %v1961
    %v2162 = vxor.u32 %v1762, %v1962
    %v2163 = vxor.u32 %v1763, %v1963
    %v2164 = vxor.u32 %v1764, %v1964
    %v2165 = vxor.u32 %v1765, %v1965
    %v2166 = vxor.u32 %v1766, %v1966
    %v2167 = vxor.u32 %v1767, %v1967
    %v2168 = vxor.u32 %v1768, %v1968
    %v2169 = vxor.u32 %v1769, %v1969
    %v2170 = vxor.u32 %v1770, %v1970
    %v2171 = vxor.u32 %v1771, %v1971
    %v2172 = vxor.u32 %v1772, %v1972
    %v2173 = vxor.u32 %v1773, %v1973
    %v2174 = vxor.u32 %v1774, %v1974
    %v2175 = vxor.u32 %v1775, %v1975
    %v2176 = vxor.u32 %v1776, %v1976
    %v2177 = vxor.u32 %v1777, %v1977
    %v2178 = vxor.u32 %v1778, %v1978
    %v2179 = vxor.u32 %v1779, %v1979
    %v2180 = vxor.u32 %v1780, %v1980
    %v2181 = vxor.u32 %v1781, %v1981
    %v2182 = vxor.u32 %v1782, %v1982
    %v2183 = vxor.u32 %v1783, %v1983
    %v2184 = vxor.u32 %v1784, %v1984
    %v2185 = vxor.u32 %v1785, %v1985
    %v2186 = vxor.u32 %v1786, %v1986
    %v2187 = vxor.u32 %v1787, %v1987
    %v2188 = vxor.u32 %v1788, %v1988
    %v2189 = vxor.u32 %v1789, %v1989
    %v2190 = vxor.u32 %v1790, %v1990
    %v2191 = vxor.u32 %v1791, %v1991
    %v2192 = vxor.u32 %v1792, %v1992
    %v2193 = vxor.u32 %v1793, %v1993
    %v2194 = vxor.u32 %v1794, %v1994
    %v2195 = vxor.u32 %v1795, %v1995
    %v2196 = vxor.u32 %v1796, %v1996
    %v2197 = vxor.u32 %v1797, %v1997
    %v2198 = vxor.u32 %v1798, %v1998
    %v2199 = vxor.u32 %v1799, %v1999
    %v2200 = vxor.u32 %v1800, %v2000
    %v2201 = vxor.u32 %v1801, %v2001
    %v2202 = vxor.u32 %v1802, %v2002
    %v2203 = vxor.u32 %v1803, %v2003
    %v2204 = vxor.u32 %v1804, %v2004
    %v2205 = vxor.u32 %v1805, %v2005
    %v2206 = vxor.u32 %v1806, %v2006
    %v2207 = vxor.u32 %v1807, %v2007
    %v2208 = vxor.u32 %v1808, %v2008
    %v2209 = vxor.u32 %v1809, %v2009
    %v2210 = vxor.u32 %v1810, %v2010
    %v2211 = vxor.u32 %v1811, %v2011
    %v2212 = vxor.u32 %v1812, %v2012
    %v2213 = vxor.u32 %v1813, %v2013
    %v2214 = vxor.u32 %v1814, %v2014
    %v2215 = vxor.u32 %v1815, %v2015
    %v2216 = vxor.u32 %v1816, %v2016
    %v2217 = vxor.u32 %v1817, %v2017
    %v2218 = vxor.u32 %v1818, %v2018
    %v2219 = vxor.u32 %v1819, %v2019
    %v2220 = vxor.u32 %v1820, %v2020
    %v2221 = vxor.u32 %v1821, %v2021
    %v2222 = vxor.u32 %v1822, %v2022
    %v2223 = vxor.u32 %v1823, %v2023
    %v2224 = vxor.u32 %v1824, %v2024
    %v2225 = vxor.u32 %v1825, %v2025
    %v2226 = vxor.u32 %v1826, %v2026
    %v2227 = vxor.u32 %v1827, %v2027
    %v2228 = vxor.u32 %v1828, %v2028
    %v2229 = vxor.u32 %v1829, %v2029
    %v2230 = vxor.u32 %v1830, %v2030
    %v2231 = vxor.u32 %v1831, %v2031
    %v2232 = vxor.u32 %v1832, %v2032
    %v2233 = vxor.u32 %v1833, %v2033
    %v2234 = vxor.u32 %v1834, %v2034
    %v2235 = vxor.u32 %v1835, %v2035
    %v2236 = vxor.u32 %v1836, %v2036
    %v2237 = vxor.u32 %v1837, %v2037
    %v2238 = vxor.u32 %v1838, %v2038
    %v2239 = vxor.u32 %v1839, %v2039
    %v2240 = vxor.u32 %v1840, %v2040
    %v2241 = vxor.u32 %v1841, %v2041
    %v2242 = vxor.u32 %v1842, %v2042
    %v2243 = vxor.u32 %v1843, %v2043
    %v2244 = vxor.u32 %v1844, %v2044
    %v2245 = vxor.u32 %v1845, %v2045
    %v2246 = vxor.u32 %v1846, %v2046
    %v2247 = vxor.u32 %v1847, %v2047
    %v2248 = vxor.u32 %v1848, %v2048
    %v2249 = vxor.u32 %v1849, %v2049
    %v2250 = vxor.u32 %v1850, %v2050
    %v2251 = vxor.u32 %v1851, %v2051
    %v2252 = vxor.u32 %v1852, %v2052
    %v2253 = vxor.u32 %v1853, %v2053
    %v2254 = vxor.u32 %v1854, %v2054
    %v2255 = vxor.u32 %v1855, %v2055
    %v2256 = vxor.u32 %v1856, %v2056
    %v2257 = vxor.u32 %v1857, %v2057
    %v2258 = vxor.u32 %v1858, %v2058
    %v2259 = vxor.u32 %v1859, %v2059
    %v2260 = vxor.u32 %v1860, %v2060
    %v2261 = vxor.u32 %v1861, %v2061
    %v2262 = vxor.u32 %v1862, %v2062
    %v2263 = vxor.u32 %v1863, %v2063
    %v2264 = vxor.u32 %v1864, %v2064
    %v2265 = vxor.u32 %v1865, %v2065
    %v2266 = vxor.u32 %v1866, %v2066
    %v2267 = vxor.u32 %v1867, %v2067
    %v2268 = vxor.u32 %v1868, %v2068
    %v2269 = vxor.u32 %v1869, %v2069
    %v2270 = vxor.u32 %v1870, %v2070
    %v2271 = vxor.u32 %v1871, %v2071
    %v2272 = vxor.u32 %v1872, %v2072
    %v2273 = vxor.u32 %v1873, %v2073
    %v2274 = vxor.u32 %v1874, %v2074
    %v2275 = vxor.u32 %v1875, %v2075
    %v2276 = vxor.u32 %v1876, %v2076
    %v2277 = vxor.u32 %v1877, %v2077
    %v2278 = vxor.u32 %v1878, %v2078
    %v2279 = vxor.u32 %v1879, %v2079
    %v2280 = vxor.u32 %v1880, %v2080
    %v2281 = vxor.u32 %v1881, %v2081
    %v2282 = vxor.u32 %v1882, %v2082
    %v2283 = vxor.u32 %v1883, %v2083
    %v2284 = vxor.u32 %v1884, %v2084
    %v2285 = vxor.u32 %v1885, %v2085
    %v2286 = vxor.u32 %v1886, %v2086
    %v2287 = vxor.u32 %v1887, %v2087
    %v2288 = vxor.u32 %v1888, %v2088
    %v2289 = vxor.u32 %v1889, %v2089
    %v2290 = vxor.u32 %v1890, %v2090
    %v2291 = vxor.u32 %v1891, %v2091
    %v2292 = vxor.u32 %v1892, %v2092
    %v2293 = vxor.u32 %v1893, %v2093
    %v2294 = vxor.u32 %v1894, %v2094
    %v2295 = vxor.u32 %v1895, %v2095
    %v2296 = vxor.u32 %v1896, %v2096
    %v2297 = vxor.u32 %v1897, %v2097
    %v2298 = vxor.u32 %v1898, %v2098
    %v2299 = vxor.u32 %v1899, %v2099
    %v2300 = vxor.u32 %v1900, %v2100
    %v2301 = vxor.u32 %v1901, %v2101
    %v2302 = vxor.u32 %v1902, %v2102
    %v2303 = vxor.u32 %v1903, %v2103
    %v2304 = vxor.u32 %v1904, %v2104
    %v2305 = vxor.u32 %v1905, %v2105
    %v2306 = vxor.u32 %v1906, %v2106
    %v2307 = vxor.u32 %v1907, %v2107
    %v2308 = vxor.u32 %v1908, %v2108
    %v2309 = vxor.u32 %v1909, %v2109
    %v2310 = vxor.u32 %v1910, %v2110
    %v2311 = vxor.u32 %v1911, %v2111
    %v2312 = vxor.u32 %v1912, %v2112
    %v2313 = vxor.u32 %v1913, %v2113
    %v2314 = vxor.u32 %v1914, %v2114
    %v2315 = vxor.u32 %v1915, %v2115
    %v2316 = vand.u32 %v2116, 2147483648
    %v2317 = vand.u32 %v2117, 2147483648
    %v2318 = vand.u32 %v2118, 2147483648
    %v2319 = vand.u32 %v2119, 2147483648
    %v2320 = vand.u32 %v2120, 2147483648
    %v2321 = vand.u32 %v2121, 2147483648
    %v2322 = vand.u32 %v2122, 2147483648
    %v2323 = vand.u32 %v2123, 2147483648
    %v2324 = vand.u32 %v2124, 2147483648
    %v2325 = vand.u32 %v2125, 2147483648
    %v2326 = vand.u32 %v2126, 2147483648
    %v2327 = vand.u32 %v2127, 2147483648
    %v2328 = vand.u32 %v2128, 2147483648
    %v2329 = vand.u32 %v2129, 2147483648
    %v2330 = vand.u32 %v2130, 2147483648
    %v2331 = vand.u32 %v2131, 2147483648
    %v2332 = vand.u32 %v2132, 2147483648
    %v2333 = vand.u32 %v2133, 2147483648
    %v2334 = vand.u32 %v2134, 2147483648
    %v2335 = vand.u32 %v2135, 2147483648
    %v2336 = vand.u32 %v2136, 2147483648
    %v2337 = vand.u32 %v2137, 2147483648
    %v2338 = vand.u32 %v2138, 2147483648
    %v2339 = vand.u32 %v2139, 2147483648
    %v2340 = vand.u32 %v2140, 2147483648
    %v2341 = vand.u32 %v2141, 2147483648
    %v2342 = vand.u32 %v2142, 2147483648
    %v2343 = vand.u32 %v2143, 2147483648
    %v2344 = vand.u32 %v2144, 2147483648
    %v2345 = vand.u32 %v2145, 2147483648
    %v2346 = vand.u32 %v2146, 2147483648
    %v2347 = vand.u32 %v2147, 2147483648
    %v2348 = vand.u32 %v2148, 2147483648
    %v2349 = vand.u32 %v2149, 2147483648
    %v2350 = vand.u32 %v2150, 2147483648
    %v2351 = vand.u32 %v2151, 2147483648
    %v2352 = vand.u32 %v2152, 2147483648
    %v2353 = vand.u32 %v2153, 2147483648
    %v2354 = vand.u32 %v2154, 2147483648
    %v2355 = vand.u32 %v2155, 2147483648
    %v2356 = vand.u32 %v2156, 2147483648
    %v2357 = vand.u32 %v2157, 2147483648
    %v2358 = vand.u32 %v2158, 2147483648
    %v2359 = vand.u32 %v2159, 2147483648
    %v2360 = vand.u32 %v2160, 2147483648
    %v2361 = vand.u32 %v2161, 2147483648
    %v2362 = vand.u32 %v2162, 2147483648
    %v2363 = vand.u32 %v2163, 2147483648
    %v2364 = vand.u32 %v2164, 2147483648
    %v2365 = vand.u32 %v2165, 2147483648
    %v2366 = vand.u32 %v2166, 2147483648
    %v2367 = vand.u32 %v2167, 2147483648
    %v2368 = vand.u32 %v2168, 2147483648
    %v2369 = vand.u32 %v2169, 2147483648
    %v2370 = vand.u32 %v2170, 2147483648
    %v2371 = vand.u32 %v2171, 2147483648
    %v2372 = vand.u32 %v2172, 2147483648
    %v2373 = vand.u32 %v2173, 2147483648
    %v2374 = vand.u32 %v2174, 2147483648
    %v2375 = vand.u32 %v2175, 2147483648
    %v2376 = vand.u32 %v2176, 2147483648
    %v2377 = vand.u32 %v2177, 2147483648
    %v2378 = vand.u32 %v2178, 2147483648
    %v2379 = vand.u32 %v2179, 2147483648
    %v2380 = vand.u32 %v2180, 2147483648
    %v2381 = vand.u32 %v2181, 2147483648
    %v2382 = vand.u32 %v2182, 2147483648
    %v2383 = vand.u32 %v2183, 2147483648
    %v2384 = vand.u32 %v2184, 2147483648
    %v2385 = vand.u32 %v2185, 2147483648
    %v2386 = vand.u32 %v2186, 2147483648
    %v2387 = vand.u32 %v2187, 2147483648
    %v2388 = vand.u32 %v2188, 2147483648
    %v2389 = vand.u32 %v2189, 2147483648
    %v2390 = vand.u32 %v2190, 2147483648
    %v2391 = vand.u32 %v2191, 2147483648
    %v2392 = vand.u32 %v2192, 2147483648
    %v2393 = vand.u32 %v2193, 2147483648
    %v2394 = vand.u32 %v2194, 2147483648
    %v2395 = vand.u32 %v2195, 2147483648
    %v2396 = vand.u32 %v2196, 2147483648
    %v2397 = vand.u32 %v2197, 2147483648
    %v2398 = vand.u32 %v2198, 2147483648
    %v2399 = vand.u32 %v2199, 2147483648
    %v2400 = vand.u32 %v2200, 2147483648
    %v2401 = vand.u32 %v2201, 2147483648
    %v2402 = vand.u32 %v2202, 2147483648
    %v2403 = vand.u32 %v2203, 2147483648
    %v2404 = vand.u32 %v2204, 2147483648
    %v2405 = vand.u32 %v2205, 2147483648
    %v2406 = vand.u32 %v2206, 2147483648
    %v2407 = vand.u32 %v2207, 2147483648
    %v2408 = vand.u32 %v2208, 2147483648
    %v2409 = vand.u32 %v2209, 2147483648
    %v2410 = vand.u32 %v2210, 2147483648
    %v2411 = vand.u32 %v2211, 2147483648
    %v2412 = vand.u32 %v2212, 2147483648
    %v2413 = vand.u32 %v2213, 2147483648
    %v2414 = vand.u32 %v2214, 2147483648
    %v2415 = vand.u32 %v2215, 2147483648
    %v2416 = vand.u32 %v2216, 2147483648
    %v2417 = vand.u32 %v2217, 2147483648
    %v2418 = vand.u32 %v2218, 2147483648
    %v2419 = vand.u32 %v2219, 2147483648
    %v2420 = vand.u32 %v2220, 2147483648
    %v2421 = vand.u32 %v2221, 2147483648
    %v2422 = vand.u32 %v2222, 2147483648
    %v2423 = vand.u32 %v2223, 2147483648
    %v2424 = vand.u32 %v2224, 2147483648
    %v2425 = vand.u32 %v2225, 2147483648
    %v2426 = vand.u32 %v2226, 2147483648
    %v2427 = vand.u32 %v2227, 2147483648
    %v2428 = vand.u32 %v2228, 2147483648
    %v2429 = vand.u32 %v2229, 2147483648
    %v2430 = vand.u32 %v2230, 2147483648
    %v2431 = vand.u32 %v2231, 2147483648
    %v2432 = vand.u32 %v2232, 2147483648
    %v2433 = vand.u32 %v2233, 2147483648
    %v2434 = vand.u32 %v2234, 2147483648
    %v2435 = vand.u32 %v2235, 2147483648
    %v2436 = vand.u32 %v2236, 2147483648
    %v2437 = vand.u32 %v2237, 2147483648
    %v2438 = vand.u32 %v2238, 2147483648
    %v2439 = vand.u32 %v2239, 2147483648
    %v2440 = vand.u32 %v2240, 2147483648
    %v2441 = vand.u32 %v2241, 2147483648
    %v2442 = vand.u32 %v2242, 2147483648
    %v2443 = vand.u32 %v2243, 2147483648
    %v2444 = vand.u32 %v2244, 2147483648
    %v2445 = vand.u32 %v2245, 2147483648
    %v2446 = vand.u32 %v2246, 2147483648
    %v2447 = vand.u32 %v2247, 2147483648
    %v2448 = vand.u32 %v2248, 2147483648
    %v2449 = vand.u32 %v2249, 2147483648
    %v2450 = vand.u32 %v2250, 2147483648
    %v2451 = vand.u32 %v2251, 2147483648
    %v2452 = vand.u32 %v2252, 2147483648
    %v2453 = vand.u32 %v2253, 2147483648
    %v2454 = vand.u32 %v2254, 2147483648
    %v2455 = vand.u32 %v2255, 2147483648
    %v2456 = vand.u32 %v2256, 2147483648
    %v2457 = vand.u32 %v2257, 2147483648
    %v2458 = vand.u32 %v2258, 2147483648
    %v2459 = vand.u32 %v2259, 2147483648
    %v2460 = vand.u32 %v2260, 2147483648
    %v2461 = vand.u32 %v2261, 2147483648
    %v2462 = vand.u32 %v2262, 2147483648
    %v2463 = vand.u32 %v2263, 2147483648
    %v2464 = vand.u32 %v2264, 2147483648
    %v2465 = vand.u32 %v2265, 2147483648
    %v2466 = vand.u32 %v2266, 2147483648
    %v2467 = vand.u32 %v2267, 2147483648
    %v2468 = vand.u32 %v2268, 2147483648
    %v2469 = vand.u32 %v2269, 2147483648
    %v2470 = vand.u32 %v2270, 2147483648
    %v2471 = vand.u32 %v2271, 2147483648
    %v2472 = vand.u32 %v2272, 2147483648
    %v2473 = vand.u32 %v2273, 2147483648
    %v2474 = vand.u32 %v2274, 2147483648
    %v2475 = vand.u32 %v2275, 2147483648
    %v2476 = vand.u32 %v2276, 2147483648
    %v2477 = vand.u32 %v2277, 2147483648
    %v2478 = vand.u32 %v2278, 2147483648
    %v2479 = vand.u32 %v2279, 2147483648
    %v2480 = vand.u32 %v2280, 2147483648
    %v2481 = vand.u32 %v2281, 2147483648
    %v2482 = vand.u32 %v2282, 2147483648
    %v2483 = vand.u32 %v2283, 2147483648
    %v2484 = vand.u32 %v2284, 2147483648
    %v2485 = vand.u32 %v2285, 2147483648
    %v2486 = vand.u32 %v2286, 2147483648
    %v2487 = vand.u32 %v2287, 2147483648
    %v2488 = vand.u32 %v2288, 2147483648
    %v2489 = vand.u32 %v2289, 2147483648
    %v2490 = vand.u32 %v2290, 2147483648
    %v2491 = vand.u32 %v2291, 2147483648
    %v2492 = vand.u32 %v2292, 2147483648
    %v2493 = vand.u32 %v2293, 2147483648
    %v2494 = vand.u32 %v2294, 2147483648
    %v2495 = vand.u32 %v2295, 2147483648
    %v2496 = vand.u32 %v2296, 2147483648
    %v2497 = vand.u32 %v2297, 2147483648
    %v2498 = vand.u32 %v2298, 2147483648
    %v2499 = vand.u32 %v2299, 2147483648
    %v2500 = vand.u32 %v2300, 2147483648
    %v2501 = vand.u32 %v2301, 2147483648
    %v2502 = vand.u32 %v2302, 2147483648
    %v2503 = vand.u32 %v2303, 2147483648
    %v2504 = vand.u32 %v2304, 2147483648
    %v2505 = vand.u32 %v2305, 2147483648
    %v2506 = vand.u32 %v2306, 2147483648
    %v2507 = vand.u32 %v2307, 2147483648
    %v2508 = vand.u32 %v2308, 2147483648
    %v2509 = vand.u32 %v2309, 2147483648
    %v2510 = vand.u32 %v2310, 2147483648
    %v2511 = vand.u32 %v2311, 2147483648
    %v2512 = vand.u32 %v2312, 2147483648
    %v2513 = vand.u32 %v2313, 2147483648
    %v2514 = vand.u32 %v2314, 2147483648
    %v2515 = vand.u32 %v2315, 2147483648
    %vm2516 = vcmp.eq.s32.totalorder %v2316, 0
    %vm2517 = vcmp.eq.s32.totalorder %v2317, 0
    %vm2518 = vcmp.eq.s32.totalorder %v2318, 0
    %vm2519 = vcmp.eq.s32.totalorder %v2319, 0
    %vm2520 = vcmp.eq.s32.totalorder %v2320, 0
    %vm2521 = vcmp.eq.s32.totalorder %v2321, 0
    %vm2522 = vcmp.eq.s32.totalorder %v2322, 0
    %vm2523 = vcmp.eq.s32.totalorder %v2323, 0
    %vm2524 = vcmp.eq.s32.totalorder %v2324, 0
    %vm2525 = vcmp.eq.s32.totalorder %v2325, 0
    %vm2526 = vcmp.eq.s32.totalorder %v2326, 0
    %vm2527 = vcmp.eq.s32.totalorder %v2327, 0
    %vm2528 = vcmp.eq.s32.totalorder %v2328, 0
    %vm2529 = vcmp.eq.s32.totalorder %v2329, 0
    %vm2530 = vcmp.eq.s32.totalorder %v2330, 0
    %vm2531 = vcmp.eq.s32.totalorder %v2331, 0
    %vm2532 = vcmp.eq.s32.totalorder %v2332, 0
    %vm2533 = vcmp.eq.s32.totalorder %v2333, 0
    %vm2534 = vcmp.eq.s32.totalorder %v2334, 0
    %vm2535 = vcmp.eq.s32.totalorder %v2335, 0
    %vm2536 = vcmp.eq.s32.totalorder %v2336, 0
    %vm2537 = vcmp.eq.s32.totalorder %v2337, 0
    %vm2538 = vcmp.eq.s32.totalorder %v2338, 0
    %vm2539 = vcmp.eq.s32.totalorder %v2339, 0
    %vm2540 = vcmp.eq.s32.totalorder %v2340, 0
    %vm2541 = vcmp.eq.s32.totalorder %v2341, 0
    %vm2542 = vcmp.eq.s32.totalorder %v2342, 0
    %vm2543 = vcmp.eq.s32.totalorder %v2343, 0
    %vm2544 = vcmp.eq.s32.totalorder %v2344, 0
    %vm2545 = vcmp.eq.s32.totalorder %v2345, 0
    %vm2546 = vcmp.eq.s32.totalorder %v2346, 0
    %vm2547 = vcmp.eq.s32.totalorder %v2347, 0
    %vm2548 = vcmp.eq.s32.totalorder %v2348, 0
    %vm2549 = vcmp.eq.s32.totalorder %v2349, 0
    %vm2550 = vcmp.eq.s32.totalorder %v2350, 0
    %vm2551 = vcmp.eq.s32.totalorder %v2351, 0
    %vm2552 = vcmp.eq.s32.totalorder %v2352, 0
    %vm2553 = vcmp.eq.s32.totalorder %v2353, 0
    %vm2554 = vcmp.eq.s32.totalorder %v2354, 0
    %vm2555 = vcmp.eq.s32.totalorder %v2355, 0
    %vm2556 = vcmp.eq.s32.totalorder %v2356, 0
    %vm2557 = vcmp.eq.s32.totalorder %v2357, 0
    %vm2558 = vcmp.eq.s32.totalorder %v2358, 0
    %vm2559 = vcmp.eq.s32.totalorder %v2359, 0
    %vm2560 = vcmp.eq.s32.totalorder %v2360, 0
    %vm2561 = vcmp.eq.s32.totalorder %v2361, 0
    %vm2562 = vcmp.eq.s32.totalorder %v2362, 0
    %vm2563 = vcmp.eq.s32.totalorder %v2363, 0
    %vm2564 = vcmp.eq.s32.totalorder %v2364, 0
    %vm2565 = vcmp.eq.s32.totalorder %v2365, 0
    %vm2566 = vcmp.eq.s32.totalorder %v2366, 0
    %vm2567 = vcmp.eq.s32.totalorder %v2367, 0
    %vm2568 = vcmp.eq.s32.totalorder %v2368, 0
    %vm2569 = vcmp.eq.s32.totalorder %v2369, 0
    %vm2570 = vcmp.eq.s32.totalorder %v2370, 0
    %vm2571 = vcmp.eq.s32.totalorder %v2371, 0
    %vm2572 = vcmp.eq.s32.totalorder %v2372, 0
    %vm2573 = vcmp.eq.s32.totalorder %v2373, 0
    %vm2574 = vcmp.eq.s32.totalorder %v2374, 0
    %vm2575 = vcmp.eq.s32.totalorder %v2375, 0
    %vm2576 = vcmp.eq.s32.totalorder %v2376, 0
    %vm2577 = vcmp.eq.s32.totalorder %v2377, 0
    %vm2578 = vcmp.eq.s32.totalorder %v2378, 0
    %vm2579 = vcmp.eq.s32.totalorder %v2379, 0
    %vm2580 = vcmp.eq.s32.totalorder %v2380, 0
    %vm2581 = vcmp.eq.s32.totalorder %v2381, 0
    %vm2582 = vcmp.eq.s32.totalorder %v2382, 0
    %vm2583 = vcmp.eq.s32.totalorder %v2383, 0
    %vm2584 = vcmp.eq.s32.totalorder %v2384, 0
    %vm2585 = vcmp.eq.s32.totalorder %v2385, 0
    %vm2586 = vcmp.eq.s32.totalorder %v2386, 0
    %vm2587 = vcmp.eq.s32.totalorder %v2387, 0
    %vm2588 = vcmp.eq.s32.totalorder %v2388, 0
    %vm2589 = vcmp.eq.s32.totalorder %v2389, 0
    %vm2590 = vcmp.eq.s32.totalorder %v2390, 0
    %vm2591 = vcmp.eq.s32.totalorder %v2391, 0
    %vm2592 = vcmp.eq.s32.totalorder %v2392, 0
    %vm2593 = vcmp.eq.s32.totalorder %v2393, 0
    %vm2594 = vcmp.eq.s32.totalorder %v2394, 0
    %vm2595 = vcmp.eq.s32.totalorder %v2395, 0
    %vm2596 = vcmp.eq.s32.totalorder %v2396, 0
    %vm2597 = vcmp.eq.s32.totalorder %v2397, 0
    %vm2598 = vcmp.eq.s32.totalorder %v2398, 0
    %vm2599 = vcmp.eq.s32.totalorder %v2399, 0
    %vm2600 = vcmp.eq.s32.totalorder %v2400, 0
    %vm2601 = vcmp.eq.s32.totalorder %v2401, 0
    %vm2602 = vcmp.eq.s32.totalorder %v2402, 0
    %vm2603 = vcmp.eq.s32.totalorder %v2403, 0
    %vm2604 = vcmp.eq.s32.totalorder %v2404, 0
    %vm2605 = vcmp.eq.s32.totalorder %v2405, 0
    %vm2606 = vcmp.eq.s32.totalorder %v2406, 0
    %vm2607 = vcmp.eq.s32.totalorder %v2407, 0
    %vm2608 = vcmp.eq.s32.totalorder %v2408, 0
    %vm2609 = vcmp.eq.s32.totalorder %v2409, 0
    %vm2610 = vcmp.eq.s32.totalorder %v2410, 0
    %vm2611 = vcmp.eq.s32.totalorder %v2411, 0
    %vm2612 = vcmp.eq.s32.totalorder %v2412, 0
    %vm2613 = vcmp.eq.s32.totalorder %v2413, 0
    %vm2614 = vcmp.eq.s32.totalorder %v2414, 0
    %vm2615 = vcmp.eq.s32.totalorder %v2415, 0
    %vm2616 = vcmp.eq.s32.totalorder %v2416, 0
    %vm2617 = vcmp.eq.s32.totalorder %v2417, 0
    %vm2618 = vcmp.eq.s32.totalorder %v2418, 0
    %vm2619 = vcmp.eq.s32.totalorder %v2419, 0
    %vm2620 = vcmp.eq.s32.totalorder %v2420, 0
    %vm2621 = vcmp.eq.s32.totalorder %v2421, 0
    %vm2622 = vcmp.eq.s32.totalorder %v2422, 0
    %vm2623 = vcmp.eq.s32.totalorder %v2423, 0
    %vm2624 = vcmp.eq.s32.totalorder %v2424, 0
    %vm2625 = vcmp.eq.s32.totalorder %v2425, 0
    %vm2626 = vcmp.eq.s32.totalorder %v2426, 0
    %vm2627 = vcmp.eq.s32.totalorder %v2427, 0
    %vm2628 = vcmp.eq.s32.totalorder %v2428, 0
    %vm2629 = vcmp.eq.s32.totalorder %v2429, 0
    %vm2630 = vcmp.eq.s32.totalorder %v2430, 0
    %vm2631 = vcmp.eq.s32.totalorder %v2431, 0
    %vm2632 = vcmp.eq.s32.totalorder %v2432, 0
    %vm2633 = vcmp.eq.s32.totalorder %v2433, 0
    %vm2634 = vcmp.eq.s32.totalorder %v2434, 0
    %vm2635 = vcmp.eq.s32.totalorder %v2435, 0
    %vm2636 = vcmp.eq.s32.totalorder %v2436, 0
    %vm2637 = vcmp.eq.s32.totalorder %v2437, 0
    %vm2638 = vcmp.eq.s32.totalorder %v2438, 0
    %vm2639 = vcmp.eq.s32.totalorder %v2439, 0
    %vm2640 = vcmp.eq.s32.totalorder %v2440, 0
    %vm2641 = vcmp.eq.s32.totalorder %v2441, 0
    %vm2642 = vcmp.eq.s32.totalorder %v2442, 0
    %vm2643 = vcmp.eq.s32.totalorder %v2443, 0
    %vm2644 = vcmp.eq.s32.totalorder %v2444, 0
    %vm2645 = vcmp.eq.s32.totalorder %v2445, 0
    %vm2646 = vcmp.eq.s32.totalorder %v2446, 0
    %vm2647 = vcmp.eq.s32.totalorder %v2447, 0
    %vm2648 = vcmp.eq.s32.totalorder %v2448, 0
    %vm2649 = vcmp.eq.s32.totalorder %v2449, 0
    %vm2650 = vcmp.eq.s32.totalorder %v2450, 0
    %vm2651 = vcmp.eq.s32.totalorder %v2451, 0
    %vm2652 = vcmp.eq.s32.totalorder %v2452, 0
    %vm2653 = vcmp.eq.s32.totalorder %v2453, 0
    %vm2654 = vcmp.eq.s32.totalorder %v2454, 0
    %vm2655 = vcmp.eq.s32.totalorder %v2455, 0
    %vm2656 = vcmp.eq.s32.totalorder %v2456, 0
    %vm2657 = vcmp.eq.s32.totalorder %v2457, 0
    %vm2658 = vcmp.eq.s32.totalorder %v2458, 0
    %vm2659 = vcmp.eq.s32.totalorder %v2459, 0
    %vm2660 = vcmp.eq.s32.totalorder %v2460, 0
    %vm2661 = vcmp.eq.s32.totalorder %v2461, 0
    %vm2662 = vcmp.eq.s32.totalorder %v2462, 0
    %vm2663 = vcmp.eq.s32.totalorder %v2463, 0
    %vm2664 = vcmp.eq.s32.totalorder %v2464, 0
    %vm2665 = vcmp.eq.s32.totalorder %v2465, 0
    %vm2666 = vcmp.eq.s32.totalorder %v2466, 0
    %vm2667 = vcmp.eq.s32.totalorder %v2467, 0
    %vm2668 = vcmp.eq.s32.totalorder %v2468, 0
    %vm2669 = vcmp.eq.s32.totalorder %v2469, 0
    %vm2670 = vcmp.eq.s32.totalorder %v2470, 0
    %vm2671 = vcmp.eq.s32.totalorder %v2471, 0
    %vm2672 = vcmp.eq.s32.totalorder %v2472, 0
    %vm2673 = vcmp.eq.s32.totalorder %v2473, 0
    %vm2674 = vcmp.eq.s32.totalorder %v2474, 0
    %vm2675 = vcmp.eq.s32.totalorder %v2475, 0
    %vm2676 = vcmp.eq.s32.totalorder %v2476, 0
    %vm2677 = vcmp.eq.s32.totalorder %v2477, 0
    %vm2678 = vcmp.eq.s32.totalorder %v2478, 0
    %vm2679 = vcmp.eq.s32.totalorder %v2479, 0
    %vm2680 = vcmp.eq.s32.totalorder %v2480, 0
    %vm2681 = vcmp.eq.s32.totalorder %v2481, 0
    %vm2682 = vcmp.eq.s32.totalorder %v2482, 0
    %vm2683 = vcmp.eq.s32.totalorder %v2483, 0
    %vm2684 = vcmp.eq.s32.totalorder %v2484, 0
    %vm2685 = vcmp.eq.s32.totalorder %v2485, 0
    %vm2686 = vcmp.eq.s32.totalorder %v2486, 0
    %vm2687 = vcmp.eq.s32.totalorder %v2487, 0
    %vm2688 = vcmp.eq.s32.totalorder %v2488, 0
    %vm2689 = vcmp.eq.s32.totalorder %v2489, 0
    %vm2690 = vcmp.eq.s32.totalorder %v2490, 0
    %vm2691 = vcmp.eq.s32.totalorder %v2491, 0
    %vm2692 = vcmp.eq.s32.totalorder %v2492, 0
    %vm2693 = vcmp.eq.s32.totalorder %v2493, 0
    %vm2694 = vcmp.eq.s32.totalorder %v2494, 0
    %vm2695 = vcmp.eq.s32.totalorder %v2495, 0
    %vm2696 = vcmp.eq.s32.totalorder %v2496, 0
    %vm2697 = vcmp.eq.s32.totalorder %v2497, 0
    %vm2698 = vcmp.eq.s32.totalorder %v2498, 0
    %vm2699 = vcmp.eq.s32.totalorder %v2499, 0
    %vm2700 = vcmp.eq.s32.totalorder %v2500, 0
    %vm2701 = vcmp.eq.s32.totalorder %v2501, 0
    %vm2702 = vcmp.eq.s32.totalorder %v2502, 0
    %vm2703 = vcmp.eq.s32.totalorder %v2503, 0
    %vm2704 = vcmp.eq.s32.totalorder %v2504, 0
    %vm2705 = vcmp.eq.s32.totalorder %v2505, 0
    %vm2706 = vcmp.eq.s32.totalorder %v2506, 0
    %vm2707 = vcmp.eq.s32.totalorder %v2507, 0
    %vm2708 = vcmp.eq.s32.totalorder %v2508, 0
    %vm2709 = vcmp.eq.s32.totalorder %v2509, 0
    %vm2710 = vcmp.eq.s32.totalorder %v2510, 0
    %vm2711 = vcmp.eq.s32.totalorder %v2511, 0
    %vm2712 = vcmp.eq.s32.totalorder %v2512, 0
    %vm2713 = vcmp.eq.s32.totalorder %v2513, 0
    %vm2714 = vcmp.eq.s32.totalorder %v2514, 0
    %vm2715 = vcmp.eq.s32.totalorder %v2515, 0
    %vm2716 = vcmp.gt.f32.partialorder %v27, 0.0
    %vm2717 = vcmp.gt.f32.partialorder %v28, 0.0
    %vm2718 = vcmp.gt.f32.partialorder %v29, 0.0
    %vm2719 = vcmp.gt.f32.partialorder %v30, 0.0
    %vm2720 = vcmp.gt.f32.partialorder %v31, 0.0
    %vm2721 = vcmp.gt.f32.partialorder %v32, 0.0
    %vm2722 = vcmp.gt.f32.partialorder %v33, 0.0
    %vm2723 = vcmp.gt.f32.partialorder %v34, 0.0
    %vm2724 = vcmp.gt.f32.partialorder %v35, 0.0
    %vm2725 = vcmp.gt.f32.partialorder %v36, 0.0
    %vm2726 = vcmp.gt.f32.partialorder %v37, 0.0
    %vm2727 = vcmp.gt.f32.partialorder %v38, 0.0
    %vm2728 = vcmp.gt.f32.partialorder %v39, 0.0
    %vm2729 = vcmp.gt.f32.partialorder %v40, 0.0
    %vm2730 = vcmp.gt.f32.partialorder %v41, 0.0
    %vm2731 = vcmp.gt.f32.partialorder %v42, 0.0
    %vm2732 = vcmp.gt.f32.partialorder %v43, 0.0
    %vm2733 = vcmp.gt.f32.partialorder %v44, 0.0
    %vm2734 = vcmp.gt.f32.partialorder %v45, 0.0
    %vm2735 = vcmp.gt.f32.partialorder %v46, 0.0
    %vm2736 = vcmp.gt.f32.partialorder %v47, 0.0
    %vm2737 = vcmp.gt.f32.partialorder %v48, 0.0
    %vm2738 = vcmp.gt.f32.partialorder %v49, 0.0
    %vm2739 = vcmp.gt.f32.partialorder %v50, 0.0
    %vm2740 = vcmp.gt.f32.partialorder %v51, 0.0
    %vm2741 = vcmp.gt.f32.partialorder %v52, 0.0
    %vm2742 = vcmp.gt.f32.partialorder %v53, 0.0
    %vm2743 = vcmp.gt.f32.partialorder %v54, 0.0
    %vm2744 = vcmp.gt.f32.partialorder %v55, 0.0
    %vm2745 = vcmp.gt.f32.partialorder %v56, 0.0
    %vm2746 = vcmp.gt.f32.partialorder %v57, 0.0
    %vm2747 = vcmp.gt.f32.partialorder %v58, 0.0
    %vm2748 = vcmp.gt.f32.partialorder %v59, 0.0
    %vm2749 = vcmp.gt.f32.partialorder %v60, 0.0
    %vm2750 = vcmp.gt.f32.partialorder %v61, 0.0
    %vm2751 = vcmp.gt.f32.partialorder %v62, 0.0
    %vm2752 = vcmp.gt.f32.partialorder %v63, 0.0
    %vm2753 = vcmp.gt.f32.partialorder %v64, 0.0
    %vm2754 = vcmp.gt.f32.partialorder %v65, 0.0
    %vm2755 = vcmp.gt.f32.partialorder %v66, 0.0
    %vm2756 = vcmp.gt.f32.partialorder %v67, 0.0
    %vm2757 = vcmp.gt.f32.partialorder %v68, 0.0
    %vm2758 = vcmp.gt.f32.partialorder %v69, 0.0
    %vm2759 = vcmp.gt.f32.partialorder %v70, 0.0
    %vm2760 = vcmp.gt.f32.partialorder %v71, 0.0
    %vm2761 = vcmp.gt.f32.partialorder %v72, 0.0
    %vm2762 = vcmp.gt.f32.partialorder %v73, 0.0
    %vm2763 = vcmp.gt.f32.partialorder %v74, 0.0
    %vm2764 = vcmp.gt.f32.partialorder %v75, 0.0
    %vm2765 = vcmp.gt.f32.partialorder %v76, 0.0
    %vm2766 = vcmp.gt.f32.partialorder %v77, 0.0
    %vm2767 = vcmp.gt.f32.partialorder %v78, 0.0
    %vm2768 = vcmp.gt.f32.partialorder %v79, 0.0
    %vm2769 = vcmp.gt.f32.partialorder %v80, 0.0
    %vm2770 = vcmp.gt.f32.partialorder %v81, 0.0
    %vm2771 = vcmp.gt.f32.partialorder %v82, 0.0
    %vm2772 = vcmp.gt.f32.partialorder %v83, 0.0
    %vm2773 = vcmp.gt.f32.partialorder %v84, 0.0
    %vm2774 = vcmp.gt.f32.partialorder %v85, 0.0
    %vm2775 = vcmp.gt.f32.partialorder %v86, 0.0
    %vm2776 = vcmp.gt.f32.partialorder %v87, 0.0
    %vm2777 = vcmp.gt.f32.partialorder %v88, 0.0
    %vm2778 = vcmp.gt.f32.partialorder %v89, 0.0
    %vm2779 = vcmp.gt.f32.partialorder %v90, 0.0
    %vm2780 = vcmp.gt.f32.partialorder %v91, 0.0
    %vm2781 = vcmp.gt.f32.partialorder %v92, 0.0
    %vm2782 = vcmp.gt.f32.partialorder %v93, 0.0
    %vm2783 = vcmp.gt.f32.partialorder %v94, 0.0
    %vm2784 = vcmp.gt.f32.partialorder %v95, 0.0
    %vm2785 = vcmp.gt.f32.partialorder %v96, 0.0
    %vm2786 = vcmp.gt.f32.partialorder %v97, 0.0
    %vm2787 = vcmp.gt.f32.partialorder %v98, 0.0
    %vm2788 = vcmp.gt.f32.partialorder %v99, 0.0
    %vm2789 = vcmp.gt.f32.partialorder %v100, 0.0
    %vm2790 = vcmp.gt.f32.partialorder %v101, 0.0
    %vm2791 = vcmp.gt.f32.partialorder %v102, 0.0
    %vm2792 = vcmp.gt.f32.partialorder %v103, 0.0
    %vm2793 = vcmp.gt.f32.partialorder %v104, 0.0
    %vm2794 = vcmp.gt.f32.partialorder %v105, 0.0
    %vm2795 = vcmp.gt.f32.partialorder %v106, 0.0
    %vm2796 = vcmp.gt.f32.partialorder %v107, 0.0
    %vm2797 = vcmp.gt.f32.partialorder %v108, 0.0
    %vm2798 = vcmp.gt.f32.partialorder %v109, 0.0
    %vm2799 = vcmp.gt.f32.partialorder %v110, 0.0
    %vm2800 = vcmp.gt.f32.partialorder %v111, 0.0
    %vm2801 = vcmp.gt.f32.partialorder %v112, 0.0
    %vm2802 = vcmp.gt.f32.partialorder %v113, 0.0
    %vm2803 = vcmp.gt.f32.partialorder %v114, 0.0
    %vm2804 = vcmp.gt.f32.partialorder %v115, 0.0
    %vm2805 = vcmp.gt.f32.partialorder %v116, 0.0
    %vm2806 = vcmp.gt.f32.partialorder %v117, 0.0
    %vm2807 = vcmp.gt.f32.partialorder %v118, 0.0
    %vm2808 = vcmp.gt.f32.partialorder %v119, 0.0
    %vm2809 = vcmp.gt.f32.partialorder %v120, 0.0
    %vm2810 = vcmp.gt.f32.partialorder %v121, 0.0
    %vm2811 = vcmp.gt.f32.partialorder %v122, 0.0
    %vm2812 = vcmp.gt.f32.partialorder %v123, 0.0
    %vm2813 = vcmp.gt.f32.partialorder %v124, 0.0
    %vm2814 = vcmp.gt.f32.partialorder %v125, 0.0
    %vm2815 = vcmp.gt.f32.partialorder %v126, 0.0
    %vm2816 = vcmp.gt.f32.partialorder %v127, 0.0
    %vm2817 = vcmp.gt.f32.partialorder %v128, 0.0
    %vm2818 = vcmp.gt.f32.partialorder %v129, 0.0
    %vm2819 = vcmp.gt.f32.partialorder %v130, 0.0
    %vm2820 = vcmp.gt.f32.partialorder %v131, 0.0
    %vm2821 = vcmp.gt.f32.partialorder %v132, 0.0
    %vm2822 = vcmp.gt.f32.partialorder %v133, 0.0
    %vm2823 = vcmp.gt.f32.partialorder %v134, 0.0
    %vm2824 = vcmp.gt.f32.partialorder %v135, 0.0
    %vm2825 = vcmp.gt.f32.partialorder %v136, 0.0
    %vm2826 = vcmp.gt.f32.partialorder %v137, 0.0
    %vm2827 = vcmp.gt.f32.partialorder %v138, 0.0
    %vm2828 = vcmp.gt.f32.partialorder %v139, 0.0
    %vm2829 = vcmp.gt.f32.partialorder %v140, 0.0
    %vm2830 = vcmp.gt.f32.partialorder %v141, 0.0
    %vm2831 = vcmp.gt.f32.partialorder %v142, 0.0
    %vm2832 = vcmp.gt.f32.partialorder %v143, 0.0
    %vm2833 = vcmp.gt.f32.partialorder %v144, 0.0
    %vm2834 = vcmp.gt.f32.partialorder %v145, 0.0
    %vm2835 = vcmp.gt.f32.partialorder %v146, 0.0
    %vm2836 = vcmp.gt.f32.partialorder %v147, 0.0
    %vm2837 = vcmp.gt.f32.partialorder %v148, 0.0
    %vm2838 = vcmp.gt.f32.partialorder %v149, 0.0
    %vm2839 = vcmp.gt.f32.partialorder %v150, 0.0
    %vm2840 = vcmp.gt.f32.partialorder %v151, 0.0
    %vm2841 = vcmp.gt.f32.partialorder %v152, 0.0
    %vm2842 = vcmp.gt.f32.partialorder %v153, 0.0
    %vm2843 = vcmp.gt.f32.partialorder %v154, 0.0
    %vm2844 = vcmp.gt.f32.partialorder %v155, 0.0
    %vm2845 = vcmp.gt.f32.partialorder %v156, 0.0
    %vm2846 = vcmp.gt.f32.partialorder %v157, 0.0
    %vm2847 = vcmp.gt.f32.partialorder %v158, 0.0
    %vm2848 = vcmp.gt.f32.partialorder %v159, 0.0
    %vm2849 = vcmp.gt.f32.partialorder %v160, 0.0
    %vm2850 = vcmp.gt.f32.partialorder %v161, 0.0
    %vm2851 = vcmp.gt.f32.partialorder %v162, 0.0
    %vm2852 = vcmp.gt.f32.partialorder %v163, 0.0
    %vm2853 = vcmp.gt.f32.partialorder %v164, 0.0
    %vm2854 = vcmp.gt.f32.partialorder %v165, 0.0
    %vm2855 = vcmp.gt.f32.partialorder %v166, 0.0
    %vm2856 = vcmp.gt.f32.partialorder %v167, 0.0
    %vm2857 = vcmp.gt.f32.partialorder %v168, 0.0
    %vm2858 = vcmp.gt.f32.partialorder %v169, 0.0
    %vm2859 = vcmp.gt.f32.partialorder %v170, 0.0
    %vm2860 = vcmp.gt.f32.partialorder %v171, 0.0
    %vm2861 = vcmp.gt.f32.partialorder %v172, 0.0
    %vm2862 = vcmp.gt.f32.partialorder %v173, 0.0
    %vm2863 = vcmp.gt.f32.partialorder %v174, 0.0
    %vm2864 = vcmp.gt.f32.partialorder %v175, 0.0
    %vm2865 = vcmp.gt.f32.partialorder %v176, 0.0
    %vm2866 = vcmp.gt.f32.partialorder %v177, 0.0
    %vm2867 = vcmp.gt.f32.partialorder %v178, 0.0
    %vm2868 = vcmp.gt.f32.partialorder %v179, 0.0
    %vm2869 = vcmp.gt.f32.partialorder %v180, 0.0
    %vm2870 = vcmp.gt.f32.partialorder %v181, 0.0
    %vm2871 = vcmp.gt.f32.partialorder %v182, 0.0
    %vm2872 = vcmp.gt.f32.partialorder %v183, 0.0
    %vm2873 = vcmp.gt.f32.partialorder %v184, 0.0
    %vm2874 = vcmp.gt.f32.partialorder %v185, 0.0
    %vm2875 = vcmp.gt.f32.partialorder %v186, 0.0
    %vm2876 = vcmp.gt.f32.partialorder %v187, 0.0
    %vm2877 = vcmp.gt.f32.partialorder %v188, 0.0
    %vm2878 = vcmp.gt.f32.partialorder %v189, 0.0
    %vm2879 = vcmp.gt.f32.partialorder %v190, 0.0
    %vm2880 = vcmp.gt.f32.partialorder %v191, 0.0
    %vm2881 = vcmp.gt.f32.partialorder %v192, 0.0
    %vm2882 = vcmp.gt.f32.partialorder %v193, 0.0
    %vm2883 = vcmp.gt.f32.partialorder %v194, 0.0
    %vm2884 = vcmp.gt.f32.partialorder %v195, 0.0
    %vm2885 = vcmp.gt.f32.partialorder %v196, 0.0
    %vm2886 = vcmp.gt.f32.partialorder %v197, 0.0
    %vm2887 = vcmp.gt.f32.partialorder %v198, 0.0
    %vm2888 = vcmp.gt.f32.partialorder %v199, 0.0
    %vm2889 = vcmp.gt.f32.partialorder %v200, 0.0
    %vm2890 = vcmp.gt.f32.partialorder %v201, 0.0
    %vm2891 = vcmp.gt.f32.partialorder %v202, 0.0
    %vm2892 = vcmp.gt.f32.partialorder %v203, 0.0
    %vm2893 = vcmp.gt.f32.partialorder %v204, 0.0
    %vm2894 = vcmp.gt.f32.partialorder %v205, 0.0
    %vm2895 = vcmp.gt.f32.partialorder %v206, 0.0
    %vm2896 = vcmp.gt.f32.partialorder %v207, 0.0
    %vm2897 = vcmp.gt.f32.partialorder %v208, 0.0
    %vm2898 = vcmp.gt.f32.partialorder %v209, 0.0
    %vm2899 = vcmp.gt.f32.partialorder %v210, 0.0
    %vm2900 = vcmp.gt.f32.partialorder %v211, 0.0
    %vm2901 = vcmp.gt.f32.partialorder %v212, 0.0
    %vm2902 = vcmp.gt.f32.partialorder %v213, 0.0
    %vm2903 = vcmp.gt.f32.partialorder %v214, 0.0
    %vm2904 = vcmp.gt.f32.partialorder %v215, 0.0
    %vm2905 = vcmp.gt.f32.partialorder %v216, 0.0
    %vm2906 = vcmp.gt.f32.partialorder %v217, 0.0
    %vm2907 = vcmp.gt.f32.partialorder %v218, 0.0
    %vm2908 = vcmp.gt.f32.partialorder %v219, 0.0
    %vm2909 = vcmp.gt.f32.partialorder %v220, 0.0
    %vm2910 = vcmp.gt.f32.partialorder %v221, 0.0
    %vm2911 = vcmp.gt.f32.partialorder %v222, 0.0
    %vm2912 = vcmp.gt.f32.partialorder %v223, 0.0
    %vm2913 = vcmp.gt.f32.partialorder %v224, 0.0
    %vm2914 = vcmp.gt.f32.partialorder %v225, 0.0
    %vm2915 = vcmp.gt.f32.partialorder %v226, 0.0
    %vm2916 = vmand %vm2516, %vm2716
    %vm2917 = vmand %vm2517, %vm2717
    %vm2918 = vmand %vm2518, %vm2718
    %vm2919 = vmand %vm2519, %vm2719
    %vm2920 = vmand %vm2520, %vm2720
    %vm2921 = vmand %vm2521, %vm2721
    %vm2922 = vmand %vm2522, %vm2722
    %vm2923 = vmand %vm2523, %vm2723
    %vm2924 = vmand %vm2524, %vm2724
    %vm2925 = vmand %vm2525, %vm2725
    %vm2926 = vmand %vm2526, %vm2726
    %vm2927 = vmand %vm2527, %vm2727
    %vm2928 = vmand %vm2528, %vm2728
    %vm2929 = vmand %vm2529, %vm2729
    %vm2930 = vmand %vm2530, %vm2730
    %vm2931 = vmand %vm2531, %vm2731
    %vm2932 = vmand %vm2532, %vm2732
    %vm2933 = vmand %vm2533, %vm2733
    %vm2934 = vmand %vm2534, %vm2734
    %vm2935 = vmand %vm2535, %vm2735
    %vm2936 = vmand %vm2536, %vm2736
    %vm2937 = vmand %vm2537, %vm2737
    %vm2938 = vmand %vm2538, %vm2738
    %vm2939 = vmand %vm2539, %vm2739
    %vm2940 = vmand %vm2540, %vm2740
    %vm2941 = vmand %vm2541, %vm2741
    %vm2942 = vmand %vm2542, %vm2742
    %vm2943 = vmand %vm2543, %vm2743
    %vm2944 = vmand %vm2544, %vm2744
    %vm2945 = vmand %vm2545, %vm2745
    %vm2946 = vmand %vm2546, %vm2746
    %vm2947 = vmand %vm2547, %vm2747
    %vm2948 = vmand %vm2548, %vm2748
    %vm2949 = vmand %vm2549, %vm2749
    %vm2950 = vmand %vm2550, %vm2750
    %vm2951 = vmand %vm2551, %vm2751
    %vm2952 = vmand %vm2552, %vm2752
    %vm2953 = vmand %vm2553, %vm2753
    %vm2954 = vmand %vm2554, %vm2754
    %vm2955 = vmand %vm2555, %vm2755
    %vm2956 = vmand %vm2556, %vm2756
    %vm2957 = vmand %vm2557, %vm2757
    %vm2958 = vmand %vm2558, %vm2758
    %vm2959 = vmand %vm2559, %vm2759
    %vm2960 = vmand %vm2560, %vm2760
    %vm2961 = vmand %vm2561, %vm2761
    %vm2962 = vmand %vm2562, %vm2762
    %vm2963 = vmand %vm2563, %vm2763
    %vm2964 = vmand %vm2564, %vm2764
    %vm2965 = vmand %vm2565, %vm2765
    %vm2966 = vmand %vm2566, %vm2766
    %vm2967 = vmand %vm2567, %vm2767
    %vm2968 = vmand %vm2568, %vm2768
    %vm2969 = vmand %vm2569, %vm2769
    %vm2970 = vmand %vm2570, %vm2770
    %vm2971 = vmand %vm2571, %vm2771
    %vm2972 = vmand %vm2572, %vm2772
    %vm2973 = vmand %vm2573, %vm2773
    %vm2974 = vmand %vm2574, %vm2774
    %vm2975 = vmand %vm2575, %vm2775
    %vm2976 = vmand %vm2576, %vm2776
    %vm2977 = vmand %vm2577, %vm2777
    %vm2978 = vmand %vm2578, %vm2778
    %vm2979 = vmand %vm2579, %vm2779
    %vm2980 = vmand %vm2580, %vm2780
    %vm2981 = vmand %vm2581, %vm2781
    %vm2982 = vmand %vm2582, %vm2782
    %vm2983 = vmand %vm2583, %vm2783
    %vm2984 = vmand %vm2584, %vm2784
    %vm2985 = vmand %vm2585, %vm2785
    %vm2986 = vmand %vm2586, %vm2786
    %vm2987 = vmand %vm2587, %vm2787
    %vm2988 = vmand %vm2588, %vm2788
    %vm2989 = vmand %vm2589, %vm2789
    %vm2990 = vmand %vm2590, %vm2790
    %vm2991 = vmand %vm2591, %vm2791
    %vm2992 = vmand %vm2592, %vm2792
    %vm2993 = vmand %vm2593, %vm2793
    %vm2994 = vmand %vm2594, %vm2794
    %vm2995 = vmand %vm2595, %vm2795
    %vm2996 = vmand %vm2596, %vm2796
    %vm2997 = vmand %vm2597, %vm2797
    %vm2998 = vmand %vm2598, %vm2798
    %vm2999 = vmand %vm2599, %vm2799
    %vm3000 = vmand %vm2600, %vm2800
    %vm3001 = vmand %vm2601, %vm2801
    %vm3002 = vmand %vm2602, %vm2802
    %vm3003 = vmand %vm2603, %vm2803
    %vm3004 = vmand %vm2604, %vm2804
    %vm3005 = vmand %vm2605, %vm2805
    %vm3006 = vmand %vm2606, %vm2806
    %vm3007 = vmand %vm2607, %vm2807
    %vm3008 = vmand %vm2608, %vm2808
    %vm3009 = vmand %vm2609, %vm2809
    %vm3010 = vmand %vm2610, %vm2810
    %vm3011 = vmand %vm2611, %vm2811
    %vm3012 = vmand %vm2612, %vm2812
    %vm3013 = vmand %vm2613, %vm2813
    %vm3014 = vmand %vm2614, %vm2814
    %vm3015 = vmand %vm2615, %vm2815
    %vm3016 = vmand %vm2616, %vm2816
    %vm3017 = vmand %vm2617, %vm2817
    %vm3018 = vmand %vm2618, %vm2818
    %vm3019 = vmand %vm2619, %vm2819
    %vm3020 = vmand %vm2620, %vm2820
    %vm3021 = vmand %vm2621, %vm2821
    %vm3022 = vmand %vm2622, %vm2822
    %vm3023 = vmand %vm2623, %vm2823
    %vm3024 = vmand %vm2624, %vm2824
    %vm3025 = vmand %vm2625, %vm2825
    %vm3026 = vmand %vm2626, %vm2826
    %vm3027 = vmand %vm2627, %vm2827
    %vm3028 = vmand %vm2628, %vm2828
    %vm3029 = vmand %vm2629, %vm2829
    %vm3030 = vmand %vm2630, %vm2830
    %vm3031 = vmand %vm2631, %vm2831
    %vm3032 = vmand %vm2632, %vm2832
    %vm3033 = vmand %vm2633, %vm2833
    %vm3034 = vmand %vm2634, %vm2834
    %vm3035 = vmand %vm2635, %vm2835
    %vm3036 = vmand %vm2636, %vm2836
    %vm3037 = vmand %vm2637, %vm2837
    %vm3038 = vmand %vm2638, %vm2838
    %vm3039 = vmand %vm2639, %vm2839
    %vm3040 = vmand %vm2640, %vm2840
    %vm3041 = vmand %vm2641, %vm2841
    %vm3042 = vmand %vm2642, %vm2842
    %vm3043 = vmand %vm2643, %vm2843
    %vm3044 = vmand %vm2644, %vm2844
    %vm3045 = vmand %vm2645, %vm2845
    %vm3046 = vmand %vm2646, %vm2846
    %vm3047 = vmand %vm2647, %vm2847
    %vm3048 = vmand %vm2648, %vm2848
    %vm3049 = vmand %vm2649, %vm2849
    %vm3050 = vmand %vm2650, %vm2850
    %vm3051 = vmand %vm2651, %vm2851
    %vm3052 = vmand %vm2652, %vm2852
    %vm3053 = vmand %vm2653, %vm2853
    %vm3054 = vmand %vm2654, %vm2854
    %vm3055 = vmand %vm2655, %vm2855
    %vm3056 = vmand %vm2656, %vm2856
    %vm3057 = vmand %vm2657, %vm2857
    %vm3058 = vmand %vm2658, %vm2858
    %vm3059 = vmand %vm2659, %vm2859
    %vm3060 = vmand %vm2660, %vm2860
    %vm3061 = vmand %vm2661, %vm2861
    %vm3062 = vmand %vm2662, %vm2862
    %vm3063 = vmand %vm2663, %vm2863
    %vm3064 = vmand %vm2664, %vm2864
    %vm3065 = vmand %vm2665, %vm2865
    %vm3066 = vmand %vm2666, %vm2866
    %vm3067 = vmand %vm2667, %vm2867
    %vm3068 = vmand %vm2668, %vm2868
    %vm3069 = vmand %vm2669, %vm2869
    %vm3070 = vmand %vm2670, %vm2870
    %vm3071 = vmand %vm2671, %vm2871
    %vm3072 = vmand %vm2672, %vm2872
    %vm3073 = vmand %vm2673, %vm2873
    %vm3074 = vmand %vm2674, %vm2874
    %vm3075 = vmand %vm2675, %vm2875
    %vm3076 = vmand %vm2676, %vm2876
    %vm3077 = vmand %vm2677, %vm2877
    %vm3078 = vmand %vm2678, %vm2878
    %vm3079 = vmand %vm2679, %vm2879
    %vm3080 = vmand %vm2680, %vm2880
    %vm3081 = vmand %vm2681, %vm2881
    %vm3082 = vmand %vm2682, %vm2882
    %vm3083 = vmand %vm2683, %vm2883
    %vm3084 = vmand %vm2684, %vm2884
    %vm3085 = vmand %vm2685, %vm2885
    %vm3086 = vmand %vm2686, %vm2886
    %vm3087 = vmand %vm2687, %vm2887
    %vm3088 = vmand %vm2688, %vm2888
    %vm3089 = vmand %vm2689, %vm2889
    %vm3090 = vmand %vm2690, %vm2890
    %vm3091 = vmand %vm2691, %vm2891
    %vm3092 = vmand %vm2692, %vm2892
    %vm3093 = vmand %vm2693, %vm2893
    %vm3094 = vmand %vm2694, %vm2894
    %vm3095 = vmand %vm2695, %vm2895
    %vm3096 = vmand %vm2696, %vm2896
    %vm3097 = vmand %vm2697, %vm2897
    %vm3098 = vmand %vm2698, %vm2898
    %vm3099 = vmand %vm2699, %vm2899
    %vm3100 = vmand %vm2700, %vm2900
    %vm3101 = vmand %vm2701, %vm2901
    %vm3102 = vmand %vm2702, %vm2902
    %vm3103 = vmand %vm2703, %vm2903
    %vm3104 = vmand %vm2704, %vm2904
    %vm3105 = vmand %vm2705, %vm2905
    %vm3106 = vmand %vm2706, %vm2906
    %vm3107 = vmand %vm2707, %vm2907
    %vm3108 = vmand %vm2708, %vm2908
    %vm3109 = vmand %vm2709, %vm2909
    %vm3110 = vmand %vm2710, %vm2910
    %vm3111 = vmand %vm2711, %vm2911
    %vm3112 = vmand %vm2712, %vm2912
    %vm3113 = vmand %vm2713, %vm2913
    %vm3114 = vmand %vm2714, %vm2914
    %vm3115 = vmand %vm2715, %vm2915
    %v3116 = vmul.f32 %v27, 2.0
    %v3117 = vmul.f32 %v28, 2.0
    %v3118 = vmul.f32 %v29, 2.0
    %v3119 = vmul.f32 %v30, 2.0
    %v3120 = vmul.f32 %v31, 2.0
    %v3121 = vmul.f32 %v32, 2.0
    %v3122 = vmul.f32 %v33, 2.0
    %v3123 = vmul.f32 %v34, 2.0
    %v3124 = vmul.f32 %v35, 2.0
    %v3125 = vmul.f32 %v36, 2.0
    %v3126 = vmul.f32 %v37, 2.0
    %v3127 = vmul.f32 %v38, 2.0
    %v3128 = vmul.f32 %v39, 2.0
    %v3129 = vmul.f32 %v40, 2.0
    %v3130 = vmul.f32 %v41, 2.0
    %v3131 = vmul.f32 %v42, 2.0
    %v3132 = vmul.f32 %v43, 2.0
    %v3133 = vmul.f32 %v44, 2.0
    %v3134 = vmul.f32 %v45, 2.0
    %v3135 = vmul.f32 %v46, 2.0
    %v3136 = vmul.f32 %v47, 2.0
    %v3137 = vmul.f32 %v48, 2.0
    %v3138 = vmul.f32 %v49, 2.0
    %v3139 = vmul.f32 %v50, 2.0
    %v3140 = vmul.f32 %v51, 2.0
    %v3141 = vmul.f32 %v52, 2.0
    %v3142 = vmul.f32 %v53, 2.0
    %v3143 = vmul.f32 %v54, 2.0
    %v3144 = vmul.f32 %v55, 2.0
    %v3145 = vmul.f32 %v56, 2.0
    %v3146 = vmul.f32 %v57, 2.0
    %v3147 = vmul.f32 %v58, 2.0
    %v3148 = vmul.f32 %v59, 2.0
    %v3149 = vmul.f32 %v60, 2.0
    %v3150 = vmul.f32 %v61, 2.0
    %v3151 = vmul.f32 %v62, 2.0
    %v3152 = vmul.f32 %v63, 2.0
    %v3153 = vmul.f32 %v64, 2.0
    %v3154 = vmul.f32 %v65, 2.0
    %v3155 = vmul.f32 %v66, 2.0
    %v3156 = vmul.f32 %v67, 2.0
    %v3157 = vmul.f32 %v68, 2.0
    %v3158 = vmul.f32 %v69, 2.0
    %v3159 = vmul.f32 %v70, 2.0
    %v3160 = vmul.f32 %v71, 2.0
    %v3161 = vmul.f32 %v72, 2.0
    %v3162 = vmul.f32 %v73, 2.0
    %v3163 = vmul.f32 %v74, 2.0
    %v3164 = vmul.f32 %v75, 2.0
    %v3165 = vmul.f32 %v76, 2.0
    %v3166 = vmul.f32 %v77, 2.0
    %v3167 = vmul.f32 %v78, 2.0
    %v3168 = vmul.f32 %v79, 2.0
    %v3169 = vmul.f32 %v80, 2.0
    %v3170 = vmul.f32 %v81, 2.0
    %v3171 = vmul.f32 %v82, 2.0
    %v3172 = vmul.f32 %v83, 2.0
    %v3173 = vmul.f32 %v84, 2.0
    %v3174 = vmul.f32 %v85, 2.0
    %v3175 = vmul.f32 %v86, 2.0
    %v3176 = vmul.f32 %v87, 2.0
    %v3177 = vmul.f32 %v88, 2.0
    %v3178 = vmul.f32 %v89, 2.0
    %v3179 = vmul.f32 %v90, 2.0
    %v3180 = vmul.f32 %v91, 2.0
    %v3181 = vmul.f32 %v92, 2.0
    %v3182 = vmul.f32 %v93, 2.0
    %v3183 = vmul.f32 %v94, 2.0
    %v3184 = vmul.f32 %v95, 2.0
    %v3185 = vmul.f32 %v96, 2.0
    %v3186 = vmul.f32 %v97, 2.0
    %v3187 = vmul.f32 %v98, 2.0
    %v3188 = vmul.f32 %v99, 2.0
    %v3189 = vmul.f32 %v100, 2.0
    %v3190 = vmul.f32 %v101, 2.0
    %v3191 = vmul.f32 %v102, 2.0
    %v3192 = vmul.f32 %v103, 2.0
    %v3193 = vmul.f32 %v104, 2.0
    %v3194 = vmul.f32 %v105, 2.0
    %v3195 = vmul.f32 %v106, 2.0
    %v3196 = vmul.f32 %v107, 2.0
    %v3197 = vmul.f32 %v108, 2.0
    %v3198 = vmul.f32 %v109, 2.0
    %v3199 = vmul.f32 %v110, 2.0
    %v3200 = vmul.f32 %v111, 2.0
    %v3201 = vmul.f32 %v112, 2.0
    %v3202 = vmul.f32 %v113, 2.0
    %v3203 = vmul.f32 %v114, 2.0
    %v3204 = vmul.f32 %v115, 2.0
    %v3205 = vmul.f32 %v116, 2.0
    %v3206 = vmul.f32 %v117, 2.0
    %v3207 = vmul.f32 %v118, 2.0
    %v3208 = vmul.f32 %v119, 2.0
    %v3209 = vmul.f32 %v120, 2.0
    %v3210 = vmul.f32 %v121, 2.0
    %v3211 = vmul.f32 %v122, 2.0
    %v3212 = vmul.f32 %v123, 2.0
    %v3213 = vmul.f32 %v124, 2.0
    %v3214 = vmul.f32 %v125, 2.0
    %v3215 = vmul.f32 %v126, 2.0
    %v3216 = vmul.f32 %v127, 2.0
    %v3217 = vmul.f32 %v128, 2.0
    %v3218 = vmul.f32 %v129, 2.0
    %v3219 = vmul.f32 %v130, 2.0
    %v3220 = vmul.f32 %v131, 2.0
    %v3221 = vmul.f32 %v132, 2.0
    %v3222 = vmul.f32 %v133, 2.0
    %v3223 = vmul.f32 %v134, 2.0
    %v3224 = vmul.f32 %v135, 2.0
    %v3225 = vmul.f32 %v136, 2.0
    %v3226 = vmul.f32 %v137, 2.0
    %v3227 = vmul.f32 %v138, 2.0
    %v3228 = vmul.f32 %v139, 2.0
    %v3229 = vmul.f32 %v140, 2.0
    %v3230 = vmul.f32 %v141, 2.0
    %v3231 = vmul.f32 %v142, 2.0
    %v3232 = vmul.f32 %v143, 2.0
    %v3233 = vmul.f32 %v144, 2.0
    %v3234 = vmul.f32 %v145, 2.0
    %v3235 = vmul.f32 %v146, 2.0
    %v3236 = vmul.f32 %v147, 2.0
    %v3237 = vmul.f32 %v148, 2.0
    %v3238 = vmul.f32 %v149, 2.0
    %v3239 = vmul.f32 %v150, 2.0
    %v3240 = vmul.f32 %v151, 2.0
    %v3241 = vmul.f32 %v152, 2.0
    %v3242 = vmul.f32 %v153, 2.0
    %v3243 = vmul.f32 %v154, 2.0
    %v3244 = vmul.f32 %v155, 2.0
    %v3245 = vmul.f32 %v156, 2.0
    %v3246 = vmul.f32 %v157, 2.0
    %v3247 = vmul.f32 %v158, 2.0
    %v3248 = vmul.f32 %v159, 2.0
    %v3249 = vmul.f32 %v160, 2.0
    %v3250 = vmul.f32 %v161, 2.0
    %v3251 = vmul.f32 %v162, 2.0
    %v3252 = vmul.f32 %v163, 2.0
    %v3253 = vmul.f32 %v164, 2.0
    %v3254 = vmul.f32 %v165, 2.0
    %v3255 = vmul.f32 %v166, 2.0
    %v3256 = vmul.f32 %v167, 2.0
    %v3257 = vmul.f32 %v168, 2.0
    %v3258 = vmul.f32 %v169, 2.0
    %v3259 = vmul.f32 %v170, 2.0
    %v3260 = vmul.f32 %v171, 2.0
    %v3261 = vmul.f32 %v172, 2.0
    %v3262 = vmul.f32 %v173, 2.0
    %v3263 = vmul.f32 %v174, 2.0
    %v3264 = vmul.f32 %v175, 2.0
    %v3265 = vmul.f32 %v176, 2.0
    %v3266 = vmul.f32 %v177, 2.0
    %v3267 = vmul.f32 %v178, 2.0
    %v3268 = vmul.f32 %v179, 2.0
    %v3269 = vmul.f32 %v180, 2.0
    %v3270 = vmul.f32 %v181, 2.0
    %v3271 = vmul.f32 %v182, 2.0
    %v3272 = vmul.f32 %v183, 2.0
    %v3273 = vmul.f32 %v184, 2.0
    %v3274 = vmul.f32 %v185, 2.0
    %v3275 = vmul.f32 %v186, 2.0
    %v3276 = vmul.f32 %v187, 2.0
    %v3277 = vmul.f32 %v188, 2.0
    %v3278 = vmul.f32 %v189, 2.0
    %v3279 = vmul.f32 %v190, 2.0
    %v3280 = vmul.f32 %v191, 2.0
    %v3281 = vmul.f32 %v192, 2.0
    %v3282 = vmul.f32 %v193, 2.0
    %v3283 = vmul.f32 %v194, 2.0
    %v3284 = vmul.f32 %v195, 2.0
    %v3285 = vmul.f32 %v196, 2.0
    %v3286 = vmul.f32 %v197, 2.0
    %v3287 = vmul.f32 %v198, 2.0
    %v3288 = vmul.f32 %v199, 2.0
    %v3289 = vmul.f32 %v200, 2.0
    %v3290 = vmul.f32 %v201, 2.0
    %v3291 = vmul.f32 %v202, 2.0
    %v3292 = vmul.f32 %v203, 2.0
    %v3293 = vmul.f32 %v204, 2.0
    %v3294 = vmul.f32 %v205, 2.0
    %v3295 = vmul.f32 %v206, 2.0
    %v3296 = vmul.f32 %v207, 2.0
    %v3297 = vmul.f32 %v208, 2.0
    %v3298 = vmul.f32 %v209, 2.0
    %v3299 = vmul.f32 %v210, 2.0
    %v3300 = vmul.f32 %v211, 2.0
    %v3301 = vmul.f32 %v212, 2.0
    %v3302 = vmul.f32 %v213, 2.0
    %v3303 = vmul.f32 %v214, 2.0
    %v3304 = vmul.f32 %v215, 2.0
    %v3305 = vmul.f32 %v216, 2.0
    %v3306 = vmul.f32 %v217, 2.0
    %v3307 = vmul.f32 %v218, 2.0
    %v3308 = vmul.f32 %v219, 2.0
    %v3309 = vmul.f32 %v220, 2.0
    %v3310 = vmul.f32 %v221, 2.0
    %v3311 = vmul.f32 %v222, 2.0
    %v3312 = vmul.f32 %v223, 2.0
    %v3313 = vmul.f32 %v224, 2.0
    %v3314 = vmul.f32 %v225, 2.0
    %v3315 = vmul.f32 %v226, 2.0
    %v3316 = vsel %vm2916, %v3116, 0.0
    %v3317 = vsel %vm2917, %v3117, 0.0
    %v3318 = vsel %vm2918, %v3118, 0.0
    %v3319 = vsel %vm2919, %v3119, 0.0
    %v3320 = vsel %vm2920, %v3120, 0.0
    %v3321 = vsel %vm2921, %v3121, 0.0
    %v3322 = vsel %vm2922, %v3122, 0.0
    %v3323 = vsel %vm2923, %v3123, 0.0
    %v3324 = vsel %vm2924, %v3124, 0.0
    %v3325 = vsel %vm2925, %v3125, 0.0
    %v3326 = vsel %vm2926, %v3126, 0.0
    %v3327 = vsel %vm2927, %v3127, 0.0
    %v3328 = vsel %vm2928, %v3128, 0.0
    %v3329 = vsel %vm2929, %v3129, 0.0
    %v3330 = vsel %vm2930, %v3130, 0.0
    %v3331 = vsel %vm2931, %v3131, 0.0
    %v3332 = vsel %vm2932, %v3132, 0.0
    %v3333 = vsel %vm2933, %v3133, 0.0
    %v3334 = vsel %vm2934, %v3134, 0.0
    %v3335 = vsel %vm2935, %v3135, 0.0
    %v3336 = vsel %vm2936, %v3136, 0.0
    %v3337 = vsel %vm2937, %v3137, 0.0
    %v3338 = vsel %vm2938, %v3138, 0.0
    %v3339 = vsel %vm2939, %v3139, 0.0
    %v3340 = vsel %vm2940, %v3140, 0.0
    %v3341 = vsel %vm2941, %v3141, 0.0
    %v3342 = vsel %vm2942, %v3142, 0.0
    %v3343 = vsel %vm2943, %v3143, 0.0
    %v3344 = vsel %vm2944, %v3144, 0.0
    %v3345 = vsel %vm2945, %v3145, 0.0
    %v3346 = vsel %vm2946, %v3146, 0.0
    %v3347 = vsel %vm2947, %v3147, 0.0
    %v3348 = vsel %vm2948, %v3148, 0.0
    %v3349 = vsel %vm2949, %v3149, 0.0
    %v3350 = vsel %vm2950, %v3150, 0.0
    %v3351 = vsel %vm2951, %v3151, 0.0
    %v3352 = vsel %vm2952, %v3152, 0.0
    %v3353 = vsel %vm2953, %v3153, 0.0
    %v3354 = vsel %vm2954, %v3154, 0.0
    %v3355 = vsel %vm2955, %v3155, 0.0
    %v3356 = vsel %vm2956, %v3156, 0.0
    %v3357 = vsel %vm2957, %v3157, 0.0
    %v3358 = vsel %vm2958, %v3158, 0.0
    %v3359 = vsel %vm2959, %v3159, 0.0
    %v3360 = vsel %vm2960, %v3160, 0.0
    %v3361 = vsel %vm2961, %v3161, 0.0
    %v3362 = vsel %vm2962, %v3162, 0.0
    %v3363 = vsel %vm2963, %v3163, 0.0
    %v3364 = vsel %vm2964, %v3164, 0.0
    %v3365 = vsel %vm2965, %v3165, 0.0
    %v3366 = vsel %vm2966, %v3166, 0.0
    %v3367 = vsel %vm2967, %v3167, 0.0
    %v3368 = vsel %vm2968, %v3168, 0.0
    %v3369 = vsel %vm2969, %v3169, 0.0
    %v3370 = vsel %vm2970, %v3170, 0.0
    %v3371 = vsel %vm2971, %v3171, 0.0
    %v3372 = vsel %vm2972, %v3172, 0.0
    %v3373 = vsel %vm2973, %v3173, 0.0
    %v3374 = vsel %vm2974, %v3174, 0.0
    %v3375 = vsel %vm2975, %v3175, 0.0
    %v3376 = vsel %vm2976, %v3176, 0.0
    %v3377 = vsel %vm2977, %v3177, 0.0
    %v3378 = vsel %vm2978, %v3178, 0.0
    %v3379 = vsel %vm2979, %v3179, 0.0
    %v3380 = vsel %vm2980, %v3180, 0.0
    %v3381 = vsel %vm2981, %v3181, 0.0
    %v3382 = vsel %vm2982, %v3182, 0.0
    %v3383 = vsel %vm2983, %v3183, 0.0
    %v3384 = vsel %vm2984, %v3184, 0.0
    %v3385 = vsel %vm2985, %v3185, 0.0
    %v3386 = vsel %vm2986, %v3186, 0.0
    %v3387 = vsel %vm2987, %v3187, 0.0
    %v3388 = vsel %vm2988, %v3188, 0.0
    %v3389 = vsel %vm2989, %v3189, 0.0
    %v3390 = vsel %vm2990, %v3190, 0.0
    %v3391 = vsel %vm2991, %v3191, 0.0
    %v3392 = vsel %vm2992, %v3192, 0.0
    %v3393 = vsel %vm2993, %v3193, 0.0
    %v3394 = vsel %vm2994, %v3194, 0.0
    %v3395 = vsel %vm2995, %v3195, 0.0
    %v3396 = vsel %vm2996, %v3196, 0.0
    %v3397 = vsel %vm2997, %v3197, 0.0
    %v3398 = vsel %vm2998, %v3198, 0.0
    %v3399 = vsel %vm2999, %v3199, 0.0
    %v3400 = vsel %vm3000, %v3200, 0.0
    %v3401 = vsel %vm3001, %v3201, 0.0
    %v3402 = vsel %vm3002, %v3202, 0.0
    %v3403 = vsel %vm3003, %v3203, 0.0
    %v3404 = vsel %vm3004, %v3204, 0.0
    %v3405 = vsel %vm3005, %v3205, 0.0
    %v3406 = vsel %vm3006, %v3206, 0.0
    %v3407 = vsel %vm3007, %v3207, 0.0
    %v3408 = vsel %vm3008, %v3208, 0.0
    %v3409 = vsel %vm3009, %v3209, 0.0
    %v3410 = vsel %vm3010, %v3210, 0.0
    %v3411 = vsel %vm3011, %v3211, 0.0
    %v3412 = vsel %vm3012, %v3212, 0.0
    %v3413 = vsel %vm3013, %v3213, 0.0
    %v3414 = vsel %vm3014, %v3214, 0.0
    %v3415 = vsel %vm3015, %v3215, 0.0
    %v3416 = vsel %vm3016, %v3216, 0.0
    %v3417 = vsel %vm3017, %v3217, 0.0
    %v3418 = vsel %vm3018, %v3218, 0.0
    %v3419 = vsel %vm3019, %v3219, 0.0
    %v3420 = vsel %vm3020, %v3220, 0.0
    %v3421 = vsel %vm3021, %v3221, 0.0
    %v3422 = vsel %vm3022, %v3222, 0.0
    %v3423 = vsel %vm3023, %v3223, 0.0
    %v3424 = vsel %vm3024, %v3224, 0.0
    %v3425 = vsel %vm3025, %v3225, 0.0
    %v3426 = vsel %vm3026, %v3226, 0.0
    %v3427 = vsel %vm3027, %v3227, 0.0
    %v3428 = vsel %vm3028, %v3228, 0.0
    %v3429 = vsel %vm3029, %v3229, 0.0
    %v3430 = vsel %vm3030, %v3230, 0.0
    %v3431 = vsel %vm3031, %v3231, 0.0
    %v3432 = vsel %vm3032, %v3232, 0.0
    %v3433 = vsel %vm3033, %v3233, 0.0
    %v3434 = vsel %vm3034, %v3234, 0.0
    %v3435 = vsel %vm3035, %v3235, 0.0
    %v3436 = vsel %vm3036, %v3236, 0.0
    %v3437 = vsel %vm3037, %v3237, 0.0
    %v3438 = vsel %vm3038, %v3238, 0.0
    %v3439 = vsel %vm3039, %v3239, 0.0
    %v3440 = vsel %vm3040, %v3240, 0.0
    %v3441 = vsel %vm3041, %v3241, 0.0
    %v3442 = vsel %vm3042, %v3242, 0.0
    %v3443 = vsel %vm3043, %v3243, 0.0
    %v3444 = vsel %vm3044, %v3244, 0.0
    %v3445 = vsel %vm3045, %v3245, 0.0
    %v3446 = vsel %vm3046, %v3246, 0.0
    %v3447 = vsel %vm3047, %v3247, 0.0
    %v3448 = vsel %vm3048, %v3248, 0.0
    %v3449 = vsel %vm3049, %v3249, 0.0
    %v3450 = vsel %vm3050, %v3250, 0.0
    %v3451 = vsel %vm3051, %v3251, 0.0
    %v3452 = vsel %vm3052, %v3252, 0.0
    %v3453 = vsel %vm3053, %v3253, 0.0
    %v3454 = vsel %vm3054, %v3254, 0.0
    %v3455 = vsel %vm3055, %v3255, 0.0
    %v3456 = vsel %vm3056, %v3256, 0.0
    %v3457 = vsel %vm3057, %v3257, 0.0
    %v3458 = vsel %vm3058, %v3258, 0.0
    %v3459 = vsel %vm3059, %v3259, 0.0
    %v3460 = vsel %vm3060, %v3260, 0.0
    %v3461 = vsel %vm3061, %v3261, 0.0
    %v3462 = vsel %vm3062, %v3262, 0.0
    %v3463 = vsel %vm3063, %v3263, 0.0
    %v3464 = vsel %vm3064, %v3264, 0.0
    %v3465 = vsel %vm3065, %v3265, 0.0
    %v3466 = vsel %vm3066, %v3266, 0.0
    %v3467 = vsel %vm3067, %v3267, 0.0
    %v3468 = vsel %vm3068, %v3268, 0.0
    %v3469 = vsel %vm3069, %v3269, 0.0
    %v3470 = vsel %vm3070, %v3270, 0.0
    %v3471 = vsel %vm3071, %v3271, 0.0
    %v3472 = vsel %vm3072, %v3272, 0.0
    %v3473 = vsel %vm3073, %v3273, 0.0
    %v3474 = vsel %vm3074, %v3274, 0.0
    %v3475 = vsel %vm3075, %v3275, 0.0
    %v3476 = vsel %vm3076, %v3276, 0.0
    %v3477 = vsel %vm3077, %v3277, 0.0
    %v3478 = vsel %vm3078, %v3278, 0.0
    %v3479 = vsel %vm3079, %v3279, 0.0
    %v3480 = vsel %vm3080, %v3280, 0.0
    %v3481 = vsel %vm3081, %v3281, 0.0
    %v3482 = vsel %vm3082, %v3282, 0.0
    %v3483 = vsel %vm3083, %v3283, 0.0
    %v3484 = vsel %vm3084, %v3284, 0.0
    %v3485 = vsel %vm3085, %v3285, 0.0
    %v3486 = vsel %vm3086, %v3286, 0.0
    %v3487 = vsel %vm3087, %v3287, 0.0
    %v3488 = vsel %vm3088, %v3288, 0.0
    %v3489 = vsel %vm3089, %v3289, 0.0
    %v3490 = vsel %vm3090, %v3290, 0.0
    %v3491 = vsel %vm3091, %v3291, 0.0
    %v3492 = vsel %vm3092, %v3292, 0.0
    %v3493 = vsel %vm3093, %v3293, 0.0
    %v3494 = vsel %vm3094, %v3294, 0.0
    %v3495 = vsel %vm3095, %v3295, 0.0
    %v3496 = vsel %vm3096, %v3296, 0.0
    %v3497 = vsel %vm3097, %v3297, 0.0
    %v3498 = vsel %vm3098, %v3298, 0.0
    %v3499 = vsel %vm3099, %v3299, 0.0
    %v3500 = vsel %vm3100, %v3300, 0.0
    %v3501 = vsel %vm3101, %v3301, 0.0
    %v3502 = vsel %vm3102, %v3302, 0.0
    %v3503 = vsel %vm3103, %v3303, 0.0
    %v3504 = vsel %vm3104, %v3304, 0.0
    %v3505 = vsel %vm3105, %v3305, 0.0
    %v3506 = vsel %vm3106, %v3306, 0.0
    %v3507 = vsel %vm3107, %v3307, 0.0
    %v3508 = vsel %vm3108, %v3308, 0.0
    %v3509 = vsel %vm3109, %v3309, 0.0
    %v3510 = vsel %vm3110, %v3310, 0.0
    %v3511 = vsel %vm3111, %v3311, 0.0
    %v3512 = vsel %vm3112, %v3312, 0.0
    %v3513 = vsel %vm3113, %v3313, 0.0
    %v3514 = vsel %vm3114, %v3314, 0.0
    %v3515 = vsel %vm3115, %v3315, 0.0
    %3516 = vst [vmem:[#allocation7] sm:$0xff] %v3316
    %3517 = vst [vmem:[#allocation7 + $0x8] sm:$0xff] %v3317
    %3518 = vst [vmem:[#allocation7 + $0x10] sm:$0xff] %v3318
    %3519 = vst [vmem:[#allocation7 + $0x18] sm:$0xff] %v3319
    %3520 = vst [vmem:[#allocation7 + $0x20] sm:$0xff] %v3320
    %3521 = vst [vmem:[#allocation7 + $0x28] sm:$0xff] %v3321
    %3522 = vst [vmem:[#allocation7 + $0x30] sm:$0xff] %v3322
    %3523 = vst [vmem:[#allocation7 + $0x38] sm:$0xff] %v3323
    %3524 = vst [vmem:[#allocation7 + $0x40] sm:$0xff] %v3324
    %3525 = vst [vmem:[#allocation7 + $0x48] sm:$0xff] %v3325
    %3526 = vst [vmem:[#allocation7 + $0x50] sm:$0xff] %v3326
    %3527 = vst [vmem:[#allocation7 + $0x58] sm:$0xff] %v3327
    %3528 = vst [vmem:[#allocation7 + $0x60] sm:$0xff] %v3328
    %3529 = vst [vmem:[#allocation7 + $0x68] sm:$0xff] %v3329
    %3530 = vst [vmem:[#allocation7 + $0x70] sm:$0xff] %v3330
    %3531 = vst [vmem:[#allocation7 + $0x78] sm:$0xff] %v3331
    %3532 = vst [vmem:[#allocation7 + $0x80] sm:$0xff] %v3332
    %3533 = vst [vmem:[#allocation7 + $0x88] sm:$0xff] %v3333
    %3534 = vst [vmem:[#allocation7 + $0x90] sm:$0xff] %v3334
    %3535 = vst [vmem:[#allocation7 + $0x98] sm:$0xff] %v3335
    %3536 = vst [vmem:[#allocation7 + $0xa0] sm:$0xff] %v3336
    %3537 = vst [vmem:[#allocation7 + $0xa8] sm:$0xff] %v3337
    %3538 = vst [vmem:[#allocation7 + $0xb0] sm:$0xff] %v3338
    %3539 = vst [vmem:[#allocation7 + $0xb8] sm:$0xff] %v3339
    %3540 = vst [vmem:[#allocation7 + $0xc0] sm:$0xff] %v3340
    %3541 = vst [vmem:[#allocation7 + $0xc8] sm:$0xff] %v3341
    %3542 = vst [vmem:[#allocation7 + $0xd0] sm:$0xff] %v3342
    %3543 = vst [vmem:[#allocation7 + $0xd8] sm:$0xff] %v3343
    %3544 = vst [vmem:[#allocation7 + $0xe0] sm:$0xff] %v3344
    %3545 = vst [vmem:[#allocation7 + $0xe8] sm:$0xff] %v3345
    %3546 = vst [vmem:[#allocation7 + $0xf0] sm:$0xff] %v3346
    %3547 = vst [vmem:[#allocation7 + $0xf8] sm:$0xff] %v3347
    %3548 = vst [vmem:[#allocation7 + $0x100] sm:$0xff] %v3348
    %3549 = vst [vmem:[#allocation7 + $0x108] sm:$0xff] %v3349
    %3550 = vst [vmem:[#allocation7 + $0x110] sm:$0xff] %v3350
    %3551 = vst [vmem:[#allocation7 + $0x118] sm:$0xff] %v3351
    %3552 = vst [vmem:[#allocation7 + $0x120] sm:$0xff] %v3352
    %3553 = vst [vmem:[#allocation7 + $0x128] sm:$0xff] %v3353
    %3554 = vst [vmem:[#allocation7 + $0x130] sm:$0xff] %v3354
    %3555 = vst [vmem:[#allocation7 + $0x138] sm:$0xff] %v3355
    %3556 = vst [vmem:[#allocation7 + $0x140] sm:$0xff] %v3356
    %3557 = vst [vmem:[#allocation7 + $0x148] sm:$0xff] %v3357
    %3558 = vst [vmem:[#allocation7 + $0x150] sm:$0xff] %v3358
    %3559 = vst [vmem:[#allocation7 + $0x158] sm:$0xff] %v3359
    %3560 = vst [vmem:[#allocation7 + $0x160] sm:$0xff] %v3360
    %3561 = vst [vmem:[#allocation7 + $0x168] sm:$0xff] %v3361
    %3562 = vst [vmem:[#allocation7 + $0x170] sm:$0xff] %v3362
    %3563 = vst [vmem:[#allocation7 + $0x178] sm:$0xff] %v3363
    %3564 = vst [vmem:[#allocation7 + $0x180] sm:$0xff] %v3364
    %3565 = vst [vmem:[#allocation7 + $0x188] sm:$0xff] %v3365
    %3566 = vst [vmem:[#allocation7 + $0x190] sm:$0xff] %v3366
    %3567 = vst [vmem:[#allocation7 + $0x198] sm:$0xff] %v3367
    %3568 = vst [vmem:[#allocation7 + $0x1a0] sm:$0xff] %v3368
    %3569 = vst [vmem:[#allocation7 + $0x1a8] sm:$0xff] %v3369
    %3570 = vst [vmem:[#allocation7 + $0x1b0] sm:$0xff] %v3370
    %3571 = vst [vmem:[#allocation7 + $0x1b8] sm:$0xff] %v3371
    %3572 = vst [vmem:[#allocation7 + $0x1c0] sm:$0xff] %v3372
    %3573 = vst [vmem:[#allocation7 + $0x1c8] sm:$0xff] %v3373
    %3574 = vst [vmem:[#allocation7 + $0x1d0] sm:$0xff] %v3374
    %3575 = vst [vmem:[#allocation7 + $0x1d8] sm:$0xff] %v3375
    %3576 = vst [vmem:[#allocation7 + $0x1e0] sm:$0xff] %v3376
    %3577 = vst [vmem:[#allocation7 + $0x1e8] sm:$0xff] %v3377
    %3578 = vst [vmem:[#allocation7 + $0x1f0] sm:$0xff] %v3378
    %3579 = vst [vmem:[#allocation7 + $0x1f8] sm:$0xff] %v3379
    %3580 = vst [vmem:[#allocation7 + $0x200] sm:$0xff] %v3380
    %3581 = vst [vmem:[#allocation7 + $0x208] sm:$0xff] %v3381
    %3582 = vst [vmem:[#allocation7 + $0x210] sm:$0xff] %v3382
    %3583 = vst [vmem:[#allocation7 + $0x218] sm:$0xff] %v3383
    %3584 = vst [vmem:[#allocation7 + $0x220] sm:$0xff] %v3384
    %3585 = vst [vmem:[#allocation7 + $0x228] sm:$0xff] %v3385
    %3586 = vst [vmem:[#allocation7 + $0x230] sm:$0xff] %v3386
    %3587 = vst [vmem:[#allocation7 + $0x238] sm:$0xff] %v3387
    %3588 = vst [vmem:[#allocation7 + $0x240] sm:$0xff] %v3388
    %3589 = vst [vmem:[#allocation7 + $0x248] sm:$0xff] %v3389
    %3590 = vst [vmem:[#allocation7 + $0x250] sm:$0xff] %v3390
    %3591 = vst [vmem:[#allocation7 + $0x258] sm:$0xff] %v3391
    %3592 = vst [vmem:[#allocation7 + $0x260] sm:$0xff] %v3392
    %3593 = vst [vmem:[#allocation7 + $0x268] sm:$0xff] %v3393
    %3594 = vst [vmem:[#allocation7 + $0x270] sm:$0xff] %v3394
    %3595 = vst [vmem:[#allocation7 + $0x278] sm:$0xff] %v3395
    %3596 = vst [vmem:[#allocation7 + $0x280] sm:$0xff] %v3396
    %3597 = vst [vmem:[#allocation7 + $0x288] sm:$0xff] %v3397
    %3598 = vst [vmem:[#allocation7 + $0x290] sm:$0xff] %v3398
    %3599 = vst [vmem:[#allocation7 + $0x298] sm:$0xff] %v3399
    %3600 = vst [vmem:[#allocation7 + $0x2a0] sm:$0xff] %v3400
    %3601 = vst [vmem:[#allocation7 + $0x2a8] sm:$0xff] %v3401
    %3602 = vst [vmem:[#allocation7 + $0x2b0] sm:$0xff] %v3402
    %3603 = vst [vmem:[#allocation7 + $0x2b8] sm:$0xff] %v3403
    %3604 = vst [vmem:[#allocation7 + $0x2c0] sm:$0xff] %v3404
    %3605 = vst [vmem:[#allocation7 + $0x2c8] sm:$0xff] %v3405
    %3606 = vst [vmem:[#allocation7 + $0x2d0] sm:$0xff] %v3406
    %3607 = vst [vmem:[#allocation7 + $0x2d8] sm:$0xff] %v3407
    %3608 = vst [vmem:[#allocation7 + $0x2e0] sm:$0xff] %v3408
    %3609 = vst [vmem:[#allocation7 + $0x2e8] sm:$0xff] %v3409
    %3610 = vst [vmem:[#allocation7 + $0x2f0] sm:$0xff] %v3410
    %3611 = vst [vmem:[#allocation7 + $0x2f8] sm:$0xff] %v3411
    %3612 = vst [vmem:[#allocation7 + $0x300] sm:$0xff] %v3412
    %3613 = vst [vmem:[#allocation7 + $0x308] sm:$0xff] %v3413
    %3614 = vst [vmem:[#allocation7 + $0x310] sm:$0xff] %v3414
    %3615 = vst [vmem:[#allocation7 + $0x318] sm:$0xff] %v3415
    %3616 = vst [vmem:[#allocation7 + $0x320] sm:$0xff] %v3416
    %3617 = vst [vmem:[#allocation7 + $0x328] sm:$0xff] %v3417
    %3618 = vst [vmem:[#allocation7 + $0x330] sm:$0xff] %v3418
    %3619 = vst [vmem:[#allocation7 + $0x338] sm:$0xff] %v3419
    %3620 = vst [vmem:[#allocation7 + $0x340] sm:$0xff] %v3420
    %3621 = vst [vmem:[#allocation7 + $0x348] sm:$0xff] %v3421
    %3622 = vst [vmem:[#allocation7 + $0x350] sm:$0xff] %v3422
    %3623 = vst [vmem:[#allocation7 + $0x358] sm:$0xff] %v3423
    %3624 = vst [vmem:[#allocation7 + $0x360] sm:$0xff] %v3424
    %3625 = vst [vmem:[#allocation7 + $0x368] sm:$0xff] %v3425
    %3626 = vst [vmem:[#allocation7 + $0x370] sm:$0xff] %v3426
    %3627 = vst [vmem:[#allocation7 + $0x378] sm:$0xff] %v3427
    %3628 = vst [vmem:[#allocation7 + $0x380] sm:$0xff] %v3428
    %3629 = vst [vmem:[#allocation7 + $0x388] sm:$0xff] %v3429
    %3630 = vst [vmem:[#allocation7 + $0x390] sm:$0xff] %v3430
    %3631 = vst [vmem:[#allocation7 + $0x398] sm:$0xff] %v3431
    %3632 = vst [vmem:[#allocation7 + $0x3a0] sm:$0xff] %v3432
    %3633 = vst [vmem:[#allocation7 + $0x3a8] sm:$0xff] %v3433
    %3634 = vst [vmem:[#allocation7 + $0x3b0] sm:$0xff] %v3434
    %3635 = vst [vmem:[#allocation7 + $0x3b8] sm:$0xff] %v3435
    %3636 = vst [vmem:[#allocation7 + $0x3c0] sm:$0xff] %v3436
    %3637 = vst [vmem:[#allocation7 + $0x3c8] sm:$0xff] %v3437
    %3638 = vst [vmem:[#allocation7 + $0x3d0] sm:$0xff] %v3438
    %3639 = vst [vmem:[#allocation7 + $0x3d8] sm:$0xff] %v3439
    %3640 = vst [vmem:[#allocation7 + $0x3e0] sm:$0xff] %v3440
    %3641 = vst [vmem:[#allocation7 + $0x3e8] sm:$0xff] %v3441
    %3642 = vst [vmem:[#allocation7 + $0x3f0] sm:$0xff] %v3442
    %3643 = vst [vmem:[#allocation7 + $0x3f8] sm:$0xff] %v3443
    %3644 = vst [vmem:[#allocation7 + $0x400] sm:$0xff] %v3444
    %3645 = vst [vmem:[#allocation7 + $0x408] sm:$0xff] %v3445
    %3646 = vst [vmem:[#allocation7 + $0x410] sm:$0xff] %v3446
    %3647 = vst [vmem:[#allocation7 + $0x418] sm:$0xff] %v3447
    %3648 = vst [vmem:[#allocation7 + $0x420] sm:$0xff] %v3448
    %3649 = vst [vmem:[#allocation7 + $0x428] sm:$0xff] %v3449
    %3650 = vst [vmem:[#allocation7 + $0x430] sm:$0xff] %v3450
    %3651 = vst [vmem:[#allocation7 + $0x438] sm:$0xff] %v3451
    %3652 = vst [vmem:[#allocation7 + $0x440] sm:$0xff] %v3452
    %3653 = vst [vmem:[#allocation7 + $0x448] sm:$0xff] %v3453
    %3654 = vst [vmem:[#allocation7 + $0x450] sm:$0xff] %v3454
    %3655 = vst [vmem:[#allocation7 + $0x458] sm:$0xff] %v3455
    %3656 = vst [vmem:[#allocation7 + $0x460] sm:$0xff] %v3456
    %3657 = vst [vmem:[#allocation7 + $0x468] sm:$0xff] %v3457
    %3658 = vst [vmem:[#allocation7 + $0x470] sm:$0xff] %v3458
    %3659 = vst [vmem:[#allocation7 + $0x478] sm:$0xff] %v3459
    %3660 = vst [vmem:[#allocation7 + $0x480] sm:$0xff] %v3460
    %3661 = vst [vmem:[#allocation7 + $0x488] sm:$0xff] %v3461
    %3662 = vst [vmem:[#allocation7 + $0x490] sm:$0xff] %v3462
    %3663 = vst [vmem:[#allocation7 + $0x498] sm:$0xff] %v3463
    %3664 = vst [vmem:[#allocation7 + $0x4a0] sm:$0xff] %v3464
    %3665 = vst [vmem:[#allocation7 + $0x4a8] sm:$0xff] %v3465
    %3666 = vst [vmem:[#allocation7 + $0x4b0] sm:$0xff] %v3466
    %3667 = vst [vmem:[#allocation7 + $0x4b8] sm:$0xff] %v3467
    %3668 = vst [vmem:[#allocation7 + $0x4c0] sm:$0xff] %v3468
    %3669 = vst [vmem:[#allocation7 + $0x4c8] sm:$0xff] %v3469
    %3670 = vst [vmem:[#allocation7 + $0x4d0] sm:$0xff] %v3470
    %3671 = vst [vmem:[#allocation7 + $0x4d8] sm:$0xff] %v3471
    %3672 = vst [vmem:[#allocation7 + $0x4e0] sm:$0xff] %v3472
    %3673 = vst [vmem:[#allocation7 + $0x4e8] sm:$0xff] %v3473
    %3674 = vst [vmem:[#allocation7 + $0x4f0] sm:$0xff] %v3474
    %3675 = vst [vmem:[#allocation7 + $0x4f8] sm:$0xff] %v3475
    %3676 = vst [vmem:[#allocation7 + $0x500] sm:$0xff] %v3476
    %3677 = vst [vmem:[#allocation7 + $0x508] sm:$0xff] %v3477
    %3678 = vst [vmem:[#allocation7 + $0x510] sm:$0xff] %v3478
    %3679 = vst [vmem:[#allocation7 + $0x518] sm:$0xff] %v3479
    %3680 = vst [vmem:[#allocation7 + $0x520] sm:$0xff] %v3480
    %3681 = vst [vmem:[#allocation7 + $0x528] sm:$0xff] %v3481
    %3682 = vst [vmem:[#allocation7 + $0x530] sm:$0xff] %v3482
    %3683 = vst [vmem:[#allocation7 + $0x538] sm:$0xff] %v3483
    %3684 = vst [vmem:[#allocation7 + $0x540] sm:$0xff] %v3484
    %3685 = vst [vmem:[#allocation7 + $0x548] sm:$0xff] %v3485
    %3686 = vst [vmem:[#allocation7 + $0x550] sm:$0xff] %v3486
    %3687 = vst [vmem:[#allocation7 + $0x558] sm:$0xff] %v3487
    %3688 = vst [vmem:[#allocation7 + $0x560] sm:$0xff] %v3488
    %3689 = vst [vmem:[#allocation7 + $0x568] sm:$0xff] %v3489
    %3690 = vst [vmem:[#allocation7 + $0x570] sm:$0xff] %v3490
    %3691 = vst [vmem:[#allocation7 + $0x578] sm:$0xff] %v3491
    %3692 = vst [vmem:[#allocation7 + $0x580] sm:$0xff] %v3492
    %3693 = vst [vmem:[#allocation7 + $0x588] sm:$0xff] %v3493
    %3694 = vst [vmem:[#allocation7 + $0x590] sm:$0xff] %v3494
    %3695 = vst [vmem:[#allocation7 + $0x598] sm:$0xff] %v3495
    %3696 = vst [vmem:[#allocation7 + $0x5a0] sm:$0xff] %v3496
    %3697 = vst [vmem:[#allocation7 + $0x5a8] sm:$0xff] %v3497
    %3698 = vst [vmem:[#allocation7 + $0x5b0] sm:$0xff] %v3498
    %3699 = vst [vmem:[#allocation7 + $0x5b8] sm:$0xff] %v3499
    %3700 = vst [vmem:[#allocation7 + $0x5c0] sm:$0xff] %v3500
    %3701 = vst [vmem:[#allocation7 + $0x5c8] sm:$0xff] %v3501
    %3702 = vst [vmem:[#allocation7 + $0x5d0] sm:$0xff] %v3502
    %3703 = vst [vmem:[#allocation7 + $0x5d8] sm:$0xff] %v3503
    %3704 = vst [vmem:[#allocation7 + $0x5e0] sm:$0xff] %v3504
    %3705 = vst [vmem:[#allocation7 + $0x5e8] sm:$0xff] %v3505
    %3706 = vst [vmem:[#allocation7 + $0x5f0] sm:$0xff] %v3506
    %3707 = vst [vmem:[#allocation7 + $0x5f8] sm:$0xff] %v3507
    %3708 = vst [vmem:[#allocation7 + $0x600] sm:$0xff] %v3508
    %3709 = vst [vmem:[#allocation7 + $0x608] sm:$0xff] %v3509
    %3710 = vst [vmem:[#allocation7 + $0x610] sm:$0xff] %v3510
    %3711 = vst [vmem:[#allocation7 + $0x618] sm:$0xff] %v3511
    %3712 = vst [vmem:[#allocation7 + $0x620] sm:$0xff] %v3512
    %3713 = vst [vmem:[#allocation7 + $0x628] sm:$0xff] %v3513
    %3714 = vst [vmem:[#allocation7 + $0x630] sm:$0xff] %v3514
    %3715 = vst [vmem:[#allocation7 + $0x638] sm:$0xff] %v3515
    // Predicated region
    $region10: #{tpu_custom_call.1} parent=1 // pred_check
      _
    $region11: #{tpu_custom_call.1} parent=1 // pred_check_branch
      %3717 = sbr.rel (0) target = $region13
    $region12: #{tpu_custom_call.1} parent=1 // pred_region
      %3719 = vsyncadd [#allocation6], 0
      %s3720 = sshll.u32 [#allocation7], 4
      %s3721 = int_to_ptr.vmem [resolvable:$true] %s3720
      %s3722 = sshll.u32 %s2, 4
      %s3723 = int_to_ptr.hbm [resolvable:$true] %s3722
      %3728 = dma.vmem_to_hbm [thread:$0]  %s3721, 25600, %s3723, [#allocation6], 1024, 1024, 64
    $region13: #{tpu_custom_call.1} parent=1 // pred_fallthru
      _
    // Predicated region
    $region14: #{tpu_custom_call.1} parent=1 // pred_check
      _
    $region15: #{tpu_custom_call.1} parent=1 // pred_check_branch
      %3730 = sbr.rel (0) target = $region17
    $region16: #{tpu_custom_call.1} parent=1 // pred_region
      %3732 = dma.done [#allocation6], 25600
    $region17: #{tpu_custom_call.1} parent=1 // pred_fallthru
      _
    %3733 = vsyncpa [#allocation5], 1
    %3734 = vsyncpa [#allocation6], 1

</llo_original>
